<compile_context>
chip_gen: v7x
topology: tpu7x:2x2x1
jax: 0.10.0
libtpu: 0.0.40
codegen_flags: <defaults>
</compile_context>

<pallas_src>
import functools
import math

import jax
import jax.numpy as jnp
from jax import lax
from jax.experimental import pallas as pl
from jax.experimental.pallas import tpu as pltpu


# ----------------------------------------------------------------------------
# Fused forward + loss kernel
# ----------------------------------------------------------------------------

def _vae_loss_kernel(
    # scalar prefetch ------------------------------------------------------
    fin_rows_ref,    # SMEM (B,) int32 flat row index of the finale token per seq
    # inputs ----------------------------------------------------------------
    x_in_ref,        # (B*L, D) f32   word_emb[x]*sqrt(D) + pos (shared pre-LN input)
    enc_key_ref,     # (B, L)  f32    encoder key-keep mask (1 keep / 0 masked)
    dec_key_ref,     # (B, L)  f32    decoder key-keep mask
    tgt_ref,         # (B*L, 1) int32 CE targets (position 0 of each row unused)
    wgt_ref,         # (B*L, 1) f32   CE weights (0 at position 0 / pad)
    eps_ref,         # (B, d_latent)  reparameterization noise
    ln_g_ref, ln_b_ref,          # (1, D) f32  shared top-level LayerNorm
    w_mu_ref, w_var_ref,         # (D, d_latent) bf16
    lat_w_ref,                   # (d_latent, D) bf16
    lat_b_ref,                   # (1, D) f32
    w_prj_ref,                   # (D, Vp) bf16  tied word projection (pre-transposed, vocab padded)
    wqkv_ref,                    # (nl, D, 2*H*dk + H*dv) bf16  fused QKV weights
    fc_ref,                      # (nl, H*dv, D) bf16
    ln1_g_ref, ln1_b_ref,        # (nl, 1, D) f32
    w1_ref,                      # (nl, D, d_inner) bf16
    b1_ref,                      # (nl, 1, d_inner) f32
    w2_ref,                      # (nl, d_inner, D) bf16
    b2_ref,                      # (nl, 1, D) f32
    ln2_g_ref, ln2_b_ref,        # (nl, 1, D) f32
    # outputs ---------------------------------------------------------------
    loss_ref, recons_ref, kld_ref, acc_ref,     # (1, 1) each
    # scratch ---------------------------------------------------------------
    henc_ref,                    # VMEM (B*L, D) f32  encoder output (for dynamic row gather)
    *, B, L, D, V, Vp, n_layers, n_head, d_k, d_v, kld_weight):

    f32 = jnp.float32
    bf16 = jnp.bfloat16
    sqrt_d = float(math.sqrt(D))
    scale = 1.0 / float(math.sqrt(d_k))
    Hdk = n_head * d_k
    Hdv = n_head * d_v

    def layernorm(x, g, b, eps=1e-6):
        mean = jnp.mean(x, axis=-1, keepdims=True)
        var = jnp.mean((x - mean) ** 2, axis=-1, keepdims=True)
        return (x - mean) * lax.rsqrt(var + eps) * g + b

    def bdot(a, w):
        # bf16 MXU operands, f32 accumulation.
        return jnp.dot(a.astype(bf16), w, preferred_element_type=f32)

    def make_bias(key):
        # key: (B, L) 1 keep / 0 mask -> additive (B, L, L) bias (0 / -1e9),
        # built in-kernel instead of DMAing dense (B, L, L) tensors.
        r = lax.broadcasted_iota(jnp.int32, (L, L), 0)
        c = lax.broadcasted_iota(jnp.int32, (L, L), 1)
        causal = (c <= r).astype(f32)                    # (L, L)
        keep = causal[None, :, :] * key[:, None, :]      # (B, L, L)
        return (keep - 1.0) * 1e9

    def run_stack(h, bias):
        # h: (B*L, D) f32.  Post-norm transformer encoder stack, layers unrolled.
        for l in range(n_layers):
            # --- multi-head self-attention (QKV fused, batched over B) ---
            residual = h
            qkv = bdot(h, wqkv_ref[l])                   # (B*L, 2Hdk+Hdv) f32
            q = qkv[:, :Hdk]
            k = qkv[:, Hdk:2 * Hdk]
            v = qkv[:, 2 * Hdk:2 * Hdk + Hdv]
            heads = []
            for hh in range(n_head):
                qh = q[:, hh * d_k:(hh + 1) * d_k].reshape(B, L, d_k).astype(bf16)
                kh = k[:, hh * d_k:(hh + 1) * d_k].reshape(B, L, d_k).astype(bf16)
                vh = v[:, hh * d_v:(hh + 1) * d_v].reshape(B, L, d_v).astype(bf16)
                s = jnp.einsum('bqd,bkd->bqk', qh, kh,
                               preferred_element_type=f32) * scale + bias
                s = s - jnp.max(s, axis=-1, keepdims=True)
                p = jnp.exp(s)
                p = p / jnp.sum(p, axis=-1, keepdims=True)   # exact divide
                oh = jnp.einsum('bqk,bkd->bqd', p.astype(bf16), vh,
                                preferred_element_type=f32)  # (B, L, d_v)
                heads.append(oh.reshape(B * L, d_v))
            attn = jnp.concatenate(heads, axis=-1)           # (B*L, H*dv)
            o = bdot(attn, fc_ref[l])
            h = layernorm(o + residual, ln1_g_ref[l], ln1_b_ref[l])
            # --- position-wise feed-forward ---
            residual = h
            f = bdot(h, w1_ref[l]) + b1_ref[l]
            f = jnp.maximum(f, 0.0)
            f = bdot(f, w2_ref[l]) + b2_ref[l]
            h = layernorm(f + residual, ln2_g_ref[l], ln2_b_ref[l])
        return h

    x_in = x_in_ref[...]                                     # (B*L, D)
    ln_g = ln_g_ref[...]
    ln_b = ln_b_ref[...]

    # ------------------------------- encoder -------------------------------
    enc_bias = make_bias(enc_key_ref[...])
    h_enc = run_stack(layernorm(x_in, ln_g, ln_b), enc_bias)

    # finale-row gather via dynamic row indexing (scalar-prefetched indices)
    henc_ref[...] = h_enc
    finale = jnp.concatenate(
        [henc_ref[pl.ds(fin_rows_ref[b], 1), :] for b in range(B)], axis=0)  # (B, D)
    mu = bdot(finale, w_mu_ref[...])                          # (B, d_latent)
    logvar = bdot(finale, w_var_ref[...])

    # ---------------------------- reparameterize ----------------------------
    z = eps_ref[...] * jnp.exp(0.5 * logvar) + mu             # (B, d_latent)

    # ------------------------------- decoder --------------------------------
    summary = bdot(z, lat_w_ref[...]) + lat_b_ref[...]        # (B, D)
    row = lax.broadcasted_iota(jnp.int32, (B * L, 1), 0)
    add = jnp.zeros((B * L, D), f32)
    for b in range(B):                                        # scatter summary to row b*L
        add = jnp.where(row == b * L, summary[b:b + 1, :] * sqrt_d, add)
    dec_bias = make_bias(dec_key_ref[...])
    h_dec = run_stack(layernorm(x_in + add, ln_g, ln_b), dec_bias)

    # ------------- tied projection + masked cross entropy / acc -------------
    # TODO(synk): for realistic vocab sizes, tile this projection + CE over
    # 128-lane vocab chunks with an online (max, sum-exp, argmax) reduction so
    # the full (B*L, Vp) logits never sit in VMEM (needed on v7x's 64 MiB).
    logits = bdot(h_dec, w_prj_ref[...])                      # (B*L, Vp) f32
    colv = lax.broadcasted_iota(jnp.int32, (B * L, Vp), 1)
    logits = jnp.where(colv < V, logits, -1e9)                # kill padded vocab lanes
    tgt = tgt_ref[...]                                        # (B*L, 1) int32
    w = wgt_ref[...]                                          # (B*L, 1) f32
    mx = jnp.max(logits, axis=-1, keepdims=True)
    lse = mx + jnp.log(jnp.sum(jnp.exp(logits - mx), axis=-1, keepdims=True))
    tgt_logit = jnp.sum(jnp.where(colv == tgt, logits, 0.0), axis=-1, keepdims=True)
    nll = lse - tgt_logit                                     # (B*L, 1)
    pred_id = jnp.min(jnp.where(logits >= mx, colv, Vp), axis=-1, keepdims=True)

    denom = jnp.sum(w, axis=0, keepdims=True)                 # (1, 1)
    recons = jnp.sum(nll * w, axis=0, keepdims=True) / denom
    acc = jnp.sum((pred_id == tgt).astype(f32) * w, axis=0, keepdims=True) / denom

    # --------------------------------- KLD ----------------------------------
    kld_terms = 1.0 + logvar - mu * mu - jnp.exp(logvar)      # (B, d_latent)
    kld_b = -0.5 * jnp.sum(kld_terms, axis=-1, keepdims=True) # (B, 1)
    kld = jnp.mean(kld_b, axis=0, keepdims=True)              # (1, 1)

    loss_ref[...] = recons + kld * kld_weight
    recons_ref[...] = recons
    kld_ref[...] = kld
    acc_ref[...] = acc


# ----------------------------------------------------------------------------
# Parameter construction (xavier-uniform, gain=(2*n_layers)^-0.5; weights are
# pre-fused / pre-stacked / pre-transposed / pre-cast ONCE at init)
# ----------------------------------------------------------------------------

def xavier(key, in_dim, out_dim, gain):
    bound = gain * math.sqrt(6.0 / (in_dim + out_dim))
    return jax.random.uniform(key, (in_dim, out_dim), jnp.float32, -bound, bound)


def sinusoid_table(n_position, d_model):
    pos = jnp.arange(n_position, dtype=jnp.float32)[:, None]
    i = jnp.arange(d_model)
    denom = jnp.power(10000.0, (2.0 * (i // 2)) / d_model)[None, :]
    angle = pos / denom
    return jnp.where(i[None, :] % 2 == 0, jnp.sin(angle), jnp.cos(angle))


def init_params(key, cfg):
    gain = (cfg["n_layers"] * 2) ** (-0.5)
    D, V, dl = cfg["d_model"], cfg["n_vocab"], cfg["d_latent"]
    H, dk, dv, di = cfg["n_head"], cfg["d_k"], cfg["d_v"], cfg["d_inner"]
    nl = cfg["n_layers"]
    Vp = -(-V // 128) * 128                      # vocab padded to 128 lanes
    bf16 = jnp.bfloat16
    keys = iter(jax.random.split(key, 4 + 6 * nl))

    word_emb = xavier(next(keys), V, D, gain)
    # tied output projection: transposed once, zero-padded to Vp lanes, bf16.
    # TODO(synk): word_prj is a materialized copy; if params were trainable the
    # weight tying would have to be re-applied after each update.
    word_prj = jnp.zeros((D, Vp), jnp.float32).at[:, :V].set(word_emb.T)

    params = {
        "word_emb": word_emb,                    # f32 embedding gather table
        "word_prj": word_prj.astype(bf16),
        "w_mu": xavier(next(keys), D, dl, gain).astype(bf16),
        "w_var": xavier(next(keys), D, dl, gain).astype(bf16),
        "latent_emb_w": xavier(next(keys), dl, D, gain).astype(bf16),
        "latent_emb_b": jnp.zeros((1, D), jnp.float32),
        "ln_g": jnp.ones((1, D), jnp.float32),
        "ln_b": jnp.zeros((1, D), jnp.float32),
        "pos_table": sinusoid_table(cfg["n_seq_max"], D),
    }
    wqkv, fc, w1, w2 = [], [], [], []
    for _ in range(nl):
        wq = xavier(next(keys), D, H * dk, gain)
        wk = xavier(next(keys), D, H * dk, gain)
        wv = xavier(next(keys), D, H * dv, gain)
        wqkv.append(jnp.concatenate([wq, wk, wv], axis=1))   # QKV fused
        fc.append(xavier(next(keys), H * dv, D, gain))
        w1.append(xavier(next(keys), D, di, gain))
        w2.append(xavier(next(keys), di, D, gain))
    params.update(
        wqkv=jnp.stack(wqkv).astype(bf16), fc=jnp.stack(fc).astype(bf16),
        w1=jnp.stack(w1).astype(bf16), b1=jnp.zeros((nl, 1, di), jnp.float32),
        w2=jnp.stack(w2).astype(bf16), b2=jnp.zeros((nl, 1, D), jnp.float32),
        ln1_g=jnp.ones((nl, 1, D), jnp.float32),
        ln1_b=jnp.zeros((nl, 1, D), jnp.float32),
        ln2_g=jnp.ones((nl, 1, D), jnp.float32),
        ln2_b=jnp.zeros((nl, 1, D), jnp.float32),
    )
    return params


# ----------------------------------------------------------------------------
# Wrapper: tiny XLA prep (embedding gather, key masks, finale indices),
# then ONE pallas_call for the whole forward + loss.
# ----------------------------------------------------------------------------

def seq_share_vae_loss(params, batch, eps_key, *, cfg):
    input_ids = batch["input_ids"].astype(jnp.int32)
    body_mask = batch["body_mask"].astype(jnp.float32)
    output_ids = batch["output_ids"].astype(jnp.int32)
    B, Lm1 = input_ids.shape
    L = Lm1 + 1
    D, V, dl = cfg["d_model"], cfg["n_vocab"], cfg["d_latent"]
    H, dv = cfg["n_head"], cfg["d_v"]
    Vp = params["word_prj"].shape[1]

    head = jnp.full((B, 1), cfg["summary_id"], jnp.int32)
    x_ids = jnp.concatenate([head, input_ids], axis=1)                    # (B, L)

    # shared pre-LN input: word_emb[x] * sqrt(D) + positional table
    emb = jnp.take(params["word_emb"], x_ids, axis=0)                     # (B, L, D)
    x_in = (emb * math.sqrt(D) + params["pos_table"][None, :L]).reshape(B * L, D)

    # key-keep masks (B, L); causal structure is rebuilt inside the kernel
    enc_key = (x_ids != cfg["pad_id"]).astype(jnp.float32)
    dec_key = jnp.concatenate([jnp.ones((B, 1), jnp.float32), body_mask], axis=1)

    # finale flat-row indices (first finale token per row; assumes one per row,
    # matching x[seq == finale_id] for the usual single-finale sequences)
    fin_idx = jnp.argmax((x_ids == cfg["finale_id"]).astype(jnp.int32), axis=1)
    fin_rows = (jnp.arange(B) * L + fin_idx).astype(jnp.int32)            # (B,)

    # CE targets / weights aligned with x positions (position 0 weight 0)
    tgt = jnp.concatenate([jnp.zeros((B, 1), jnp.int32), output_ids],
                          axis=1).reshape(B * L, 1)
    wgt = jnp.concatenate([jnp.zeros((B, 1), jnp.float32), body_mask],
                          axis=1).reshape(B * L, 1)

    eps = jax.random.normal(eps_key, (B, dl), jnp.float32)

    inputs = (
        x_in, enc_key, dec_key, tgt, wgt, eps,
        params["ln_g"], params["ln_b"], params["w_mu"], params["w_var"],
        params["latent_emb_w"], params["latent_emb_b"], params["word_prj"],
        params["wqkv"], params["fc"], params["ln1_g"], params["ln1_b"],
        params["w1"], params["b1"], params["w2"], params["b2"],
        params["ln2_g"], params["ln2_b"],
    )

    def full_spec(a):
        nd = a.ndim
        return pl.BlockSpec(a.shape, lambda i, fr, _nd=nd: (0,) * _nd)

    kernel = functools.partial(
        _vae_loss_kernel,
        B=B, L=L, D=D, V=V, Vp=Vp,
        n_layers=cfg["n_layers"], n_head=H,
        d_k=cfg["d_k"], d_v=dv, kld_weight=cfg["kld_weight"])

    scalar = jax.ShapeDtypeStruct((1, 1), jnp.float32)
    # TODO(synk): for v7x, split the batch over a "parallel" grid axis (2 TCs)
    # and stream layer weights over a layer grid axis for large configs; at
    # these sizes everything fits resident and a single grid step is used.
    grid_spec = pltpu.PrefetchScalarGridSpec(
        num_scalar_prefetch=1,
        grid=(1,),
        in_specs=[full_spec(a) for a in inputs],
        out_specs=tuple(pl.BlockSpec((1, 1), lambda i, fr: (0, 0))
                        for _ in range(4)),
        scratch_shapes=[pltpu.VMEM((B * L, D), jnp.float32)],
    )
    loss, recons, kld, acc = pl.pallas_call(
        kernel,
        out_shape=(scalar, scalar, scalar, scalar),
        grid_spec=grid_spec,
        compiler_params=pltpu.CompilerParams(
            dimension_semantics=("arbitrary",)),
    )(fin_rows, *inputs)

    loss = loss[0, 0]
    metric = {"recons_loss": recons[0, 0], "kld_loss": kld[0, 0], "acc": acc[0, 0]}
    return loss, metric


# ----------------------------------------------------------------------------
# Main
# ----------------------------------------------------------------------------

if __name__ == "__main__":
    cfg = dict(
        n_vocab=12, d_latent=16, d_model=32, d_inner=64,
        n_head=2, d_k=16, d_v=16, n_layers=2,
        pad_id=0, finale_id=5, summary_id=1,
        n_seq_max=64, kld_weight=0.001,
    )

    root = jax.random.PRNGKey(0)
    k_param, k_eps = jax.random.split(root)
    params = init_params(k_param, cfg)

    # batch=2, seq=7 (becomes 8 after the summary head is prepended)
    batch = {
        "input_ids": jnp.array([[2, 7, 4, 9, 5, 0, 0],
                                [6, 3, 8, 2, 10, 5, 0]], jnp.int32),
        "body_mask": jnp.array([[1, 1, 1, 1, 1, 0, 0],
                                [1, 1, 1, 1, 1, 1, 0]], bool),
        "output_ids": jnp.array([[7, 4, 9, 5, 1, 0, 0],
                                 [3, 8, 2, 10, 5, 1, 0]], jnp.int32),
    }

    loss_fn = jax.jit(functools.partial(seq_share_vae_loss, cfg=cfg))
    loss, metric = loss_fn(params, batch, k_eps)
    loss = jax.block_until_ready(loss)
    jax.block_until_ready(metric["acc"])
    print("KERNEL_OK")
</pallas_src>

<mosaic_0001>
module attributes {stable_mosaic.version = 11 : i64} {
  func.func @_vae_loss_kernel(%arg0: i32, %arg1: memref<2xi32, #tpu.memory_space<smem>>, %arg2: memref<16x32xf32, #tpu.memory_space<vmem>>, %arg3: memref<2x8xf32, #tpu.memory_space<vmem>>, %arg4: memref<2x8xf32, #tpu.memory_space<vmem>>, %arg5: memref<16x1xi32, #tpu.memory_space<vmem>>, %arg6: memref<16x1xf32, #tpu.memory_space<vmem>>, %arg7: memref<2x16xf32, #tpu.memory_space<vmem>>, %arg8: memref<1x32xf32, #tpu.memory_space<vmem>>, %arg9: memref<1x32xf32, #tpu.memory_space<vmem>>, %arg10: memref<32x16xbf16, #tpu.memory_space<vmem>>, %arg11: memref<32x16xbf16, #tpu.memory_space<vmem>>, %arg12: memref<16x32xbf16, #tpu.memory_space<vmem>>, %arg13: memref<1x32xf32, #tpu.memory_space<vmem>>, %arg14: memref<32x128xbf16, #tpu.memory_space<vmem>>, %arg15: memref<2x32x96xbf16, #tpu.memory_space<vmem>>, %arg16: memref<2x32x32xbf16, #tpu.memory_space<vmem>>, %arg17: memref<2x1x32xf32, #tpu.memory_space<vmem>>, %arg18: memref<2x1x32xf32, #tpu.memory_space<vmem>>, %arg19: memref<2x32x64xbf16, #tpu.memory_space<vmem>>, %arg20: memref<2x1x64xf32, #tpu.memory_space<vmem>>, %arg21: memref<2x64x32xbf16, #tpu.memory_space<vmem>>, %arg22: memref<2x1x32xf32, #tpu.memory_space<vmem>>, %arg23: memref<2x1x32xf32, #tpu.memory_space<vmem>>, %arg24: memref<2x1x32xf32, #tpu.memory_space<vmem>>, %arg25: memref<1x1xf32, #tpu.memory_space<vmem>>, %arg26: memref<1x1xf32, #tpu.memory_space<vmem>>, %arg27: memref<1x1xf32, #tpu.memory_space<vmem>>, %arg28: memref<1x1xf32, #tpu.memory_space<vmem>>, %arg29: memref<16x32xf32, #tpu.memory_space<vmem>>) attributes {dimension_semantics = [#tpu.dimension_semantics<arbitrary>], iteration_bounds = array<i64: 1>, scalar_prefetch = 1 : i64, scratch_operands = 1 : i64, tpu.core_type = #tpu.core_type<tc>, window_params = [{pipeline_mode = #tpu.pipeline_mode<synchronous>, transform_indices = @transform_0, window_bounds = array<i64: 16, 32>}, {pipeline_mode = #tpu.pipeline_mode<synchronous>, transform_indices = @transform_1, window_bounds = array<i64: 2, 8>}, {pipeline_mode = #tpu.pipeline_mode<synchronous>, transform_indices = @transform_2, window_bounds = array<i64: 2, 8>}, {pipeline_mode = #tpu.pipeline_mode<synchronous>, transform_indices = @transform_3, window_bounds = array<i64: 16, 1>}, {pipeline_mode = #tpu.pipeline_mode<synchronous>, transform_indices = @transform_4, window_bounds = array<i64: 16, 1>}, {pipeline_mode = #tpu.pipeline_mode<synchronous>, transform_indices = @transform_5, window_bounds = array<i64: 2, 16>}, {pipeline_mode = #tpu.pipeline_mode<synchronous>, transform_indices = @transform_6, window_bounds = array<i64: 1, 32>}, {pipeline_mode = #tpu.pipeline_mode<synchronous>, transform_indices = @transform_7, window_bounds = array<i64: 1, 32>}, {pipeline_mode = #tpu.pipeline_mode<synchronous>, transform_indices = @transform_8, window_bounds = array<i64: 32, 16>}, {pipeline_mode = #tpu.pipeline_mode<synchronous>, transform_indices = @transform_9, window_bounds = array<i64: 32, 16>}, {pipeline_mode = #tpu.pipeline_mode<synchronous>, transform_indices = @transform_10, window_bounds = array<i64: 16, 32>}, {pipeline_mode = #tpu.pipeline_mode<synchronous>, transform_indices = @transform_11, window_bounds = array<i64: 1, 32>}, {pipeline_mode = #tpu.pipeline_mode<synchronous>, transform_indices = @transform_12, window_bounds = array<i64: 32, 128>}, {pipeline_mode = #tpu.pipeline_mode<synchronous>, transform_indices = @transform_13, window_bounds = array<i64: 2, 32, 96>}, {pipeline_mode = #tpu.pipeline_mode<synchronous>, transform_indices = @transform_14, window_bounds = array<i64: 2, 32, 32>}, {pipeline_mode = #tpu.pipeline_mode<synchronous>, transform_indices = @transform_15, window_bounds = array<i64: 2, 1, 32>}, {pipeline_mode = #tpu.pipeline_mode<synchronous>, transform_indices = @transform_16, window_bounds = array<i64: 2, 1, 32>}, {pipeline_mode = #tpu.pipeline_mode<synchronous>, transform_indices = @transform_17, window_bounds = array<i64: 2, 32, 64>}, {pipeline_mode = #tpu.pipeline_mode<synchronous>, transform_indices = @transform_18, window_bounds = array<i64: 2, 1, 64>}, {pipeline_mode = #tpu.pipeline_mode<synchronous>, transform_indices = @transform_19, window_bounds = array<i64: 2, 64, 32>}, {pipeline_mode = #tpu.pipeline_mode<synchronous>, transform_indices = @transform_20, window_bounds = array<i64: 2, 1, 32>}, {pipeline_mode = #tpu.pipeline_mode<synchronous>, transform_indices = @transform_21, window_bounds = array<i64: 2, 1, 32>}, {pipeline_mode = #tpu.pipeline_mode<synchronous>, transform_indices = @transform_22, window_bounds = array<i64: 2, 1, 32>}, {pipeline_mode = #tpu.pipeline_mode<synchronous>, transform_indices = @transform_23, window_bounds = array<i64: 1, 1>}, {pipeline_mode = #tpu.pipeline_mode<synchronous>, transform_indices = @transform_24, window_bounds = array<i64: 1, 1>}, {pipeline_mode = #tpu.pipeline_mode<synchronous>, transform_indices = @transform_25, window_bounds = array<i64: 1, 1>}, {pipeline_mode = #tpu.pipeline_mode<synchronous>, transform_indices = @transform_26, window_bounds = array<i64: 1, 1>}]} {
    %c0 = arith.constant 0 : index
    %c0_0 = arith.constant 0 : index
    %0 = vector.load %arg2[%c0, %c0_0] : memref<16x32xf32, #tpu.memory_space<vmem>>, vector<16x32xf32>
    %c0_1 = arith.constant 0 : index
    %c0_2 = arith.constant 0 : index
    %1 = vector.load %arg8[%c0_1, %c0_2] : memref<1x32xf32, #tpu.memory_space<vmem>>, vector<1x32xf32>
    %c0_3 = arith.constant 0 : index
    %c0_4 = arith.constant 0 : index
    %2 = vector.load %arg9[%c0_3, %c0_4] : memref<1x32xf32, #tpu.memory_space<vmem>>, vector<1x32xf32>
    %c0_5 = arith.constant 0 : index
    %c0_6 = arith.constant 0 : index
    %3 = vector.load %arg3[%c0_5, %c0_6] : memref<2x8xf32, #tpu.memory_space<vmem>>, vector<2x8xf32>
    %4 = tpu.iota {dimensions = array<i32: 0>} : vector<8x8xi32>
    %5 = tpu.iota {dimensions = array<i32: 1>} : vector<8x8xi32>
    %6 = arith.cmpi sle, %5, %4 : vector<8x8xi32>
    %7 = arith.extui %6 : vector<8x8xi1> to vector<8x8xi32>
    %8 = arith.sitofp %7 : vector<8x8xi32> to vector<8x8xf32>
    %9 = vector.shape_cast %8 : vector<8x8xf32> to vector<1x8x8xf32>
    %10 = vector.shape_cast %3 : vector<2x8xf32> to vector<2x1x8xf32>
    %11 = vector.broadcast %9 : vector<1x8x8xf32> to vector<2x8x8xf32>
    %12 = vector.broadcast %10 : vector<2x1x8xf32> to vector<2x8x8xf32>
    %13 = arith.mulf %11, %12 : vector<2x8x8xf32>
    %cst = arith.constant 1.000000e+00 : f32
    %14 = vector.broadcast %cst : f32 to vector<2x8x8xf32>
    %15 = arith.subf %13, %14 : vector<2x8x8xf32>
    %cst_7 = arith.constant 1.000000e+09 : f32
    %16 = vector.broadcast %cst_7 : f32 to vector<2x8x8xf32>
    %17 = arith.mulf %15, %16 : vector<2x8x8xf32>
    %cst_8 = arith.constant dense<0.000000e+00> : vector<16xf32>
    %18 = vector.multi_reduction <add>, %0, %cst_8 [1] : vector<16x32xf32> to vector<16xf32>
    %19 = vector.shape_cast %18 : vector<16xf32> to vector<16x1xf32>
    %cst_9 = arith.constant 3.200000e+01 : f32
    %20 = vector.broadcast %cst_9 : f32 to vector<16x1xf32>
    %21 = arith.divf %19, %20 : vector<16x1xf32>
    %22 = vector.broadcast %21 : vector<16x1xf32> to vector<16x32xf32>
    %23 = arith.subf %0, %22 : vector<16x32xf32>
    %24 = arith.mulf %23, %23 : vector<16x32xf32>
    %cst_10 = arith.constant dense<0.000000e+00> : vector<16xf32>
    %25 = vector.multi_reduction <add>, %24, %cst_10 [1] : vector<16x32xf32> to vector<16xf32>
    %26 = vector.shape_cast %25 : vector<16xf32> to vector<16x1xf32>
    %cst_11 = arith.constant 3.200000e+01 : f32
    %27 = vector.broadcast %cst_11 : f32 to vector<16x1xf32>
    %28 = arith.divf %26, %27 : vector<16x1xf32>
    %29 = vector.broadcast %21 : vector<16x1xf32> to vector<16x32xf32>
    %30 = arith.subf %0, %29 : vector<16x32xf32>
    %cst_12 = arith.constant 9.99999997E-7 : f32
    %31 = vector.broadcast %cst_12 : f32 to vector<16x1xf32>
    %32 = arith.addf %28, %31 : vector<16x1xf32>
    %33 = math.rsqrt %32 : vector<16x1xf32>
    %34 = vector.broadcast %33 : vector<16x1xf32> to vector<16x32xf32>
    %35 = arith.mulf %30, %34 : vector<16x32xf32>
    %36 = vector.broadcast %1 : vector<1x32xf32> to vector<16x32xf32>
    %37 = arith.mulf %35, %36 : vector<16x32xf32>
    %38 = vector.broadcast %2 : vector<1x32xf32> to vector<16x32xf32>
    %39 = arith.addf %37, %38 : vector<16x32xf32>
    %c0_13 = arith.constant 0 : index
    %c0_14 = arith.constant 0 : index
    %c0_15 = arith.constant 0 : index
    %40 = vector.load %arg15[%c0_13, %c0_14, %c0_15] : memref<2x32x96xbf16, #tpu.memory_space<vmem>>, vector<1x32x96xbf16>
    %41 = vector.shape_cast %40 : vector<1x32x96xbf16> to vector<32x96xbf16>
    %42 = arith.truncf %39 : vector<16x32xf32> to vector<16x32xbf16>
    %cst_16 = arith.constant dense<0.000000e+00> : vector<16x96xf32>
    %43 = tpu.matmul %42, %41, %cst_16 {dimension_numbers = #tpu.dot_dimension_numbers<[1], [0], [0], [1], [0, 0, 1, 1], [], []>} : vector<16x32xbf16>, vector<32x96xbf16>, vector<16x96xf32> -> vector<16x96xf32>
    %44 = vector.extract_strided_slice %43 {offsets = [0, 0], sizes = [16, 32], strides = [1, 1]} : vector<16x96xf32> to vector<16x32xf32>
    %45 = vector.extract_strided_slice %43 {offsets = [0, 32], sizes = [16, 32], strides = [1, 1]} : vector<16x96xf32> to vector<16x32xf32>
    %46 = vector.extract_strided_slice %43 {offsets = [0, 64], sizes = [16, 32], strides = [1, 1]} : vector<16x96xf32> to vector<16x32xf32>
    %47 = vector.extract_strided_slice %44 {offsets = [0, 0], sizes = [16, 16], strides = [1, 1]} : vector<16x32xf32> to vector<16x16xf32>
    %48 = vector.shape_cast %47 : vector<16x16xf32> to vector<2x8x16xf32>
    %49 = arith.truncf %48 : vector<2x8x16xf32> to vector<2x8x16xbf16>
    %50 = vector.extract_strided_slice %45 {offsets = [0, 0], sizes = [16, 16], strides = [1, 1]} : vector<16x32xf32> to vector<16x16xf32>
    %51 = vector.shape_cast %50 : vector<16x16xf32> to vector<2x8x16xf32>
    %52 = arith.truncf %51 : vector<2x8x16xf32> to vector<2x8x16xbf16>
    %53 = vector.extract_strided_slice %46 {offsets = [0, 0], sizes = [16, 16], strides = [1, 1]} : vector<16x32xf32> to vector<16x16xf32>
    %54 = vector.shape_cast %53 : vector<16x16xf32> to vector<2x8x16xf32>
    %55 = arith.truncf %54 : vector<2x8x16xf32> to vector<2x8x16xbf16>
    "tpu.trace_start"() <{level = 10 : i32, message = "bqd,bkd->bqk"}> : () -> ()
    %cst_17 = arith.constant dense<0.000000e+00> : vector<2x8x8xf32>
    %56 = tpu.matmul %49, %52, %cst_17 {dimension_numbers = #tpu.dot_dimension_numbers<[2], [2], [1], [1], [0, 0, 0, 1, 1, 1], [0], [0]>} : vector<2x8x16xbf16>, vector<2x8x16xbf16>, vector<2x8x8xf32> -> vector<2x8x8xf32>
    "tpu.trace_stop"() : () -> ()
    %cst_18 = arith.constant 2.500000e-01 : f32
    %57 = vector.broadcast %cst_18 : f32 to vector<2x8x8xf32>
    %58 = arith.mulf %56, %57 : vector<2x8x8xf32>
    %59 = arith.addf %58, %17 : vector<2x8x8xf32>
    %cst_19 = arith.constant dense<0xFF800000> : vector<2x8xf32>
    %60 = vector.multi_reduction <maximumf>, %59, %cst_19 [2] : vector<2x8x8xf32> to vector<2x8xf32>
    %61 = vector.shape_cast %60 : vector<2x8xf32> to vector<2x8x1xf32>
    %62 = vector.broadcast %61 : vector<2x8x1xf32> to vector<2x8x8xf32>
    %63 = arith.subf %59, %62 : vector<2x8x8xf32>
    %64 = math.exp %63 : vector<2x8x8xf32>
    %cst_20 = arith.constant dense<0.000000e+00> : vector<2x8xf32>
    %65 = vector.multi_reduction <add>, %64, %cst_20 [2] : vector<2x8x8xf32> to vector<2x8xf32>
    %66 = vector.shape_cast %65 : vector<2x8xf32> to vector<2x8x1xf32>
    %67 = vector.broadcast %66 : vector<2x8x1xf32> to vector<2x8x8xf32>
    %68 = arith.divf %64, %67 : vector<2x8x8xf32>
    %69 = arith.truncf %68 : vector<2x8x8xf32> to vector<2x8x8xbf16>
    "tpu.trace_start"() <{level = 10 : i32, message = "bqk,bkd->bqd"}> : () -> ()
    %cst_21 = arith.constant dense<0.000000e+00> : vector<2x8x16xf32>
    %70 = tpu.matmul %69, %55, %cst_21 {dimension_numbers = #tpu.dot_dimension_numbers<[2], [1], [1], [2], [0, 0, 0, 1, 1, 2], [0], [0]>} : vector<2x8x8xbf16>, vector<2x8x16xbf16>, vector<2x8x16xf32> -> vector<2x8x16xf32>
    "tpu.trace_stop"() : () -> ()
    %71 = vector.shape_cast %70 : vector<2x8x16xf32> to vector<16x16xf32>
    %72 = vector.extract_strided_slice %44 {offsets = [0, 16], sizes = [16, 16], strides = [1, 1]} : vector<16x32xf32> to vector<16x16xf32>
    %73 = vector.shape_cast %72 : vector<16x16xf32> to vector<2x8x16xf32>
    %74 = arith.truncf %73 : vector<2x8x16xf32> to vector<2x8x16xbf16>
    %75 = vector.extract_strided_slice %45 {offsets = [0, 16], sizes = [16, 16], strides = [1, 1]} : vector<16x32xf32> to vector<16x16xf32>
    %76 = vector.shape_cast %75 : vector<16x16xf32> to vector<2x8x16xf32>
    %77 = arith.truncf %76 : vector<2x8x16xf32> to vector<2x8x16xbf16>
    %78 = vector.extract_strided_slice %46 {offsets = [0, 16], sizes = [16, 16], strides = [1, 1]} : vector<16x32xf32> to vector<16x16xf32>
    %79 = vector.shape_cast %78 : vector<16x16xf32> to vector<2x8x16xf32>
    %80 = arith.truncf %79 : vector<2x8x16xf32> to vector<2x8x16xbf16>
    "tpu.trace_start"() <{level = 10 : i32, message = "bqd,bkd->bqk"}> : () -> ()
    %cst_22 = arith.constant dense<0.000000e+00> : vector<2x8x8xf32>
    %81 = tpu.matmul %74, %77, %cst_22 {dimension_numbers = #tpu.dot_dimension_numbers<[2], [2], [1], [1], [0, 0, 0, 1, 1, 1], [0], [0]>} : vector<2x8x16xbf16>, vector<2x8x16xbf16>, vector<2x8x8xf32> -> vector<2x8x8xf32>
    "tpu.trace_stop"() : () -> ()
    %cst_23 = arith.constant 2.500000e-01 : f32
    %82 = vector.broadcast %cst_23 : f32 to vector<2x8x8xf32>
    %83 = arith.mulf %81, %82 : vector<2x8x8xf32>
    %84 = arith.addf %83, %17 : vector<2x8x8xf32>
    %cst_24 = arith.constant dense<0xFF800000> : vector<2x8xf32>
    %85 = vector.multi_reduction <maximumf>, %84, %cst_24 [2] : vector<2x8x8xf32> to vector<2x8xf32>
    %86 = vector.shape_cast %85 : vector<2x8xf32> to vector<2x8x1xf32>
    %87 = vector.broadcast %86 : vector<2x8x1xf32> to vector<2x8x8xf32>
    %88 = arith.subf %84, %87 : vector<2x8x8xf32>
    %89 = math.exp %88 : vector<2x8x8xf32>
    %cst_25 = arith.constant dense<0.000000e+00> : vector<2x8xf32>
    %90 = vector.multi_reduction <add>, %89, %cst_25 [2] : vector<2x8x8xf32> to vector<2x8xf32>
    %91 = vector.shape_cast %90 : vector<2x8xf32> to vector<2x8x1xf32>
    %92 = vector.broadcast %91 : vector<2x8x1xf32> to vector<2x8x8xf32>
    %93 = arith.divf %89, %92 : vector<2x8x8xf32>
    %94 = arith.truncf %93 : vector<2x8x8xf32> to vector<2x8x8xbf16>
    "tpu.trace_start"() <{level = 10 : i32, message = "bqk,bkd->bqd"}> : () -> ()
    %cst_26 = arith.constant dense<0.000000e+00> : vector<2x8x16xf32>
    %95 = tpu.matmul %94, %80, %cst_26 {dimension_numbers = #tpu.dot_dimension_numbers<[2], [1], [1], [2], [0, 0, 0, 1, 1, 2], [0], [0]>} : vector<2x8x8xbf16>, vector<2x8x16xbf16>, vector<2x8x16xf32> -> vector<2x8x16xf32>
    "tpu.trace_stop"() : () -> ()
    %96 = vector.shape_cast %95 : vector<2x8x16xf32> to vector<16x16xf32>
    %97 = tpu.concatenate %71, %96 in 1 : vector<16x16xf32>, vector<16x16xf32> -> vector<16x32xf32>
    %c0_27 = arith.constant 0 : index
    %c0_28 = arith.constant 0 : index
    %c0_29 = arith.constant 0 : index
    %98 = vector.load %arg16[%c0_27, %c0_28, %c0_29] : memref<2x32x32xbf16, #tpu.memory_space<vmem>>, vector<1x32x32xbf16>
    %99 = vector.shape_cast %98 : vector<1x32x32xbf16> to vector<32x32xbf16>
    %100 = arith.truncf %97 : vector<16x32xf32> to vector<16x32xbf16>
    %cst_30 = arith.constant dense<0.000000e+00> : vector<16x32xf32>
    %101 = tpu.matmul %100, %99, %cst_30 {dimension_numbers = #tpu.dot_dimension_numbers<[1], [0], [0], [1], [0, 0, 1, 1], [], []>} : vector<16x32xbf16>, vector<32x32xbf16>, vector<16x32xf32> -> vector<16x32xf32>
    %102 = arith.addf %101, %39 : vector<16x32xf32>
    %c0_31 = arith.constant 0 : index
    %c0_32 = arith.constant 0 : index
    %c0_33 = arith.constant 0 : index
    %103 = vector.load %arg17[%c0_31, %c0_32, %c0_33] : memref<2x1x32xf32, #tpu.memory_space<vmem>>, vector<1x1x32xf32>
    %104 = vector.shape_cast %103 : vector<1x1x32xf32> to vector<1x32xf32>
    %c0_34 = arith.constant 0 : index
    %c0_35 = arith.constant 0 : index
    %c0_36 = arith.constant 0 : index
    %105 = vector.load %arg18[%c0_34, %c0_35, %c0_36] : memref<2x1x32xf32, #tpu.memory_space<vmem>>, vector<1x1x32xf32>
    %106 = vector.shape_cast %105 : vector<1x1x32xf32> to vector<1x32xf32>
    %cst_37 = arith.constant dense<0.000000e+00> : vector<16xf32>
    %107 = vector.multi_reduction <add>, %102, %cst_37 [1] : vector<16x32xf32> to vector<16xf32>
    %108 = vector.shape_cast %107 : vector<16xf32> to vector<16x1xf32>
    %cst_38 = arith.constant 3.200000e+01 : f32
    %109 = vector.broadcast %cst_38 : f32 to vector<16x1xf32>
    %110 = arith.divf %108, %109 : vector<16x1xf32>
    %111 = vector.broadcast %110 : vector<16x1xf32> to vector<16x32xf32>
    %112 = arith.subf %102, %111 : vector<16x32xf32>
    %113 = arith.mulf %112, %112 : vector<16x32xf32>
    %cst_39 = arith.constant dense<0.000000e+00> : vector<16xf32>
    %114 = vector.multi_reduction <add>, %113, %cst_39 [1] : vector<16x32xf32> to vector<16xf32>
    %115 = vector.shape_cast %114 : vector<16xf32> to vector<16x1xf32>
    %cst_40 = arith.constant 3.200000e+01 : f32
    %116 = vector.broadcast %cst_40 : f32 to vector<16x1xf32>
    %117 = arith.divf %115, %116 : vector<16x1xf32>
    %118 = vector.broadcast %110 : vector<16x1xf32> to vector<16x32xf32>
    %119 = arith.subf %102, %118 : vector<16x32xf32>
    %cst_41 = arith.constant 9.99999997E-7 : f32
    %120 = vector.broadcast %cst_41 : f32 to vector<16x1xf32>
    %121 = arith.addf %117, %120 : vector<16x1xf32>
    %122 = math.rsqrt %121 : vector<16x1xf32>
    %123 = vector.broadcast %122 : vector<16x1xf32> to vector<16x32xf32>
    %124 = arith.mulf %119, %123 : vector<16x32xf32>
    %125 = vector.broadcast %104 : vector<1x32xf32> to vector<16x32xf32>
    %126 = arith.mulf %124, %125 : vector<16x32xf32>
    %127 = vector.broadcast %106 : vector<1x32xf32> to vector<16x32xf32>
    %128 = arith.addf %126, %127 : vector<16x32xf32>
    %c0_42 = arith.constant 0 : index
    %c0_43 = arith.constant 0 : index
    %c0_44 = arith.constant 0 : index
    %129 = vector.load %arg19[%c0_42, %c0_43, %c0_44] : memref<2x32x64xbf16, #tpu.memory_space<vmem>>, vector<1x32x64xbf16>
    %130 = vector.shape_cast %129 : vector<1x32x64xbf16> to vector<32x64xbf16>
    %131 = arith.truncf %128 : vector<16x32xf32> to vector<16x32xbf16>
    %cst_45 = arith.constant dense<0.000000e+00> : vector<16x64xf32>
    %132 = tpu.matmul %131, %130, %cst_45 {dimension_numbers = #tpu.dot_dimension_numbers<[1], [0], [0], [1], [0, 0, 1, 1], [], []>} : vector<16x32xbf16>, vector<32x64xbf16>, vector<16x64xf32> -> vector<16x64xf32>
    %c0_46 = arith.constant 0 : index
    %c0_47 = arith.constant 0 : index
    %c0_48 = arith.constant 0 : index
    %133 = vector.load %arg20[%c0_46, %c0_47, %c0_48] : memref<2x1x64xf32, #tpu.memory_space<vmem>>, vector<1x1x64xf32>
    %134 = vector.shape_cast %133 : vector<1x1x64xf32> to vector<1x64xf32>
    %135 = vector.broadcast %134 : vector<1x64xf32> to vector<16x64xf32>
    %136 = arith.addf %132, %135 : vector<16x64xf32>
    %cst_49 = arith.constant 0.000000e+00 : f32
    %137 = vector.broadcast %cst_49 : f32 to vector<16x64xf32>
    %138 = arith.maximumf %136, %137 : vector<16x64xf32>
    %c0_50 = arith.constant 0 : index
    %c0_51 = arith.constant 0 : index
    %c0_52 = arith.constant 0 : index
    %139 = vector.load %arg21[%c0_50, %c0_51, %c0_52] : memref<2x64x32xbf16, #tpu.memory_space<vmem>>, vector<1x64x32xbf16>
    %140 = vector.shape_cast %139 : vector<1x64x32xbf16> to vector<64x32xbf16>
    %141 = arith.truncf %138 : vector<16x64xf32> to vector<16x64xbf16>
    %cst_53 = arith.constant dense<0.000000e+00> : vector<16x32xf32>
    %142 = tpu.matmul %141, %140, %cst_53 {dimension_numbers = #tpu.dot_dimension_numbers<[1], [0], [0], [1], [0, 0, 1, 1], [], []>} : vector<16x64xbf16>, vector<64x32xbf16>, vector<16x32xf32> -> vector<16x32xf32>
    %c0_54 = arith.constant 0 : index
    %c0_55 = arith.constant 0 : index
    %c0_56 = arith.constant 0 : index
    %143 = vector.load %arg22[%c0_54, %c0_55, %c0_56] : memref<2x1x32xf32, #tpu.memory_space<vmem>>, vector<1x1x32xf32>
    %144 = vector.shape_cast %143 : vector<1x1x32xf32> to vector<1x32xf32>
    %145 = vector.broadcast %144 : vector<1x32xf32> to vector<16x32xf32>
    %146 = arith.addf %142, %145 : vector<16x32xf32>
    %147 = arith.addf %146, %128 : vector<16x32xf32>
    %c0_57 = arith.constant 0 : index
    %c0_58 = arith.constant 0 : index
    %c0_59 = arith.constant 0 : index
    %148 = vector.load %arg23[%c0_57, %c0_58, %c0_59] : memref<2x1x32xf32, #tpu.memory_space<vmem>>, vector<1x1x32xf32>
    %149 = vector.shape_cast %148 : vector<1x1x32xf32> to vector<1x32xf32>
    %c0_60 = arith.constant 0 : index
    %c0_61 = arith.constant 0 : index
    %c0_62 = arith.constant 0 : index
    %150 = vector.load %arg24[%c0_60, %c0_61, %c0_62] : memref<2x1x32xf32, #tpu.memory_space<vmem>>, vector<1x1x32xf32>
    %151 = vector.shape_cast %150 : vector<1x1x32xf32> to vector<1x32xf32>
    %cst_63 = arith.constant dense<0.000000e+00> : vector<16xf32>
    %152 = vector.multi_reduction <add>, %147, %cst_63 [1] : vector<16x32xf32> to vector<16xf32>
    %153 = vector.shape_cast %152 : vector<16xf32> to vector<16x1xf32>
    %cst_64 = arith.constant 3.200000e+01 : f32
    %154 = vector.broadcast %cst_64 : f32 to vector<16x1xf32>
    %155 = arith.divf %153, %154 : vector<16x1xf32>
    %156 = vector.broadcast %155 : vector<16x1xf32> to vector<16x32xf32>
    %157 = arith.subf %147, %156 : vector<16x32xf32>
    %158 = arith.mulf %157, %157 : vector<16x32xf32>
    %cst_65 = arith.constant dense<0.000000e+00> : vector<16xf32>
    %159 = vector.multi_reduction <add>, %158, %cst_65 [1] : vector<16x32xf32> to vector<16xf32>
    %160 = vector.shape_cast %159 : vector<16xf32> to vector<16x1xf32>
    %cst_66 = arith.constant 3.200000e+01 : f32
    %161 = vector.broadcast %cst_66 : f32 to vector<16x1xf32>
    %162 = arith.divf %160, %161 : vector<16x1xf32>
    %163 = vector.broadcast %155 : vector<16x1xf32> to vector<16x32xf32>
    %164 = arith.subf %147, %163 : vector<16x32xf32>
    %cst_67 = arith.constant 9.99999997E-7 : f32
    %165 = vector.broadcast %cst_67 : f32 to vector<16x1xf32>
    %166 = arith.addf %162, %165 : vector<16x1xf32>
    %167 = math.rsqrt %166 : vector<16x1xf32>
    %168 = vector.broadcast %167 : vector<16x1xf32> to vector<16x32xf32>
    %169 = arith.mulf %164, %168 : vector<16x32xf32>
    %170 = vector.broadcast %149 : vector<1x32xf32> to vector<16x32xf32>
    %171 = arith.mulf %169, %170 : vector<16x32xf32>
    %172 = vector.broadcast %151 : vector<1x32xf32> to vector<16x32xf32>
    %173 = arith.addf %171, %172 : vector<16x32xf32>
    %c1 = arith.constant 1 : index
    %c0_68 = arith.constant 0 : index
    %c0_69 = arith.constant 0 : index
    %174 = vector.load %arg15[%c1, %c0_68, %c0_69] : memref<2x32x96xbf16, #tpu.memory_space<vmem>>, vector<1x32x96xbf16>
    %175 = vector.shape_cast %174 : vector<1x32x96xbf16> to vector<32x96xbf16>
    %176 = arith.truncf %173 : vector<16x32xf32> to vector<16x32xbf16>
    %cst_70 = arith.constant dense<0.000000e+00> : vector<16x96xf32>
    %177 = tpu.matmul %176, %175, %cst_70 {dimension_numbers = #tpu.dot_dimension_numbers<[1], [0], [0], [1], [0, 0, 1, 1], [], []>} : vector<16x32xbf16>, vector<32x96xbf16>, vector<16x96xf32> -> vector<16x96xf32>
    %178 = vector.extract_strided_slice %177 {offsets = [0, 0], sizes = [16, 32], strides = [1, 1]} : vector<16x96xf32> to vector<16x32xf32>
    %179 = vector.extract_strided_slice %177 {offsets = [0, 32], sizes = [16, 32], strides = [1, 1]} : vector<16x96xf32> to vector<16x32xf32>
    %180 = vector.extract_strided_slice %177 {offsets = [0, 64], sizes = [16, 32], strides = [1, 1]} : vector<16x96xf32> to vector<16x32xf32>
    %181 = vector.extract_strided_slice %178 {offsets = [0, 0], sizes = [16, 16], strides = [1, 1]} : vector<16x32xf32> to vector<16x16xf32>
    %182 = vector.shape_cast %181 : vector<16x16xf32> to vector<2x8x16xf32>
    %183 = arith.truncf %182 : vector<2x8x16xf32> to vector<2x8x16xbf16>
    %184 = vector.extract_strided_slice %179 {offsets = [0, 0], sizes = [16, 16], strides = [1, 1]} : vector<16x32xf32> to vector<16x16xf32>
    %185 = vector.shape_cast %184 : vector<16x16xf32> to vector<2x8x16xf32>
    %186 = arith.truncf %185 : vector<2x8x16xf32> to vector<2x8x16xbf16>
    %187 = vector.extract_strided_slice %180 {offsets = [0, 0], sizes = [16, 16], strides = [1, 1]} : vector<16x32xf32> to vector<16x16xf32>
    %188 = vector.shape_cast %187 : vector<16x16xf32> to vector<2x8x16xf32>
    %189 = arith.truncf %188 : vector<2x8x16xf32> to vector<2x8x16xbf16>
    "tpu.trace_start"() <{level = 10 : i32, message = "bqd,bkd->bqk"}> : () -> ()
    %cst_71 = arith.constant dense<0.000000e+00> : vector<2x8x8xf32>
    %190 = tpu.matmul %183, %186, %cst_71 {dimension_numbers = #tpu.dot_dimension_numbers<[2], [2], [1], [1], [0, 0, 0, 1, 1, 1], [0], [0]>} : vector<2x8x16xbf16>, vector<2x8x16xbf16>, vector<2x8x8xf32> -> vector<2x8x8xf32>
    "tpu.trace_stop"() : () -> ()
    %cst_72 = arith.constant 2.500000e-01 : f32
    %191 = vector.broadcast %cst_72 : f32 to vector<2x8x8xf32>
    %192 = arith.mulf %190, %191 : vector<2x8x8xf32>
    %193 = arith.addf %192, %17 : vector<2x8x8xf32>
    %cst_73 = arith.constant dense<0xFF800000> : vector<2x8xf32>
    %194 = vector.multi_reduction <maximumf>, %193, %cst_73 [2] : vector<2x8x8xf32> to vector<2x8xf32>
    %195 = vector.shape_cast %194 : vector<2x8xf32> to vector<2x8x1xf32>
    %196 = vector.broadcast %195 : vector<2x8x1xf32> to vector<2x8x8xf32>
    %197 = arith.subf %193, %196 : vector<2x8x8xf32>
    %198 = math.exp %197 : vector<2x8x8xf32>
    %cst_74 = arith.constant dense<0.000000e+00> : vector<2x8xf32>
    %199 = vector.multi_reduction <add>, %198, %cst_74 [2] : vector<2x8x8xf32> to vector<2x8xf32>
    %200 = vector.shape_cast %199 : vector<2x8xf32> to vector<2x8x1xf32>
    %201 = vector.broadcast %200 : vector<2x8x1xf32> to vector<2x8x8xf32>
    %202 = arith.divf %198, %201 : vector<2x8x8xf32>
    %203 = arith.truncf %202 : vector<2x8x8xf32> to vector<2x8x8xbf16>
    "tpu.trace_start"() <{level = 10 : i32, message = "bqk,bkd->bqd"}> : () -> ()
    %cst_75 = arith.constant dense<0.000000e+00> : vector<2x8x16xf32>
    %204 = tpu.matmul %203, %189, %cst_75 {dimension_numbers = #tpu.dot_dimension_numbers<[2], [1], [1], [2], [0, 0, 0, 1, 1, 2], [0], [0]>} : vector<2x8x8xbf16>, vector<2x8x16xbf16>, vector<2x8x16xf32> -> vector<2x8x16xf32>
    "tpu.trace_stop"() : () -> ()
    %205 = vector.shape_cast %204 : vector<2x8x16xf32> to vector<16x16xf32>
    %206 = vector.extract_strided_slice %178 {offsets = [0, 16], sizes = [16, 16], strides = [1, 1]} : vector<16x32xf32> to vector<16x16xf32>
    %207 = vector.shape_cast %206 : vector<16x16xf32> to vector<2x8x16xf32>
    %208 = arith.truncf %207 : vector<2x8x16xf32> to vector<2x8x16xbf16>
    %209 = vector.extract_strided_slice %179 {offsets = [0, 16], sizes = [16, 16], strides = [1, 1]} : vector<16x32xf32> to vector<16x16xf32>
    %210 = vector.shape_cast %209 : vector<16x16xf32> to vector<2x8x16xf32>
    %211 = arith.truncf %210 : vector<2x8x16xf32> to vector<2x8x16xbf16>
    %212 = vector.extract_strided_slice %180 {offsets = [0, 16], sizes = [16, 16], strides = [1, 1]} : vector<16x32xf32> to vector<16x16xf32>
    %213 = vector.shape_cast %212 : vector<16x16xf32> to vector<2x8x16xf32>
    %214 = arith.truncf %213 : vector<2x8x16xf32> to vector<2x8x16xbf16>
    "tpu.trace_start"() <{level = 10 : i32, message = "bqd,bkd->bqk"}> : () -> ()
    %cst_76 = arith.constant dense<0.000000e+00> : vector<2x8x8xf32>
    %215 = tpu.matmul %208, %211, %cst_76 {dimension_numbers = #tpu.dot_dimension_numbers<[2], [2], [1], [1], [0, 0, 0, 1, 1, 1], [0], [0]>} : vector<2x8x16xbf16>, vector<2x8x16xbf16>, vector<2x8x8xf32> -> vector<2x8x8xf32>
    "tpu.trace_stop"() : () -> ()
    %cst_77 = arith.constant 2.500000e-01 : f32
    %216 = vector.broadcast %cst_77 : f32 to vector<2x8x8xf32>
    %217 = arith.mulf %215, %216 : vector<2x8x8xf32>
    %218 = arith.addf %217, %17 : vector<2x8x8xf32>
    %cst_78 = arith.constant dense<0xFF800000> : vector<2x8xf32>
    %219 = vector.multi_reduction <maximumf>, %218, %cst_78 [2] : vector<2x8x8xf32> to vector<2x8xf32>
    %220 = vector.shape_cast %219 : vector<2x8xf32> to vector<2x8x1xf32>
    %221 = vector.broadcast %220 : vector<2x8x1xf32> to vector<2x8x8xf32>
    %222 = arith.subf %218, %221 : vector<2x8x8xf32>
    %223 = math.exp %222 : vector<2x8x8xf32>
    %cst_79 = arith.constant dense<0.000000e+00> : vector<2x8xf32>
    %224 = vector.multi_reduction <add>, %223, %cst_79 [2] : vector<2x8x8xf32> to vector<2x8xf32>
    %225 = vector.shape_cast %224 : vector<2x8xf32> to vector<2x8x1xf32>
    %226 = vector.broadcast %225 : vector<2x8x1xf32> to vector<2x8x8xf32>
    %227 = arith.divf %223, %226 : vector<2x8x8xf32>
    %228 = arith.truncf %227 : vector<2x8x8xf32> to vector<2x8x8xbf16>
    "tpu.trace_start"() <{level = 10 : i32, message = "bqk,bkd->bqd"}> : () -> ()
    %cst_80 = arith.constant dense<0.000000e+00> : vector<2x8x16xf32>
    %229 = tpu.matmul %228, %214, %cst_80 {dimension_numbers = #tpu.dot_dimension_numbers<[2], [1], [1], [2], [0, 0, 0, 1, 1, 2], [0], [0]>} : vector<2x8x8xbf16>, vector<2x8x16xbf16>, vector<2x8x16xf32> -> vector<2x8x16xf32>
    "tpu.trace_stop"() : () -> ()
    %230 = vector.shape_cast %229 : vector<2x8x16xf32> to vector<16x16xf32>
    %231 = tpu.concatenate %205, %230 in 1 : vector<16x16xf32>, vector<16x16xf32> -> vector<16x32xf32>
    %c1_81 = arith.constant 1 : index
    %c0_82 = arith.constant 0 : index
    %c0_83 = arith.constant 0 : index
    %232 = vector.load %arg16[%c1_81, %c0_82, %c0_83] : memref<2x32x32xbf16, #tpu.memory_space<vmem>>, vector<1x32x32xbf16>
    %233 = vector.shape_cast %232 : vector<1x32x32xbf16> to vector<32x32xbf16>
    %234 = arith.truncf %231 : vector<16x32xf32> to vector<16x32xbf16>
    %cst_84 = arith.constant dense<0.000000e+00> : vector<16x32xf32>
    %235 = tpu.matmul %234, %233, %cst_84 {dimension_numbers = #tpu.dot_dimension_numbers<[1], [0], [0], [1], [0, 0, 1, 1], [], []>} : vector<16x32xbf16>, vector<32x32xbf16>, vector<16x32xf32> -> vector<16x32xf32>
    %236 = arith.addf %235, %173 : vector<16x32xf32>
    %c1_85 = arith.constant 1 : index
    %c0_86 = arith.constant 0 : index
    %c0_87 = arith.constant 0 : index
    %237 = vector.load %arg17[%c1_85, %c0_86, %c0_87] : memref<2x1x32xf32, #tpu.memory_space<vmem>>, vector<1x1x32xf32>
    %238 = vector.shape_cast %237 : vector<1x1x32xf32> to vector<1x32xf32>
    %c1_88 = arith.constant 1 : index
    %c0_89 = arith.constant 0 : index
    %c0_90 = arith.constant 0 : index
    %239 = vector.load %arg18[%c1_88, %c0_89, %c0_90] : memref<2x1x32xf32, #tpu.memory_space<vmem>>, vector<1x1x32xf32>
    %240 = vector.shape_cast %239 : vector<1x1x32xf32> to vector<1x32xf32>
    %cst_91 = arith.constant dense<0.000000e+00> : vector<16xf32>
    %241 = vector.multi_reduction <add>, %236, %cst_91 [1] : vector<16x32xf32> to vector<16xf32>
    %242 = vector.shape_cast %241 : vector<16xf32> to vector<16x1xf32>
    %cst_92 = arith.constant 3.200000e+01 : f32
    %243 = vector.broadcast %cst_92 : f32 to vector<16x1xf32>
    %244 = arith.divf %242, %243 : vector<16x1xf32>
    %245 = vector.broadcast %244 : vector<16x1xf32> to vector<16x32xf32>
    %246 = arith.subf %236, %245 : vector<16x32xf32>
    %247 = arith.mulf %246, %246 : vector<16x32xf32>
    %cst_93 = arith.constant dense<0.000000e+00> : vector<16xf32>
    %248 = vector.multi_reduction <add>, %247, %cst_93 [1] : vector<16x32xf32> to vector<16xf32>
    %249 = vector.shape_cast %248 : vector<16xf32> to vector<16x1xf32>
    %cst_94 = arith.constant 3.200000e+01 : f32
    %250 = vector.broadcast %cst_94 : f32 to vector<16x1xf32>
    %251 = arith.divf %249, %250 : vector<16x1xf32>
    %252 = vector.broadcast %244 : vector<16x1xf32> to vector<16x32xf32>
    %253 = arith.subf %236, %252 : vector<16x32xf32>
    %cst_95 = arith.constant 9.99999997E-7 : f32
    %254 = vector.broadcast %cst_95 : f32 to vector<16x1xf32>
    %255 = arith.addf %251, %254 : vector<16x1xf32>
    %256 = math.rsqrt %255 : vector<16x1xf32>
    %257 = vector.broadcast %256 : vector<16x1xf32> to vector<16x32xf32>
    %258 = arith.mulf %253, %257 : vector<16x32xf32>
    %259 = vector.broadcast %238 : vector<1x32xf32> to vector<16x32xf32>
    %260 = arith.mulf %258, %259 : vector<16x32xf32>
    %261 = vector.broadcast %240 : vector<1x32xf32> to vector<16x32xf32>
    %262 = arith.addf %260, %261 : vector<16x32xf32>
    %c1_96 = arith.constant 1 : index
    %c0_97 = arith.constant 0 : index
    %c0_98 = arith.constant 0 : index
    %263 = vector.load %arg19[%c1_96, %c0_97, %c0_98] : memref<2x32x64xbf16, #tpu.memory_space<vmem>>, vector<1x32x64xbf16>
    %264 = vector.shape_cast %263 : vector<1x32x64xbf16> to vector<32x64xbf16>
    %265 = arith.truncf %262 : vector<16x32xf32> to vector<16x32xbf16>
    %cst_99 = arith.constant dense<0.000000e+00> : vector<16x64xf32>
    %266 = tpu.matmul %265, %264, %cst_99 {dimension_numbers = #tpu.dot_dimension_numbers<[1], [0], [0], [1], [0, 0, 1, 1], [], []>} : vector<16x32xbf16>, vector<32x64xbf16>, vector<16x64xf32> -> vector<16x64xf32>
    %c1_100 = arith.constant 1 : index
    %c0_101 = arith.constant 0 : index
    %c0_102 = arith.constant 0 : index
    %267 = vector.load %arg20[%c1_100, %c0_101, %c0_102] : memref<2x1x64xf32, #tpu.memory_space<vmem>>, vector<1x1x64xf32>
    %268 = vector.shape_cast %267 : vector<1x1x64xf32> to vector<1x64xf32>
    %269 = vector.broadcast %268 : vector<1x64xf32> to vector<16x64xf32>
    %270 = arith.addf %266, %269 : vector<16x64xf32>
    %cst_103 = arith.constant 0.000000e+00 : f32
    %271 = vector.broadcast %cst_103 : f32 to vector<16x64xf32>
    %272 = arith.maximumf %270, %271 : vector<16x64xf32>
    %c1_104 = arith.constant 1 : index
    %c0_105 = arith.constant 0 : index
    %c0_106 = arith.constant 0 : index
    %273 = vector.load %arg21[%c1_104, %c0_105, %c0_106] : memref<2x64x32xbf16, #tpu.memory_space<vmem>>, vector<1x64x32xbf16>
    %274 = vector.shape_cast %273 : vector<1x64x32xbf16> to vector<64x32xbf16>
    %275 = arith.truncf %272 : vector<16x64xf32> to vector<16x64xbf16>
    %cst_107 = arith.constant dense<0.000000e+00> : vector<16x32xf32>
    %276 = tpu.matmul %275, %274, %cst_107 {dimension_numbers = #tpu.dot_dimension_numbers<[1], [0], [0], [1], [0, 0, 1, 1], [], []>} : vector<16x64xbf16>, vector<64x32xbf16>, vector<16x32xf32> -> vector<16x32xf32>
    %c1_108 = arith.constant 1 : index
    %c0_109 = arith.constant 0 : index
    %c0_110 = arith.constant 0 : index
    %277 = vector.load %arg22[%c1_108, %c0_109, %c0_110] : memref<2x1x32xf32, #tpu.memory_space<vmem>>, vector<1x1x32xf32>
    %278 = vector.shape_cast %277 : vector<1x1x32xf32> to vector<1x32xf32>
    %279 = vector.broadcast %278 : vector<1x32xf32> to vector<16x32xf32>
    %280 = arith.addf %276, %279 : vector<16x32xf32>
    %281 = arith.addf %280, %262 : vector<16x32xf32>
    %c1_111 = arith.constant 1 : index
    %c0_112 = arith.constant 0 : index
    %c0_113 = arith.constant 0 : index
    %282 = vector.load %arg23[%c1_111, %c0_112, %c0_113] : memref<2x1x32xf32, #tpu.memory_space<vmem>>, vector<1x1x32xf32>
    %283 = vector.shape_cast %282 : vector<1x1x32xf32> to vector<1x32xf32>
    %c1_114 = arith.constant 1 : index
    %c0_115 = arith.constant 0 : index
    %c0_116 = arith.constant 0 : index
    %284 = vector.load %arg24[%c1_114, %c0_115, %c0_116] : memref<2x1x32xf32, #tpu.memory_space<vmem>>, vector<1x1x32xf32>
    %285 = vector.shape_cast %284 : vector<1x1x32xf32> to vector<1x32xf32>
    %cst_117 = arith.constant dense<0.000000e+00> : vector<16xf32>
    %286 = vector.multi_reduction <add>, %281, %cst_117 [1] : vector<16x32xf32> to vector<16xf32>
    %287 = vector.shape_cast %286 : vector<16xf32> to vector<16x1xf32>
    %cst_118 = arith.constant 3.200000e+01 : f32
    %288 = vector.broadcast %cst_118 : f32 to vector<16x1xf32>
    %289 = arith.divf %287, %288 : vector<16x1xf32>
    %290 = vector.broadcast %289 : vector<16x1xf32> to vector<16x32xf32>
    %291 = arith.subf %281, %290 : vector<16x32xf32>
    %292 = arith.mulf %291, %291 : vector<16x32xf32>
    %cst_119 = arith.constant dense<0.000000e+00> : vector<16xf32>
    %293 = vector.multi_reduction <add>, %292, %cst_119 [1] : vector<16x32xf32> to vector<16xf32>
    %294 = vector.shape_cast %293 : vector<16xf32> to vector<16x1xf32>
    %cst_120 = arith.constant 3.200000e+01 : f32
    %295 = vector.broadcast %cst_120 : f32 to vector<16x1xf32>
    %296 = arith.divf %294, %295 : vector<16x1xf32>
    %297 = vector.broadcast %289 : vector<16x1xf32> to vector<16x32xf32>
    %298 = arith.subf %281, %297 : vector<16x32xf32>
    %cst_121 = arith.constant 9.99999997E-7 : f32
    %299 = vector.broadcast %cst_121 : f32 to vector<16x1xf32>
    %300 = arith.addf %296, %299 : vector<16x1xf32>
    %301 = math.rsqrt %300 : vector<16x1xf32>
    %302 = vector.broadcast %301 : vector<16x1xf32> to vector<16x32xf32>
    %303 = arith.mulf %298, %302 : vector<16x32xf32>
    %304 = vector.broadcast %283 : vector<1x32xf32> to vector<16x32xf32>
    %305 = arith.mulf %303, %304 : vector<16x32xf32>
    %306 = vector.broadcast %285 : vector<1x32xf32> to vector<16x32xf32>
    %307 = arith.addf %305, %306 : vector<16x32xf32>
    %c0_122 = arith.constant 0 : index
    %c0_123 = arith.constant 0 : index
    %308 = vector.load %arg29[%c0_122, %c0_123] : memref<16x32xf32, #tpu.memory_space<vmem>>, vector<16x32xf32>
    tpu.vector_store %arg29[%c0_122, %c0_123], %307 {strides = array<i32>} : memref<16x32xf32, #tpu.memory_space<vmem>>, vector<16x32xf32>,
    %c0_124 = arith.constant 0 : index
    %309 = memref.load %arg1[%c0_124] : memref<2xi32, #tpu.memory_space<smem>>
    %310 = arith.index_cast %309 : i32 to index
    %c0_125 = arith.constant 0 : index
    %311 = vector.load %arg29[%310, %c0_125] : memref<16x32xf32, #tpu.memory_space<vmem>>, vector<1x32xf32>
    %c1_126 = arith.constant 1 : index
    %312 = memref.load %arg1[%c1_126] : memref<2xi32, #tpu.memory_space<smem>>
    %313 = arith.index_cast %312 : i32 to index
    %c0_127 = arith.constant 0 : index
    %314 = vector.load %arg29[%313, %c0_127] : memref<16x32xf32, #tpu.memory_space<vmem>>, vector<1x32xf32>
    %315 = tpu.concatenate %311, %314 in 0 : vector<1x32xf32>, vector<1x32xf32> -> vector<2x32xf32>
    %c0_128 = arith.constant 0 : index
    %c0_129 = arith.constant 0 : index
    %316 = vector.load %arg10[%c0_128, %c0_129] : memref<32x16xbf16, #tpu.memory_space<vmem>>, vector<32x16xbf16>
    %317 = arith.truncf %315 : vector<2x32xf32> to vector<2x32xbf16>
    %cst_130 = arith.constant dense<0.000000e+00> : vector<2x16xf32>
    %318 = tpu.matmul %317, %316, %cst_130 {dimension_numbers = #tpu.dot_dimension_numbers<[1], [0], [0], [1], [0, 0, 1, 1], [], []>} : vector<2x32xbf16>, vector<32x16xbf16>, vector<2x16xf32> -> vector<2x16xf32>
    %c0_131 = arith.constant 0 : index
    %c0_132 = arith.constant 0 : index
    %319 = vector.load %arg11[%c0_131, %c0_132] : memref<32x16xbf16, #tpu.memory_space<vmem>>, vector<32x16xbf16>
    %320 = arith.truncf %315 : vector<2x32xf32> to vector<2x32xbf16>
    %cst_133 = arith.constant dense<0.000000e+00> : vector<2x16xf32>
    %321 = tpu.matmul %320, %319, %cst_133 {dimension_numbers = #tpu.dot_dimension_numbers<[1], [0], [0], [1], [0, 0, 1, 1], [], []>} : vector<2x32xbf16>, vector<32x16xbf16>, vector<2x16xf32> -> vector<2x16xf32>
    %c0_134 = arith.constant 0 : index
    %c0_135 = arith.constant 0 : index
    %322 = vector.load %arg7[%c0_134, %c0_135] : memref<2x16xf32, #tpu.memory_space<vmem>>, vector<2x16xf32>
    %cst_136 = arith.constant 5.000000e-01 : f32
    %323 = vector.broadcast %cst_136 : f32 to vector<2x16xf32>
    %324 = arith.mulf %323, %321 : vector<2x16xf32>
    %325 = math.exp %324 : vector<2x16xf32>
    %326 = arith.mulf %322, %325 : vector<2x16xf32>
    %327 = arith.addf %326, %318 : vector<2x16xf32>
    %c0_137 = arith.constant 0 : index
    %c0_138 = arith.constant 0 : index
    %328 = vector.load %arg12[%c0_137, %c0_138] : memref<16x32xbf16, #tpu.memory_space<vmem>>, vector<16x32xbf16>
    %329 = arith.truncf %327 : vector<2x16xf32> to vector<2x16xbf16>
    %cst_139 = arith.constant dense<0.000000e+00> : vector<2x32xf32>
    %330 = tpu.matmul %329, %328, %cst_139 {dimension_numbers = #tpu.dot_dimension_numbers<[1], [0], [0], [1], [0, 0, 1, 1], [], []>} : vector<2x16xbf16>, vector<16x32xbf16>, vector<2x32xf32> -> vector<2x32xf32>
    %c0_140 = arith.constant 0 : index
    %c0_141 = arith.constant 0 : index
    %331 = vector.load %arg13[%c0_140, %c0_141] : memref<1x32xf32, #tpu.memory_space<vmem>>, vector<1x32xf32>
    %332 = vector.broadcast %331 : vector<1x32xf32> to vector<2x32xf32>
    %333 = arith.addf %330, %332 : vector<2x32xf32>
    %334 = tpu.iota {dimensions = array<i32: 0>} : vector<16x1xi32>
    %cst_142 = arith.constant 0.000000e+00 : f32
    %335 = vector.broadcast %cst_142 : f32 to vector<16x32xf32>
    %c0_i32 = arith.constant 0 : i32
    %336 = vector.broadcast %c0_i32 : i32 to vector<16x1xi32>
    %337 = arith.cmpi eq, %334, %336 : vector<16x1xi32>
    %338 = vector.extract_strided_slice %333 {offsets = [0, 0], sizes = [1, 32], strides = [1, 1]} : vector<2x32xf32> to vector<1x32xf32>
    %cst_143 = arith.constant 5.65685415 : f32
    %339 = vector.broadcast %cst_143 : f32 to vector<1x32xf32>
    %340 = arith.mulf %338, %339 : vector<1x32xf32>
    %341 = vector.shape_cast %337 : vector<16x1xi1> to vector<16x1xi1>
    %342 = vector.broadcast %341 : vector<16x1xi1> to vector<16x32xi1>
    %343 = vector.shape_cast %340 : vector<1x32xf32> to vector<1x32xf32>
    %344 = vector.broadcast %343 : vector<1x32xf32> to vector<16x32xf32>
    %345 = arith.select %342, %344, %335 : vector<16x32xi1>, vector<16x32xf32>
    %c8_i32 = arith.constant 8 : i32
    %346 = vector.broadcast %c8_i32 : i32 to vector<16x1xi32>
    %347 = arith.cmpi eq, %334, %346 : vector<16x1xi32>
    %348 = vector.extract_strided_slice %333 {offsets = [1, 0], sizes = [1, 32], strides = [1, 1]} : vector<2x32xf32> to vector<1x32xf32>
    %cst_144 = arith.constant 5.65685415 : f32
    %349 = vector.broadcast %cst_144 : f32 to vector<1x32xf32>
    %350 = arith.mulf %348, %349 : vector<1x32xf32>
    %351 = vector.shape_cast %347 : vector<16x1xi1> to vector<16x1xi1>
    %352 = vector.broadcast %351 : vector<16x1xi1> to vector<16x32xi1>
    %353 = vector.shape_cast %350 : vector<1x32xf32> to vector<1x32xf32>
    %354 = vector.broadcast %353 : vector<1x32xf32> to vector<16x32xf32>
    %355 = arith.select %352, %354, %345 : vector<16x32xi1>, vector<16x32xf32>
    %c0_145 = arith.constant 0 : index
    %c0_146 = arith.constant 0 : index
    %356 = vector.load %arg4[%c0_145, %c0_146] : memref<2x8xf32, #tpu.memory_space<vmem>>, vector<2x8xf32>
    %357 = tpu.iota {dimensions = array<i32: 0>} : vector<8x8xi32>
    %358 = tpu.iota {dimensions = array<i32: 1>} : vector<8x8xi32>
    %359 = arith.cmpi sle, %358, %357 : vector<8x8xi32>
    %360 = arith.extui %359 : vector<8x8xi1> to vector<8x8xi32>
    %361 = arith.sitofp %360 : vector<8x8xi32> to vector<8x8xf32>
    %362 = vector.shape_cast %361 : vector<8x8xf32> to vector<1x8x8xf32>
    %363 = vector.shape_cast %356 : vector<2x8xf32> to vector<2x1x8xf32>
    %364 = vector.broadcast %362 : vector<1x8x8xf32> to vector<2x8x8xf32>
    %365 = vector.broadcast %363 : vector<2x1x8xf32> to vector<2x8x8xf32>
    %366 = arith.mulf %364, %365 : vector<2x8x8xf32>
    %cst_147 = arith.constant 1.000000e+00 : f32
    %367 = vector.broadcast %cst_147 : f32 to vector<2x8x8xf32>
    %368 = arith.subf %366, %367 : vector<2x8x8xf32>
    %cst_148 = arith.constant 1.000000e+09 : f32
    %369 = vector.broadcast %cst_148 : f32 to vector<2x8x8xf32>
    %370 = arith.mulf %368, %369 : vector<2x8x8xf32>
    %371 = arith.addf %0, %355 : vector<16x32xf32>
    %cst_149 = arith.constant dense<0.000000e+00> : vector<16xf32>
    %372 = vector.multi_reduction <add>, %371, %cst_149 [1] : vector<16x32xf32> to vector<16xf32>
    %373 = vector.shape_cast %372 : vector<16xf32> to vector<16x1xf32>
    %cst_150 = arith.constant 3.200000e+01 : f32
    %374 = vector.broadcast %cst_150 : f32 to vector<16x1xf32>
    %375 = arith.divf %373, %374 : vector<16x1xf32>
    %376 = vector.broadcast %375 : vector<16x1xf32> to vector<16x32xf32>
    %377 = arith.subf %371, %376 : vector<16x32xf32>
    %378 = arith.mulf %377, %377 : vector<16x32xf32>
    %cst_151 = arith.constant dense<0.000000e+00> : vector<16xf32>
    %379 = vector.multi_reduction <add>, %378, %cst_151 [1] : vector<16x32xf32> to vector<16xf32>
    %380 = vector.shape_cast %379 : vector<16xf32> to vector<16x1xf32>
    %cst_152 = arith.constant 3.200000e+01 : f32
    %381 = vector.broadcast %cst_152 : f32 to vector<16x1xf32>
    %382 = arith.divf %380, %381 : vector<16x1xf32>
    %383 = vector.broadcast %375 : vector<16x1xf32> to vector<16x32xf32>
    %384 = arith.subf %371, %383 : vector<16x32xf32>
    %cst_153 = arith.constant 9.99999997E-7 : f32
    %385 = vector.broadcast %cst_153 : f32 to vector<16x1xf32>
    %386 = arith.addf %382, %385 : vector<16x1xf32>
    %387 = math.rsqrt %386 : vector<16x1xf32>
    %388 = vector.broadcast %387 : vector<16x1xf32> to vector<16x32xf32>
    %389 = arith.mulf %384, %388 : vector<16x32xf32>
    %390 = vector.broadcast %1 : vector<1x32xf32> to vector<16x32xf32>
    %391 = arith.mulf %389, %390 : vector<16x32xf32>
    %392 = vector.broadcast %2 : vector<1x32xf32> to vector<16x32xf32>
    %393 = arith.addf %391, %392 : vector<16x32xf32>
    %c0_154 = arith.constant 0 : index
    %c0_155 = arith.constant 0 : index
    %c0_156 = arith.constant 0 : index
    %394 = vector.load %arg15[%c0_154, %c0_155, %c0_156] : memref<2x32x96xbf16, #tpu.memory_space<vmem>>, vector<1x32x96xbf16>
    %395 = vector.shape_cast %394 : vector<1x32x96xbf16> to vector<32x96xbf16>
    %396 = arith.truncf %393 : vector<16x32xf32> to vector<16x32xbf16>
    %cst_157 = arith.constant dense<0.000000e+00> : vector<16x96xf32>
    %397 = tpu.matmul %396, %395, %cst_157 {dimension_numbers = #tpu.dot_dimension_numbers<[1], [0], [0], [1], [0, 0, 1, 1], [], []>} : vector<16x32xbf16>, vector<32x96xbf16>, vector<16x96xf32> -> vector<16x96xf32>
    %398 = vector.extract_strided_slice %397 {offsets = [0, 0], sizes = [16, 32], strides = [1, 1]} : vector<16x96xf32> to vector<16x32xf32>
    %399 = vector.extract_strided_slice %397 {offsets = [0, 32], sizes = [16, 32], strides = [1, 1]} : vector<16x96xf32> to vector<16x32xf32>
    %400 = vector.extract_strided_slice %397 {offsets = [0, 64], sizes = [16, 32], strides = [1, 1]} : vector<16x96xf32> to vector<16x32xf32>
    %401 = vector.extract_strided_slice %398 {offsets = [0, 0], sizes = [16, 16], strides = [1, 1]} : vector<16x32xf32> to vector<16x16xf32>
    %402 = vector.shape_cast %401 : vector<16x16xf32> to vector<2x8x16xf32>
    %403 = arith.truncf %402 : vector<2x8x16xf32> to vector<2x8x16xbf16>
    %404 = vector.extract_strided_slice %399 {offsets = [0, 0], sizes = [16, 16], strides = [1, 1]} : vector<16x32xf32> to vector<16x16xf32>
    %405 = vector.shape_cast %404 : vector<16x16xf32> to vector<2x8x16xf32>
    %406 = arith.truncf %405 : vector<2x8x16xf32> to vector<2x8x16xbf16>
    %407 = vector.extract_strided_slice %400 {offsets = [0, 0], sizes = [16, 16], strides = [1, 1]} : vector<16x32xf32> to vector<16x16xf32>
    %408 = vector.shape_cast %407 : vector<16x16xf32> to vector<2x8x16xf32>
    %409 = arith.truncf %408 : vector<2x8x16xf32> to vector<2x8x16xbf16>
    "tpu.trace_start"() <{level = 10 : i32, message = "bqd,bkd->bqk"}> : () -> ()
    %cst_158 = arith.constant dense<0.000000e+00> : vector<2x8x8xf32>
    %410 = tpu.matmul %403, %406, %cst_158 {dimension_numbers = #tpu.dot_dimension_numbers<[2], [2], [1], [1], [0, 0, 0, 1, 1, 1], [0], [0]>} : vector<2x8x16xbf16>, vector<2x8x16xbf16>, vector<2x8x8xf32> -> vector<2x8x8xf32>
    "tpu.trace_stop"() : () -> ()
    %cst_159 = arith.constant 2.500000e-01 : f32
    %411 = vector.broadcast %cst_159 : f32 to vector<2x8x8xf32>
    %412 = arith.mulf %410, %411 : vector<2x8x8xf32>
    %413 = arith.addf %412, %370 : vector<2x8x8xf32>
    %cst_160 = arith.constant dense<0xFF800000> : vector<2x8xf32>
    %414 = vector.multi_reduction <maximumf>, %413, %cst_160 [2] : vector<2x8x8xf32> to vector<2x8xf32>
    %415 = vector.shape_cast %414 : vector<2x8xf32> to vector<2x8x1xf32>
    %416 = vector.broadcast %415 : vector<2x8x1xf32> to vector<2x8x8xf32>
    %417 = arith.subf %413, %416 : vector<2x8x8xf32>
    %418 = math.exp %417 : vector<2x8x8xf32>
    %cst_161 = arith.constant dense<0.000000e+00> : vector<2x8xf32>
    %419 = vector.multi_reduction <add>, %418, %cst_161 [2] : vector<2x8x8xf32> to vector<2x8xf32>
    %420 = vector.shape_cast %419 : vector<2x8xf32> to vector<2x8x1xf32>
    %421 = vector.broadcast %420 : vector<2x8x1xf32> to vector<2x8x8xf32>
    %422 = arith.divf %418, %421 : vector<2x8x8xf32>
    %423 = arith.truncf %422 : vector<2x8x8xf32> to vector<2x8x8xbf16>
    "tpu.trace_start"() <{level = 10 : i32, message = "bqk,bkd->bqd"}> : () -> ()
    %cst_162 = arith.constant dense<0.000000e+00> : vector<2x8x16xf32>
    %424 = tpu.matmul %423, %409, %cst_162 {dimension_numbers = #tpu.dot_dimension_numbers<[2], [1], [1], [2], [0, 0, 0, 1, 1, 2], [0], [0]>} : vector<2x8x8xbf16>, vector<2x8x16xbf16>, vector<2x8x16xf32> -> vector<2x8x16xf32>
    "tpu.trace_stop"() : () -> ()
    %425 = vector.shape_cast %424 : vector<2x8x16xf32> to vector<16x16xf32>
    %426 = vector.extract_strided_slice %398 {offsets = [0, 16], sizes = [16, 16], strides = [1, 1]} : vector<16x32xf32> to vector<16x16xf32>
    %427 = vector.shape_cast %426 : vector<16x16xf32> to vector<2x8x16xf32>
    %428 = arith.truncf %427 : vector<2x8x16xf32> to vector<2x8x16xbf16>
    %429 = vector.extract_strided_slice %399 {offsets = [0, 16], sizes = [16, 16], strides = [1, 1]} : vector<16x32xf32> to vector<16x16xf32>
    %430 = vector.shape_cast %429 : vector<16x16xf32> to vector<2x8x16xf32>
    %431 = arith.truncf %430 : vector<2x8x16xf32> to vector<2x8x16xbf16>
    %432 = vector.extract_strided_slice %400 {offsets = [0, 16], sizes = [16, 16], strides = [1, 1]} : vector<16x32xf32> to vector<16x16xf32>
    %433 = vector.shape_cast %432 : vector<16x16xf32> to vector<2x8x16xf32>
    %434 = arith.truncf %433 : vector<2x8x16xf32> to vector<2x8x16xbf16>
    "tpu.trace_start"() <{level = 10 : i32, message = "bqd,bkd->bqk"}> : () -> ()
    %cst_163 = arith.constant dense<0.000000e+00> : vector<2x8x8xf32>
    %435 = tpu.matmul %428, %431, %cst_163 {dimension_numbers = #tpu.dot_dimension_numbers<[2], [2], [1], [1], [0, 0, 0, 1, 1, 1], [0], [0]>} : vector<2x8x16xbf16>, vector<2x8x16xbf16>, vector<2x8x8xf32> -> vector<2x8x8xf32>
    "tpu.trace_stop"() : () -> ()
    %cst_164 = arith.constant 2.500000e-01 : f32
    %436 = vector.broadcast %cst_164 : f32 to vector<2x8x8xf32>
    %437 = arith.mulf %435, %436 : vector<2x8x8xf32>
    %438 = arith.addf %437, %370 : vector<2x8x8xf32>
    %cst_165 = arith.constant dense<0xFF800000> : vector<2x8xf32>
    %439 = vector.multi_reduction <maximumf>, %438, %cst_165 [2] : vector<2x8x8xf32> to vector<2x8xf32>
    %440 = vector.shape_cast %439 : vector<2x8xf32> to vector<2x8x1xf32>
    %441 = vector.broadcast %440 : vector<2x8x1xf32> to vector<2x8x8xf32>
    %442 = arith.subf %438, %441 : vector<2x8x8xf32>
    %443 = math.exp %442 : vector<2x8x8xf32>
    %cst_166 = arith.constant dense<0.000000e+00> : vector<2x8xf32>
    %444 = vector.multi_reduction <add>, %443, %cst_166 [2] : vector<2x8x8xf32> to vector<2x8xf32>
    %445 = vector.shape_cast %444 : vector<2x8xf32> to vector<2x8x1xf32>
    %446 = vector.broadcast %445 : vector<2x8x1xf32> to vector<2x8x8xf32>
    %447 = arith.divf %443, %446 : vector<2x8x8xf32>
    %448 = arith.truncf %447 : vector<2x8x8xf32> to vector<2x8x8xbf16>
    "tpu.trace_start"() <{level = 10 : i32, message = "bqk,bkd->bqd"}> : () -> ()
    %cst_167 = arith.constant dense<0.000000e+00> : vector<2x8x16xf32>
    %449 = tpu.matmul %448, %434, %cst_167 {dimension_numbers = #tpu.dot_dimension_numbers<[2], [1], [1], [2], [0, 0, 0, 1, 1, 2], [0], [0]>} : vector<2x8x8xbf16>, vector<2x8x16xbf16>, vector<2x8x16xf32> -> vector<2x8x16xf32>
    "tpu.trace_stop"() : () -> ()
    %450 = vector.shape_cast %449 : vector<2x8x16xf32> to vector<16x16xf32>
    %451 = tpu.concatenate %425, %450 in 1 : vector<16x16xf32>, vector<16x16xf32> -> vector<16x32xf32>
    %c0_168 = arith.constant 0 : index
    %c0_169 = arith.constant 0 : index
    %c0_170 = arith.constant 0 : index
    %452 = vector.load %arg16[%c0_168, %c0_169, %c0_170] : memref<2x32x32xbf16, #tpu.memory_space<vmem>>, vector<1x32x32xbf16>
    %453 = vector.shape_cast %452 : vector<1x32x32xbf16> to vector<32x32xbf16>
    %454 = arith.truncf %451 : vector<16x32xf32> to vector<16x32xbf16>
    %cst_171 = arith.constant dense<0.000000e+00> : vector<16x32xf32>
    %455 = tpu.matmul %454, %453, %cst_171 {dimension_numbers = #tpu.dot_dimension_numbers<[1], [0], [0], [1], [0, 0, 1, 1], [], []>} : vector<16x32xbf16>, vector<32x32xbf16>, vector<16x32xf32> -> vector<16x32xf32>
    %456 = arith.addf %455, %393 : vector<16x32xf32>
    %c0_172 = arith.constant 0 : index
    %c0_173 = arith.constant 0 : index
    %c0_174 = arith.constant 0 : index
    %457 = vector.load %arg17[%c0_172, %c0_173, %c0_174] : memref<2x1x32xf32, #tpu.memory_space<vmem>>, vector<1x1x32xf32>
    %458 = vector.shape_cast %457 : vector<1x1x32xf32> to vector<1x32xf32>
    %c0_175 = arith.constant 0 : index
    %c0_176 = arith.constant 0 : index
    %c0_177 = arith.constant 0 : index
    %459 = vector.load %arg18[%c0_175, %c0_176, %c0_177] : memref<2x1x32xf32, #tpu.memory_space<vmem>>, vector<1x1x32xf32>
    %460 = vector.shape_cast %459 : vector<1x1x32xf32> to vector<1x32xf32>
    %cst_178 = arith.constant dense<0.000000e+00> : vector<16xf32>
    %461 = vector.multi_reduction <add>, %456, %cst_178 [1] : vector<16x32xf32> to vector<16xf32>
    %462 = vector.shape_cast %461 : vector<16xf32> to vector<16x1xf32>
    %cst_179 = arith.constant 3.200000e+01 : f32
    %463 = vector.broadcast %cst_179 : f32 to vector<16x1xf32>
    %464 = arith.divf %462, %463 : vector<16x1xf32>
    %465 = vector.broadcast %464 : vector<16x1xf32> to vector<16x32xf32>
    %466 = arith.subf %456, %465 : vector<16x32xf32>
    %467 = arith.mulf %466, %466 : vector<16x32xf32>
    %cst_180 = arith.constant dense<0.000000e+00> : vector<16xf32>
    %468 = vector.multi_reduction <add>, %467, %cst_180 [1] : vector<16x32xf32> to vector<16xf32>
    %469 = vector.shape_cast %468 : vector<16xf32> to vector<16x1xf32>
    %cst_181 = arith.constant 3.200000e+01 : f32
    %470 = vector.broadcast %cst_181 : f32 to vector<16x1xf32>
    %471 = arith.divf %469, %470 : vector<16x1xf32>
    %472 = vector.broadcast %464 : vector<16x1xf32> to vector<16x32xf32>
    %473 = arith.subf %456, %472 : vector<16x32xf32>
    %cst_182 = arith.constant 9.99999997E-7 : f32
    %474 = vector.broadcast %cst_182 : f32 to vector<16x1xf32>
    %475 = arith.addf %471, %474 : vector<16x1xf32>
    %476 = math.rsqrt %475 : vector<16x1xf32>
    %477 = vector.broadcast %476 : vector<16x1xf32> to vector<16x32xf32>
    %478 = arith.mulf %473, %477 : vector<16x32xf32>
    %479 = vector.broadcast %458 : vector<1x32xf32> to vector<16x32xf32>
    %480 = arith.mulf %478, %479 : vector<16x32xf32>
    %481 = vector.broadcast %460 : vector<1x32xf32> to vector<16x32xf32>
    %482 = arith.addf %480, %481 : vector<16x32xf32>
    %c0_183 = arith.constant 0 : index
    %c0_184 = arith.constant 0 : index
    %c0_185 = arith.constant 0 : index
    %483 = vector.load %arg19[%c0_183, %c0_184, %c0_185] : memref<2x32x64xbf16, #tpu.memory_space<vmem>>, vector<1x32x64xbf16>
    %484 = vector.shape_cast %483 : vector<1x32x64xbf16> to vector<32x64xbf16>
    %485 = arith.truncf %482 : vector<16x32xf32> to vector<16x32xbf16>
    %cst_186 = arith.constant dense<0.000000e+00> : vector<16x64xf32>
    %486 = tpu.matmul %485, %484, %cst_186 {dimension_numbers = #tpu.dot_dimension_numbers<[1], [0], [0], [1], [0, 0, 1, 1], [], []>} : vector<16x32xbf16>, vector<32x64xbf16>, vector<16x64xf32> -> vector<16x64xf32>
    %c0_187 = arith.constant 0 : index
    %c0_188 = arith.constant 0 : index
    %c0_189 = arith.constant 0 : index
    %487 = vector.load %arg20[%c0_187, %c0_188, %c0_189] : memref<2x1x64xf32, #tpu.memory_space<vmem>>, vector<1x1x64xf32>
    %488 = vector.shape_cast %487 : vector<1x1x64xf32> to vector<1x64xf32>
    %489 = vector.broadcast %488 : vector<1x64xf32> to vector<16x64xf32>
    %490 = arith.addf %486, %489 : vector<16x64xf32>
    %cst_190 = arith.constant 0.000000e+00 : f32
    %491 = vector.broadcast %cst_190 : f32 to vector<16x64xf32>
    %492 = arith.maximumf %490, %491 : vector<16x64xf32>
    %c0_191 = arith.constant 0 : index
    %c0_192 = arith.constant 0 : index
    %c0_193 = arith.constant 0 : index
    %493 = vector.load %arg21[%c0_191, %c0_192, %c0_193] : memref<2x64x32xbf16, #tpu.memory_space<vmem>>, vector<1x64x32xbf16>
    %494 = vector.shape_cast %493 : vector<1x64x32xbf16> to vector<64x32xbf16>
    %495 = arith.truncf %492 : vector<16x64xf32> to vector<16x64xbf16>
    %cst_194 = arith.constant dense<0.000000e+00> : vector<16x32xf32>
    %496 = tpu.matmul %495, %494, %cst_194 {dimension_numbers = #tpu.dot_dimension_numbers<[1], [0], [0], [1], [0, 0, 1, 1], [], []>} : vector<16x64xbf16>, vector<64x32xbf16>, vector<16x32xf32> -> vector<16x32xf32>
    %c0_195 = arith.constant 0 : index
    %c0_196 = arith.constant 0 : index
    %c0_197 = arith.constant 0 : index
    %497 = vector.load %arg22[%c0_195, %c0_196, %c0_197] : memref<2x1x32xf32, #tpu.memory_space<vmem>>, vector<1x1x32xf32>
    %498 = vector.shape_cast %497 : vector<1x1x32xf32> to vector<1x32xf32>
    %499 = vector.broadcast %498 : vector<1x32xf32> to vector<16x32xf32>
    %500 = arith.addf %496, %499 : vector<16x32xf32>
    %501 = arith.addf %500, %482 : vector<16x32xf32>
    %c0_198 = arith.constant 0 : index
    %c0_199 = arith.constant 0 : index
    %c0_200 = arith.constant 0 : index
    %502 = vector.load %arg23[%c0_198, %c0_199, %c0_200] : memref<2x1x32xf32, #tpu.memory_space<vmem>>, vector<1x1x32xf32>
    %503 = vector.shape_cast %502 : vector<1x1x32xf32> to vector<1x32xf32>
    %c0_201 = arith.constant 0 : index
    %c0_202 = arith.constant 0 : index
    %c0_203 = arith.constant 0 : index
    %504 = vector.load %arg24[%c0_201, %c0_202, %c0_203] : memref<2x1x32xf32, #tpu.memory_space<vmem>>, vector<1x1x32xf32>
    %505 = vector.shape_cast %504 : vector<1x1x32xf32> to vector<1x32xf32>
    %cst_204 = arith.constant dense<0.000000e+00> : vector<16xf32>
    %506 = vector.multi_reduction <add>, %501, %cst_204 [1] : vector<16x32xf32> to vector<16xf32>
    %507 = vector.shape_cast %506 : vector<16xf32> to vector<16x1xf32>
    %cst_205 = arith.constant 3.200000e+01 : f32
    %508 = vector.broadcast %cst_205 : f32 to vector<16x1xf32>
    %509 = arith.divf %507, %508 : vector<16x1xf32>
    %510 = vector.broadcast %509 : vector<16x1xf32> to vector<16x32xf32>
    %511 = arith.subf %501, %510 : vector<16x32xf32>
    %512 = arith.mulf %511, %511 : vector<16x32xf32>
    %cst_206 = arith.constant dense<0.000000e+00> : vector<16xf32>
    %513 = vector.multi_reduction <add>, %512, %cst_206 [1] : vector<16x32xf32> to vector<16xf32>
    %514 = vector.shape_cast %513 : vector<16xf32> to vector<16x1xf32>
    %cst_207 = arith.constant 3.200000e+01 : f32
    %515 = vector.broadcast %cst_207 : f32 to vector<16x1xf32>
    %516 = arith.divf %514, %515 : vector<16x1xf32>
    %517 = vector.broadcast %509 : vector<16x1xf32> to vector<16x32xf32>
    %518 = arith.subf %501, %517 : vector<16x32xf32>
    %cst_208 = arith.constant 9.99999997E-7 : f32
    %519 = vector.broadcast %cst_208 : f32 to vector<16x1xf32>
    %520 = arith.addf %516, %519 : vector<16x1xf32>
    %521 = math.rsqrt %520 : vector<16x1xf32>
    %522 = vector.broadcast %521 : vector<16x1xf32> to vector<16x32xf32>
    %523 = arith.mulf %518, %522 : vector<16x32xf32>
    %524 = vector.broadcast %503 : vector<1x32xf32> to vector<16x32xf32>
    %525 = arith.mulf %523, %524 : vector<16x32xf32>
    %526 = vector.broadcast %505 : vector<1x32xf32> to vector<16x32xf32>
    %527 = arith.addf %525, %526 : vector<16x32xf32>
    %c1_209 = arith.constant 1 : index
    %c0_210 = arith.constant 0 : index
    %c0_211 = arith.constant 0 : index
    %528 = vector.load %arg15[%c1_209, %c0_210, %c0_211] : memref<2x32x96xbf16, #tpu.memory_space<vmem>>, vector<1x32x96xbf16>
    %529 = vector.shape_cast %528 : vector<1x32x96xbf16> to vector<32x96xbf16>
    %530 = arith.truncf %527 : vector<16x32xf32> to vector<16x32xbf16>
    %cst_212 = arith.constant dense<0.000000e+00> : vector<16x96xf32>
    %531 = tpu.matmul %530, %529, %cst_212 {dimension_numbers = #tpu.dot_dimension_numbers<[1], [0], [0], [1], [0, 0, 1, 1], [], []>} : vector<16x32xbf16>, vector<32x96xbf16>, vector<16x96xf32> -> vector<16x96xf32>
    %532 = vector.extract_strided_slice %531 {offsets = [0, 0], sizes = [16, 32], strides = [1, 1]} : vector<16x96xf32> to vector<16x32xf32>
    %533 = vector.extract_strided_slice %531 {offsets = [0, 32], sizes = [16, 32], strides = [1, 1]} : vector<16x96xf32> to vector<16x32xf32>
    %534 = vector.extract_strided_slice %531 {offsets = [0, 64], sizes = [16, 32], strides = [1, 1]} : vector<16x96xf32> to vector<16x32xf32>
    %535 = vector.extract_strided_slice %532 {offsets = [0, 0], sizes = [16, 16], strides = [1, 1]} : vector<16x32xf32> to vector<16x16xf32>
    %536 = vector.shape_cast %535 : vector<16x16xf32> to vector<2x8x16xf32>
    %537 = arith.truncf %536 : vector<2x8x16xf32> to vector<2x8x16xbf16>
    %538 = vector.extract_strided_slice %533 {offsets = [0, 0], sizes = [16, 16], strides = [1, 1]} : vector<16x32xf32> to vector<16x16xf32>
    %539 = vector.shape_cast %538 : vector<16x16xf32> to vector<2x8x16xf32>
    %540 = arith.truncf %539 : vector<2x8x16xf32> to vector<2x8x16xbf16>
    %541 = vector.extract_strided_slice %534 {offsets = [0, 0], sizes = [16, 16], strides = [1, 1]} : vector<16x32xf32> to vector<16x16xf32>
    %542 = vector.shape_cast %541 : vector<16x16xf32> to vector<2x8x16xf32>
    %543 = arith.truncf %542 : vector<2x8x16xf32> to vector<2x8x16xbf16>
    "tpu.trace_start"() <{level = 10 : i32, message = "bqd,bkd->bqk"}> : () -> ()
    %cst_213 = arith.constant dense<0.000000e+00> : vector<2x8x8xf32>
    %544 = tpu.matmul %537, %540, %cst_213 {dimension_numbers = #tpu.dot_dimension_numbers<[2], [2], [1], [1], [0, 0, 0, 1, 1, 1], [0], [0]>} : vector<2x8x16xbf16>, vector<2x8x16xbf16>, vector<2x8x8xf32> -> vector<2x8x8xf32>
    "tpu.trace_stop"() : () -> ()
    %cst_214 = arith.constant 2.500000e-01 : f32
    %545 = vector.broadcast %cst_214 : f32 to vector<2x8x8xf32>
    %546 = arith.mulf %544, %545 : vector<2x8x8xf32>
    %547 = arith.addf %546, %370 : vector<2x8x8xf32>
    %cst_215 = arith.constant dense<0xFF800000> : vector<2x8xf32>
    %548 = vector.multi_reduction <maximumf>, %547, %cst_215 [2] : vector<2x8x8xf32> to vector<2x8xf32>
    %549 = vector.shape_cast %548 : vector<2x8xf32> to vector<2x8x1xf32>
    %550 = vector.broadcast %549 : vector<2x8x1xf32> to vector<2x8x8xf32>
    %551 = arith.subf %547, %550 : vector<2x8x8xf32>
    %552 = math.exp %551 : vector<2x8x8xf32>
    %cst_216 = arith.constant dense<0.000000e+00> : vector<2x8xf32>
    %553 = vector.multi_reduction <add>, %552, %cst_216 [2] : vector<2x8x8xf32> to vector<2x8xf32>
    %554 = vector.shape_cast %553 : vector<2x8xf32> to vector<2x8x1xf32>
    %555 = vector.broadcast %554 : vector<2x8x1xf32> to vector<2x8x8xf32>
    %556 = arith.divf %552, %555 : vector<2x8x8xf32>
    %557 = arith.truncf %556 : vector<2x8x8xf32> to vector<2x8x8xbf16>
    "tpu.trace_start"() <{level = 10 : i32, message = "bqk,bkd->bqd"}> : () -> ()
    %cst_217 = arith.constant dense<0.000000e+00> : vector<2x8x16xf32>
    %558 = tpu.matmul %557, %543, %cst_217 {dimension_numbers = #tpu.dot_dimension_numbers<[2], [1], [1], [2], [0, 0, 0, 1, 1, 2], [0], [0]>} : vector<2x8x8xbf16>, vector<2x8x16xbf16>, vector<2x8x16xf32> -> vector<2x8x16xf32>
    "tpu.trace_stop"() : () -> ()
    %559 = vector.shape_cast %558 : vector<2x8x16xf32> to vector<16x16xf32>
    %560 = vector.extract_strided_slice %532 {offsets = [0, 16], sizes = [16, 16], strides = [1, 1]} : vector<16x32xf32> to vector<16x16xf32>
    %561 = vector.shape_cast %560 : vector<16x16xf32> to vector<2x8x16xf32>
    %562 = arith.truncf %561 : vector<2x8x16xf32> to vector<2x8x16xbf16>
    %563 = vector.extract_strided_slice %533 {offsets = [0, 16], sizes = [16, 16], strides = [1, 1]} : vector<16x32xf32> to vector<16x16xf32>
    %564 = vector.shape_cast %563 : vector<16x16xf32> to vector<2x8x16xf32>
    %565 = arith.truncf %564 : vector<2x8x16xf32> to vector<2x8x16xbf16>
    %566 = vector.extract_strided_slice %534 {offsets = [0, 16], sizes = [16, 16], strides = [1, 1]} : vector<16x32xf32> to vector<16x16xf32>
    %567 = vector.shape_cast %566 : vector<16x16xf32> to vector<2x8x16xf32>
    %568 = arith.truncf %567 : vector<2x8x16xf32> to vector<2x8x16xbf16>
    "tpu.trace_start"() <{level = 10 : i32, message = "bqd,bkd->bqk"}> : () -> ()
    %cst_218 = arith.constant dense<0.000000e+00> : vector<2x8x8xf32>
    %569 = tpu.matmul %562, %565, %cst_218 {dimension_numbers = #tpu.dot_dimension_numbers<[2], [2], [1], [1], [0, 0, 0, 1, 1, 1], [0], [0]>} : vector<2x8x16xbf16>, vector<2x8x16xbf16>, vector<2x8x8xf32> -> vector<2x8x8xf32>
    "tpu.trace_stop"() : () -> ()
    %cst_219 = arith.constant 2.500000e-01 : f32
    %570 = vector.broadcast %cst_219 : f32 to vector<2x8x8xf32>
    %571 = arith.mulf %569, %570 : vector<2x8x8xf32>
    %572 = arith.addf %571, %370 : vector<2x8x8xf32>
    %cst_220 = arith.constant dense<0xFF800000> : vector<2x8xf32>
    %573 = vector.multi_reduction <maximumf>, %572, %cst_220 [2] : vector<2x8x8xf32> to vector<2x8xf32>
    %574 = vector.shape_cast %573 : vector<2x8xf32> to vector<2x8x1xf32>
    %575 = vector.broadcast %574 : vector<2x8x1xf32> to vector<2x8x8xf32>
    %576 = arith.subf %572, %575 : vector<2x8x8xf32>
    %577 = math.exp %576 : vector<2x8x8xf32>
    %cst_221 = arith.constant dense<0.000000e+00> : vector<2x8xf32>
    %578 = vector.multi_reduction <add>, %577, %cst_221 [2] : vector<2x8x8xf32> to vector<2x8xf32>
    %579 = vector.shape_cast %578 : vector<2x8xf32> to vector<2x8x1xf32>
    %580 = vector.broadcast %579 : vector<2x8x1xf32> to vector<2x8x8xf32>
    %581 = arith.divf %577, %580 : vector<2x8x8xf32>
    %582 = arith.truncf %581 : vector<2x8x8xf32> to vector<2x8x8xbf16>
    "tpu.trace_start"() <{level = 10 : i32, message = "bqk,bkd->bqd"}> : () -> ()
    %cst_222 = arith.constant dense<0.000000e+00> : vector<2x8x16xf32>
    %583 = tpu.matmul %582, %568, %cst_222 {dimension_numbers = #tpu.dot_dimension_numbers<[2], [1], [1], [2], [0, 0, 0, 1, 1, 2], [0], [0]>} : vector<2x8x8xbf16>, vector<2x8x16xbf16>, vector<2x8x16xf32> -> vector<2x8x16xf32>
    "tpu.trace_stop"() : () -> ()
    %584 = vector.shape_cast %583 : vector<2x8x16xf32> to vector<16x16xf32>
    %585 = tpu.concatenate %559, %584 in 1 : vector<16x16xf32>, vector<16x16xf32> -> vector<16x32xf32>
    %c1_223 = arith.constant 1 : index
    %c0_224 = arith.constant 0 : index
    %c0_225 = arith.constant 0 : index
    %586 = vector.load %arg16[%c1_223, %c0_224, %c0_225] : memref<2x32x32xbf16, #tpu.memory_space<vmem>>, vector<1x32x32xbf16>
    %587 = vector.shape_cast %586 : vector<1x32x32xbf16> to vector<32x32xbf16>
    %588 = arith.truncf %585 : vector<16x32xf32> to vector<16x32xbf16>
    %cst_226 = arith.constant dense<0.000000e+00> : vector<16x32xf32>
    %589 = tpu.matmul %588, %587, %cst_226 {dimension_numbers = #tpu.dot_dimension_numbers<[1], [0], [0], [1], [0, 0, 1, 1], [], []>} : vector<16x32xbf16>, vector<32x32xbf16>, vector<16x32xf32> -> vector<16x32xf32>
    %590 = arith.addf %589, %527 : vector<16x32xf32>
    %c1_227 = arith.constant 1 : index
    %c0_228 = arith.constant 0 : index
    %c0_229 = arith.constant 0 : index
    %591 = vector.load %arg17[%c1_227, %c0_228, %c0_229] : memref<2x1x32xf32, #tpu.memory_space<vmem>>, vector<1x1x32xf32>
    %592 = vector.shape_cast %591 : vector<1x1x32xf32> to vector<1x32xf32>
    %c1_230 = arith.constant 1 : index
    %c0_231 = arith.constant 0 : index
    %c0_232 = arith.constant 0 : index
    %593 = vector.load %arg18[%c1_230, %c0_231, %c0_232] : memref<2x1x32xf32, #tpu.memory_space<vmem>>, vector<1x1x32xf32>
    %594 = vector.shape_cast %593 : vector<1x1x32xf32> to vector<1x32xf32>
    %cst_233 = arith.constant dense<0.000000e+00> : vector<16xf32>
    %595 = vector.multi_reduction <add>, %590, %cst_233 [1] : vector<16x32xf32> to vector<16xf32>
    %596 = vector.shape_cast %595 : vector<16xf32> to vector<16x1xf32>
    %cst_234 = arith.constant 3.200000e+01 : f32
    %597 = vector.broadcast %cst_234 : f32 to vector<16x1xf32>
    %598 = arith.divf %596, %597 : vector<16x1xf32>
    %599 = vector.broadcast %598 : vector<16x1xf32> to vector<16x32xf32>
    %600 = arith.subf %590, %599 : vector<16x32xf32>
    %601 = arith.mulf %600, %600 : vector<16x32xf32>
    %cst_235 = arith.constant dense<0.000000e+00> : vector<16xf32>
    %602 = vector.multi_reduction <add>, %601, %cst_235 [1] : vector<16x32xf32> to vector<16xf32>
    %603 = vector.shape_cast %602 : vector<16xf32> to vector<16x1xf32>
    %cst_236 = arith.constant 3.200000e+01 : f32
    %604 = vector.broadcast %cst_236 : f32 to vector<16x1xf32>
    %605 = arith.divf %603, %604 : vector<16x1xf32>
    %606 = vector.broadcast %598 : vector<16x1xf32> to vector<16x32xf32>
    %607 = arith.subf %590, %606 : vector<16x32xf32>
    %cst_237 = arith.constant 9.99999997E-7 : f32
    %608 = vector.broadcast %cst_237 : f32 to vector<16x1xf32>
    %609 = arith.addf %605, %608 : vector<16x1xf32>
    %610 = math.rsqrt %609 : vector<16x1xf32>
    %611 = vector.broadcast %610 : vector<16x1xf32> to vector<16x32xf32>
    %612 = arith.mulf %607, %611 : vector<16x32xf32>
    %613 = vector.broadcast %592 : vector<1x32xf32> to vector<16x32xf32>
    %614 = arith.mulf %612, %613 : vector<16x32xf32>
    %615 = vector.broadcast %594 : vector<1x32xf32> to vector<16x32xf32>
    %616 = arith.addf %614, %615 : vector<16x32xf32>
    %c1_238 = arith.constant 1 : index
    %c0_239 = arith.constant 0 : index
    %c0_240 = arith.constant 0 : index
    %617 = vector.load %arg19[%c1_238, %c0_239, %c0_240] : memref<2x32x64xbf16, #tpu.memory_space<vmem>>, vector<1x32x64xbf16>
    %618 = vector.shape_cast %617 : vector<1x32x64xbf16> to vector<32x64xbf16>
    %619 = arith.truncf %616 : vector<16x32xf32> to vector<16x32xbf16>
    %cst_241 = arith.constant dense<0.000000e+00> : vector<16x64xf32>
    %620 = tpu.matmul %619, %618, %cst_241 {dimension_numbers = #tpu.dot_dimension_numbers<[1], [0], [0], [1], [0, 0, 1, 1], [], []>} : vector<16x32xbf16>, vector<32x64xbf16>, vector<16x64xf32> -> vector<16x64xf32>
    %c1_242 = arith.constant 1 : index
    %c0_243 = arith.constant 0 : index
    %c0_244 = arith.constant 0 : index
    %621 = vector.load %arg20[%c1_242, %c0_243, %c0_244] : memref<2x1x64xf32, #tpu.memory_space<vmem>>, vector<1x1x64xf32>
    %622 = vector.shape_cast %621 : vector<1x1x64xf32> to vector<1x64xf32>
    %623 = vector.broadcast %622 : vector<1x64xf32> to vector<16x64xf32>
    %624 = arith.addf %620, %623 : vector<16x64xf32>
    %cst_245 = arith.constant 0.000000e+00 : f32
    %625 = vector.broadcast %cst_245 : f32 to vector<16x64xf32>
    %626 = arith.maximumf %624, %625 : vector<16x64xf32>
    %c1_246 = arith.constant 1 : index
    %c0_247 = arith.constant 0 : index
    %c0_248 = arith.constant 0 : index
    %627 = vector.load %arg21[%c1_246, %c0_247, %c0_248] : memref<2x64x32xbf16, #tpu.memory_space<vmem>>, vector<1x64x32xbf16>
    %628 = vector.shape_cast %627 : vector<1x64x32xbf16> to vector<64x32xbf16>
    %629 = arith.truncf %626 : vector<16x64xf32> to vector<16x64xbf16>
    %cst_249 = arith.constant dense<0.000000e+00> : vector<16x32xf32>
    %630 = tpu.matmul %629, %628, %cst_249 {dimension_numbers = #tpu.dot_dimension_numbers<[1], [0], [0], [1], [0, 0, 1, 1], [], []>} : vector<16x64xbf16>, vector<64x32xbf16>, vector<16x32xf32> -> vector<16x32xf32>
    %c1_250 = arith.constant 1 : index
    %c0_251 = arith.constant 0 : index
    %c0_252 = arith.constant 0 : index
    %631 = vector.load %arg22[%c1_250, %c0_251, %c0_252] : memref<2x1x32xf32, #tpu.memory_space<vmem>>, vector<1x1x32xf32>
    %632 = vector.shape_cast %631 : vector<1x1x32xf32> to vector<1x32xf32>
    %633 = vector.broadcast %632 : vector<1x32xf32> to vector<16x32xf32>
    %634 = arith.addf %630, %633 : vector<16x32xf32>
    %635 = arith.addf %634, %616 : vector<16x32xf32>
    %c1_253 = arith.constant 1 : index
    %c0_254 = arith.constant 0 : index
    %c0_255 = arith.constant 0 : index
    %636 = vector.load %arg23[%c1_253, %c0_254, %c0_255] : memref<2x1x32xf32, #tpu.memory_space<vmem>>, vector<1x1x32xf32>
    %637 = vector.shape_cast %636 : vector<1x1x32xf32> to vector<1x32xf32>
    %c1_256 = arith.constant 1 : index
    %c0_257 = arith.constant 0 : index
    %c0_258 = arith.constant 0 : index
    %638 = vector.load %arg24[%c1_256, %c0_257, %c0_258] : memref<2x1x32xf32, #tpu.memory_space<vmem>>, vector<1x1x32xf32>
    %639 = vector.shape_cast %638 : vector<1x1x32xf32> to vector<1x32xf32>
    %cst_259 = arith.constant dense<0.000000e+00> : vector<16xf32>
    %640 = vector.multi_reduction <add>, %635, %cst_259 [1] : vector<16x32xf32> to vector<16xf32>
    %641 = vector.shape_cast %640 : vector<16xf32> to vector<16x1xf32>
    %cst_260 = arith.constant 3.200000e+01 : f32
    %642 = vector.broadcast %cst_260 : f32 to vector<16x1xf32>
    %643 = arith.divf %641, %642 : vector<16x1xf32>
    %644 = vector.broadcast %643 : vector<16x1xf32> to vector<16x32xf32>
    %645 = arith.subf %635, %644 : vector<16x32xf32>
    %646 = arith.mulf %645, %645 : vector<16x32xf32>
    %cst_261 = arith.constant dense<0.000000e+00> : vector<16xf32>
    %647 = vector.multi_reduction <add>, %646, %cst_261 [1] : vector<16x32xf32> to vector<16xf32>
    %648 = vector.shape_cast %647 : vector<16xf32> to vector<16x1xf32>
    %cst_262 = arith.constant 3.200000e+01 : f32
    %649 = vector.broadcast %cst_262 : f32 to vector<16x1xf32>
    %650 = arith.divf %648, %649 : vector<16x1xf32>
    %651 = vector.broadcast %643 : vector<16x1xf32> to vector<16x32xf32>
    %652 = arith.subf %635, %651 : vector<16x32xf32>
    %cst_263 = arith.constant 9.99999997E-7 : f32
    %653 = vector.broadcast %cst_263 : f32 to vector<16x1xf32>
    %654 = arith.addf %650, %653 : vector<16x1xf32>
    %655 = math.rsqrt %654 : vector<16x1xf32>
    %656 = vector.broadcast %655 : vector<16x1xf32> to vector<16x32xf32>
    %657 = arith.mulf %652, %656 : vector<16x32xf32>
    %658 = vector.broadcast %637 : vector<1x32xf32> to vector<16x32xf32>
    %659 = arith.mulf %657, %658 : vector<16x32xf32>
    %660 = vector.broadcast %639 : vector<1x32xf32> to vector<16x32xf32>
    %661 = arith.addf %659, %660 : vector<16x32xf32>
    %c0_264 = arith.constant 0 : index
    %c0_265 = arith.constant 0 : index
    %662 = vector.load %arg14[%c0_264, %c0_265] : memref<32x128xbf16, #tpu.memory_space<vmem>>, vector<32x128xbf16>
    %663 = arith.truncf %661 : vector<16x32xf32> to vector<16x32xbf16>
    %cst_266 = arith.constant dense<0.000000e+00> : vector<16x128xf32>
    %664 = tpu.matmul %663, %662, %cst_266 {dimension_numbers = #tpu.dot_dimension_numbers<[1], [0], [0], [1], [0, 0, 1, 1], [], []>} : vector<16x32xbf16>, vector<32x128xbf16>, vector<16x128xf32> -> vector<16x128xf32>
    %665 = tpu.iota {dimensions = array<i32: 1>} : vector<16x128xi32>
    %c12_i32 = arith.constant 12 : i32
    %666 = vector.broadcast %c12_i32 : i32 to vector<16x128xi32>
    %667 = arith.cmpi slt, %665, %666 : vector<16x128xi32>
    %cst_267 = arith.constant -1.000000e+09 : f32
    %668 = vector.broadcast %cst_267 : f32 to vector<16x128xf32>
    %669 = arith.select %667, %664, %668 : vector<16x128xi1>, vector<16x128xf32>
    %c0_268 = arith.constant 0 : index
    %c0_269 = arith.constant 0 : index
    %670 = vector.load %arg5[%c0_268, %c0_269] : memref<16x1xi32, #tpu.memory_space<vmem>>, vector<16x1xi32>
    %c0_270 = arith.constant 0 : index
    %c0_271 = arith.constant 0 : index
    %671 = vector.load %arg6[%c0_270, %c0_271] : memref<16x1xf32, #tpu.memory_space<vmem>>, vector<16x1xf32>
    %cst_272 = arith.constant dense<0xFF800000> : vector<16xf32>
    %672 = vector.multi_reduction <maximumf>, %669, %cst_272 [1] : vector<16x128xf32> to vector<16xf32>
    %673 = vector.shape_cast %672 : vector<16xf32> to vector<16x1xf32>
    %674 = vector.broadcast %673 : vector<16x1xf32> to vector<16x128xf32>
    %675 = arith.subf %669, %674 : vector<16x128xf32>
    %676 = math.exp %675 : vector<16x128xf32>
    %cst_273 = arith.constant dense<0.000000e+00> : vector<16xf32>
    %677 = vector.multi_reduction <add>, %676, %cst_273 [1] : vector<16x128xf32> to vector<16xf32>
    %678 = vector.shape_cast %677 : vector<16xf32> to vector<16x1xf32>
    %679 = math.log %678 : vector<16x1xf32>
    %680 = arith.addf %673, %679 : vector<16x1xf32>
    %681 = vector.broadcast %670 : vector<16x1xi32> to vector<16x128xi32>
    %682 = arith.cmpi eq, %665, %681 : vector<16x128xi32>
    %cst_274 = arith.constant 0.000000e+00 : f32
    %683 = vector.broadcast %cst_274 : f32 to vector<16x128xf32>
    %684 = arith.select %682, %669, %683 : vector<16x128xi1>, vector<16x128xf32>
    %cst_275 = arith.constant dense<0.000000e+00> : vector<16xf32>
    %685 = vector.multi_reduction <add>, %684, %cst_275 [1] : vector<16x128xf32> to vector<16xf32>
    %686 = vector.shape_cast %685 : vector<16xf32> to vector<16x1xf32>
    %687 = arith.subf %680, %686 : vector<16x1xf32>
    %688 = vector.broadcast %673 : vector<16x1xf32> to vector<16x128xf32>
    %689 = arith.cmpf oge, %669, %688 : vector<16x128xf32>
    %c128_i32 = arith.constant 128 : i32
    %690 = vector.broadcast %c128_i32 : i32 to vector<16x128xi32>
    %691 = arith.select %689, %665, %690 : vector<16x128xi1>, vector<16x128xi32>
    %cst_276 = arith.constant dense<2147483647> : vector<16xi32>
    %692 = vector.multi_reduction <minsi>, %691, %cst_276 [1] : vector<16x128xi32> to vector<16xi32>
    %693 = vector.shape_cast %692 : vector<16xi32> to vector<16x1xi32>
    %cst_277 = arith.constant dense<0.000000e+00> : vector<1xf32>
    %694 = vector.multi_reduction <add>, %671, %cst_277 [0] : vector<16x1xf32> to vector<1xf32>
    %695 = vector.shape_cast %694 : vector<1xf32> to vector<1x1xf32>
    %696 = arith.mulf %687, %671 : vector<16x1xf32>
    %cst_278 = arith.constant dense<0.000000e+00> : vector<1xf32>
    %697 = vector.multi_reduction <add>, %696, %cst_278 [0] : vector<16x1xf32> to vector<1xf32>
    %698 = vector.shape_cast %697 : vector<1xf32> to vector<1x1xf32>
    %699 = arith.divf %698, %695 : vector<1x1xf32>
    %700 = arith.cmpi eq, %693, %670 : vector<16x1xi32>
    %701 = arith.extui %700 : vector<16x1xi1> to vector<16x1xi32>
    %702 = arith.sitofp %701 : vector<16x1xi32> to vector<16x1xf32>
    %703 = arith.mulf %702, %671 : vector<16x1xf32>
    %cst_279 = arith.constant dense<0.000000e+00> : vector<1xf32>
    %704 = vector.multi_reduction <add>, %703, %cst_279 [0] : vector<16x1xf32> to vector<1xf32>
    %705 = vector.shape_cast %704 : vector<1xf32> to vector<1x1xf32>
    %706 = arith.divf %705, %695 : vector<1x1xf32>
    %cst_280 = arith.constant 1.000000e+00 : f32
    %707 = vector.broadcast %cst_280 : f32 to vector<2x16xf32>
    %708 = arith.addf %707, %321 : vector<2x16xf32>
    %709 = arith.mulf %318, %318 : vector<2x16xf32>
    %710 = arith.subf %708, %709 : vector<2x16xf32>
    %711 = math.exp %321 : vector<2x16xf32>
    %712 = arith.subf %710, %711 : vector<2x16xf32>
    %cst_281 = arith.constant dense<0.000000e+00> : vector<2xf32>
    %713 = vector.multi_reduction <add>, %712, %cst_281 [1] : vector<2x16xf32> to vector<2xf32>
    %714 = vector.shape_cast %713 : vector<2xf32> to vector<2x1xf32>
    %cst_282 = arith.constant -5.000000e-01 : f32
    %715 = vector.broadcast %cst_282 : f32 to vector<2x1xf32>
    %716 = arith.mulf %715, %714 : vector<2x1xf32>
    %cst_283 = arith.constant dense<0.000000e+00> : vector<1xf32>
    %717 = vector.multi_reduction <add>, %716, %cst_283 [0] : vector<2x1xf32> to vector<1xf32>
    %718 = vector.shape_cast %717 : vector<1xf32> to vector<1x1xf32>
    %cst_284 = arith.constant 2.000000e+00 : f32
    %719 = vector.broadcast %cst_284 : f32 to vector<1x1xf32>
    %720 = arith.divf %718, %719 : vector<1x1xf32>
    %cst_285 = arith.constant 1.000000e-03 : f32
    %721 = vector.broadcast %cst_285 : f32 to vector<1x1xf32>
    %722 = arith.mulf %720, %721 : vector<1x1xf32>
    %723 = arith.addf %699, %722 : vector<1x1xf32>
    %c0_286 = arith.constant 0 : index
    %c0_287 = arith.constant 0 : index
    %724 = vector.load %arg25[%c0_286, %c0_287] : memref<1x1xf32, #tpu.memory_space<vmem>>, vector<1x1xf32>
    tpu.vector_store %arg25[%c0_286, %c0_287], %723 {strides = array<i32>} : memref<1x1xf32, #tpu.memory_space<vmem>>, vector<1x1xf32>,
    %c0_288 = arith.constant 0 : index
    %c0_289 = arith.constant 0 : index
    %725 = vector.load %arg26[%c0_288, %c0_289] : memref<1x1xf32, #tpu.memory_space<vmem>>, vector<1x1xf32>
    tpu.vector_store %arg26[%c0_288, %c0_289], %699 {strides = array<i32>} : memref<1x1xf32, #tpu.memory_space<vmem>>, vector<1x1xf32>,
    %c0_290 = arith.constant 0 : index
    %c0_291 = arith.constant 0 : index
    %726 = vector.load %arg27[%c0_290, %c0_291] : memref<1x1xf32, #tpu.memory_space<vmem>>, vector<1x1xf32>
    tpu.vector_store %arg27[%c0_290, %c0_291], %720 {strides = array<i32>} : memref<1x1xf32, #tpu.memory_space<vmem>>, vector<1x1xf32>,
    %c0_292 = arith.constant 0 : index
    %c0_293 = arith.constant 0 : index
    %727 = vector.load %arg28[%c0_292, %c0_293] : memref<1x1xf32, #tpu.memory_space<vmem>>, vector<1x1xf32>
    tpu.vector_store %arg28[%c0_292, %c0_293], %706 {strides = array<i32>} : memref<1x1xf32, #tpu.memory_space<vmem>>, vector<1x1xf32>,
    return
  }
  func.func @transform_0(%arg0: i32, %arg1: memref<2xi32, #tpu.memory_space<smem>>) -> (i32, i32) {
    %c0_i32 = arith.constant 0 : i32
    %c0_i32_0 = arith.constant 0 : i32
    %c0_i32_1 = arith.constant 0 : i32
    return %c0_i32, %c0_i32_0 : i32, i32
  }
  func.func @transform_1(%arg0: i32, %arg1: memref<2xi32, #tpu.memory_space<smem>>) -> (i32, i32) {
    %c0_i32 = arith.constant 0 : i32
    %c0_i32_0 = arith.constant 0 : i32
    %c0_i32_1 = arith.constant 0 : i32
    return %c0_i32, %c0_i32_0 : i32, i32
  }
  func.func @transform_2(%arg0: i32, %arg1: memref<2xi32, #tpu.memory_space<smem>>) -> (i32, i32) {
    %c0_i32 = arith.constant 0 : i32
    %c0_i32_0 = arith.constant 0 : i32
    %c0_i32_1 = arith.constant 0 : i32
    return %c0_i32, %c0_i32_0 : i32, i32
  }
  func.func @transform_3(%arg0: i32, %arg1: memref<2xi32, #tpu.memory_space<smem>>) -> (i32, i32) {
    %c0_i32 = arith.constant 0 : i32
    %c0_i32_0 = arith.constant 0 : i32
    %c0_i32_1 = arith.constant 0 : i32
    return %c0_i32, %c0_i32_0 : i32, i32
  }
  func.func @transform_4(%arg0: i32, %arg1: memref<2xi32, #tpu.memory_space<smem>>) -> (i32, i32) {
    %c0_i32 = arith.constant 0 : i32
    %c0_i32_0 = arith.constant 0 : i32
    %c0_i32_1 = arith.constant 0 : i32
    return %c0_i32, %c0_i32_0 : i32, i32
  }
  func.func @transform_5(%arg0: i32, %arg1: memref<2xi32, #tpu.memory_space<smem>>) -> (i32, i32) {
    %c0_i32 = arith.constant 0 : i32
    %c0_i32_0 = arith.constant 0 : i32
    %c0_i32_1 = arith.constant 0 : i32
    return %c0_i32, %c0_i32_0 : i32, i32
  }
  func.func @transform_6(%arg0: i32, %arg1: memref<2xi32, #tpu.memory_space<smem>>) -> (i32, i32) {
    %c0_i32 = arith.constant 0 : i32
    %c0_i32_0 = arith.constant 0 : i32
    %c0_i32_1 = arith.constant 0 : i32
    return %c0_i32, %c0_i32_0 : i32, i32
  }
  func.func @transform_7(%arg0: i32, %arg1: memref<2xi32, #tpu.memory_space<smem>>) -> (i32, i32) {
    %c0_i32 = arith.constant 0 : i32
    %c0_i32_0 = arith.constant 0 : i32
    %c0_i32_1 = arith.constant 0 : i32
    return %c0_i32, %c0_i32_0 : i32, i32
  }
  func.func @transform_8(%arg0: i32, %arg1: memref<2xi32, #tpu.memory_space<smem>>) -> (i32, i32) {
    %c0_i32 = arith.constant 0 : i32
    %c0_i32_0 = arith.constant 0 : i32
    %c0_i32_1 = arith.constant 0 : i32
    return %c0_i32, %c0_i32_0 : i32, i32
  }
  func.func @transform_9(%arg0: i32, %arg1: memref<2xi32, #tpu.memory_space<smem>>) -> (i32, i32) {
    %c0_i32 = arith.constant 0 : i32
    %c0_i32_0 = arith.constant 0 : i32
    %c0_i32_1 = arith.constant 0 : i32
    return %c0_i32, %c0_i32_0 : i32, i32
  }
  func.func @transform_10(%arg0: i32, %arg1: memref<2xi32, #tpu.memory_space<smem>>) -> (i32, i32) {
    %c0_i32 = arith.constant 0 : i32
    %c0_i32_0 = arith.constant 0 : i32
    %c0_i32_1 = arith.constant 0 : i32
    return %c0_i32, %c0_i32_0 : i32, i32
  }
  func.func @transform_11(%arg0: i32, %arg1: memref<2xi32, #tpu.memory_space<smem>>) -> (i32, i32) {
    %c0_i32 = arith.constant 0 : i32
    %c0_i32_0 = arith.constant 0 : i32
    %c0_i32_1 = arith.constant 0 : i32
    return %c0_i32, %c0_i32_0 : i32, i32
  }
  func.func @transform_12(%arg0: i32, %arg1: memref<2xi32, #tpu.memory_space<smem>>) -> (i32, i32) {
    %c0_i32 = arith.constant 0 : i32
    %c0_i32_0 = arith.constant 0 : i32
    %c0_i32_1 = arith.constant 0 : i32
    return %c0_i32, %c0_i32_0 : i32, i32
  }
  func.func @transform_13(%arg0: i32, %arg1: memref<2xi32, #tpu.memory_space<smem>>) -> (i32, i32, i32) {
    %c0_i32 = arith.constant 0 : i32
    %c0_i32_0 = arith.constant 0 : i32
    %c0_i32_1 = arith.constant 0 : i32
    %c0_i32_2 = arith.constant 0 : i32
    return %c0_i32, %c0_i32_0, %c0_i32_1 : i32, i32, i32
  }
  func.func @transform_14(%arg0: i32, %arg1: memref<2xi32, #tpu.memory_space<smem>>) -> (i32, i32, i32) {
    %c0_i32 = arith.constant 0 : i32
    %c0_i32_0 = arith.constant 0 : i32
    %c0_i32_1 = arith.constant 0 : i32
    %c0_i32_2 = arith.constant 0 : i32
    return %c0_i32, %c0_i32_0, %c0_i32_1 : i32, i32, i32
  }
  func.func @transform_15(%arg0: i32, %arg1: memref<2xi32, #tpu.memory_space<smem>>) -> (i32, i32, i32) {
    %c0_i32 = arith.constant 0 : i32
    %c0_i32_0 = arith.constant 0 : i32
    %c0_i32_1 = arith.constant 0 : i32
    %c0_i32_2 = arith.constant 0 : i32
    return %c0_i32, %c0_i32_0, %c0_i32_1 : i32, i32, i32
  }
  func.func @transform_16(%arg0: i32, %arg1: memref<2xi32, #tpu.memory_space<smem>>) -> (i32, i32, i32) {
    %c0_i32 = arith.constant 0 : i32
    %c0_i32_0 = arith.constant 0 : i32
    %c0_i32_1 = arith.constant 0 : i32
    %c0_i32_2 = arith.constant 0 : i32
    return %c0_i32, %c0_i32_0, %c0_i32_1 : i32, i32, i32
  }
  func.func @transform_17(%arg0: i32, %arg1: memref<2xi32, #tpu.memory_space<smem>>) -> (i32, i32, i32) {
    %c0_i32 = arith.constant 0 : i32
    %c0_i32_0 = arith.constant 0 : i32
    %c0_i32_1 = arith.constant 0 : i32
    %c0_i32_2 = arith.constant 0 : i32
    return %c0_i32, %c0_i32_0, %c0_i32_1 : i32, i32, i32
  }
  func.func @transform_18(%arg0: i32, %arg1: memref<2xi32, #tpu.memory_space<smem>>) -> (i32, i32, i32) {
    %c0_i32 = arith.constant 0 : i32
    %c0_i32_0 = arith.constant 0 : i32
    %c0_i32_1 = arith.constant 0 : i32
    %c0_i32_2 = arith.constant 0 : i32
    return %c0_i32, %c0_i32_0, %c0_i32_1 : i32, i32, i32
  }
  func.func @transform_19(%arg0: i32, %arg1: memref<2xi32, #tpu.memory_space<smem>>) -> (i32, i32, i32) {
    %c0_i32 = arith.constant 0 : i32
    %c0_i32_0 = arith.constant 0 : i32
    %c0_i32_1 = arith.constant 0 : i32
    %c0_i32_2 = arith.constant 0 : i32
    return %c0_i32, %c0_i32_0, %c0_i32_1 : i32, i32, i32
  }
  func.func @transform_20(%arg0: i32, %arg1: memref<2xi32, #tpu.memory_space<smem>>) -> (i32, i32, i32) {
    %c0_i32 = arith.constant 0 : i32
    %c0_i32_0 = arith.constant 0 : i32
    %c0_i32_1 = arith.constant 0 : i32
    %c0_i32_2 = arith.constant 0 : i32
    return %c0_i32, %c0_i32_0, %c0_i32_1 : i32, i32, i32
  }
  func.func @transform_21(%arg0: i32, %arg1: memref<2xi32, #tpu.memory_space<smem>>) -> (i32, i32, i32) {
    %c0_i32 = arith.constant 0 : i32
    %c0_i32_0 = arith.constant 0 : i32
    %c0_i32_1 = arith.constant 0 : i32
    %c0_i32_2 = arith.constant 0 : i32
    return %c0_i32, %c0_i32_0, %c0_i32_1 : i32, i32, i32
  }
  func.func @transform_22(%arg0: i32, %arg1: memref<2xi32, #tpu.memory_space<smem>>) -> (i32, i32, i32) {
    %c0_i32 = arith.constant 0 : i32
    %c0_i32_0 = arith.constant 0 : i32
    %c0_i32_1 = arith.constant 0 : i32
    %c0_i32_2 = arith.constant 0 : i32
    return %c0_i32, %c0_i32_0, %c0_i32_1 : i32, i32, i32
  }
  func.func @transform_23(%arg0: i32, %arg1: memref<2xi32, #tpu.memory_space<smem>>) -> (i32, i32) {
    %c0_i32 = arith.constant 0 : i32
    %c0_i32_0 = arith.constant 0 : i32
    %c0_i32_1 = arith.constant 0 : i32
    return %c0_i32, %c0_i32_0 : i32, i32
  }
  func.func @transform_24(%arg0: i32, %arg1: memref<2xi32, #tpu.memory_space<smem>>) -> (i32, i32) {
    %c0_i32 = arith.constant 0 : i32
    %c0_i32_0 = arith.constant 0 : i32
    %c0_i32_1 = arith.constant 0 : i32
    return %c0_i32, %c0_i32_0 : i32, i32
  }
  func.func @transform_25(%arg0: i32, %arg1: memref<2xi32, #tpu.memory_space<smem>>) -> (i32, i32) {
    %c0_i32 = arith.constant 0 : i32
    %c0_i32_0 = arith.constant 0 : i32
    %c0_i32_1 = arith.constant 0 : i32
    return %c0_i32, %c0_i32_0 : i32, i32
  }
  func.func @transform_26(%arg0: i32, %arg1: memref<2xi32, #tpu.memory_space<smem>>) -> (i32, i32) {
    %c0_i32 = arith.constant 0 : i32
    %c0_i32_0 = arith.constant 0 : i32
    %c0_i32_1 = arith.constant 0 : i32
    return %c0_i32, %c0_i32_0 : i32, i32
  }
}

</mosaic_0001>

<llo_original>
// kernel: seq_share_vae_loss.1
$region0: #{seq_share_vae_loss.1}
  #allocation0 [shape = 'u32[]', space=smem, size = 0x4, offset = 0x4, fixed_abs, tag = 'smem constant byte address 0x4 - core index']
  #allocation1 [shape = 'u32[144,128]{1,0:T(1,128)}', space=vmem, size = 0x12000, scoped, tag = 'internal scratch']
  #allocation2 [shape = 'f32[16,32]{1,0:T(8,128)}', space=vmem, size = 0x2000, scoped, tag = 'scratch operand']
  #allocation3 [shape = 's32[1]{0}', space=sflag, size = 0x4, scoped, tag = 'scoped memory for seq_share_vae_loss.1']
  #allocation4 [shape = 'u8[512]{0}', space=smem, size = 0x200, scoped, tag = 'prefetched SMEM operand 0']
  %s0 = inlined_call_operand.vmem [shape: s32[2], index: 0, kind: input, shape index: {}]
  %s1 = inlined_call_operand.vmem [shape: f32[16,32], index: 1, kind: input, shape index: {}]
  %s2 = inlined_call_operand.vmem [shape: f32[2,8], index: 2, kind: input, shape index: {}]
  %s3 = inlined_call_operand.vmem [shape: f32[2,8], index: 3, kind: input, shape index: {}]
  %s4 = inlined_call_operand.vmem [shape: s32[16,1], index: 4, kind: input, shape index: {}]
  %s5 = inlined_call_operand.vmem [shape: f32[16,1], index: 5, kind: input, shape index: {}]
  %s6 = inlined_call_operand.vmem [shape: f32[2,16], index: 6, kind: input, shape index: {}]
  %s7 = inlined_call_operand.vmem [shape: f32[1,32], index: 7, kind: input, shape index: {}]
  %s8 = inlined_call_operand.vmem [shape: f32[1,32], index: 8, kind: input, shape index: {}]
  %s9 = inlined_call_operand.vmem [shape: bf16[32,16], index: 9, kind: input, shape index: {}]
  %s10 = inlined_call_operand.vmem [shape: bf16[32,16], index: 10, kind: input, shape index: {}]
  %s11 = inlined_call_operand.vmem [shape: bf16[16,32], index: 11, kind: input, shape index: {}]
  %s12 = inlined_call_operand.vmem [shape: f32[1,32], index: 12, kind: input, shape index: {}]
  %s13 = inlined_call_operand.vmem [shape: bf16[32,128], index: 13, kind: input, shape index: {}]
  %s14 = inlined_call_operand.vmem [shape: bf16[2,32,96], index: 14, kind: input, shape index: {}]
  %s15 = inlined_call_operand.vmem [shape: bf16[2,32,32], index: 15, kind: input, shape index: {}]
  %s16 = inlined_call_operand.vmem [shape: f32[2,1,32], index: 16, kind: input, shape index: {}]
  %s17 = inlined_call_operand.vmem [shape: f32[2,1,32], index: 17, kind: input, shape index: {}]
  %s18 = inlined_call_operand.vmem [shape: bf16[2,32,64], index: 18, kind: input, shape index: {}]
  %s19 = inlined_call_operand.vmem [shape: f32[2,1,64], index: 19, kind: input, shape index: {}]
  %s20 = inlined_call_operand.vmem [shape: bf16[2,64,32], index: 20, kind: input, shape index: {}]
  %s21 = inlined_call_operand.vmem [shape: f32[2,1,32], index: 21, kind: input, shape index: {}]
  %s22 = inlined_call_operand.vmem [shape: f32[2,1,32], index: 22, kind: input, shape index: {}]
  %s23 = inlined_call_operand.vmem [shape: f32[2,1,32], index: 23, kind: input, shape index: {}]
  %s24 = inlined_call_operand.hbm [shape: f32[1,1], index: 24, kind: output, shape index: {0}]
  %s25 = inlined_call_operand.hbm [shape: f32[1,1], index: 25, kind: output, shape index: {1}]
  %s26 = inlined_call_operand.hbm [shape: f32[1,1], index: 26, kind: output, shape index: {2}]
  %s27 = inlined_call_operand.hbm [shape: f32[1,1], index: 27, kind: output, shape index: {3}]
  %28 = xla_tuple %s24, %s25, %s26, %s27
  %s29 = sld [smem:[#allocation0]]
  $region126: #{seq_share_vae_loss.1} parent=0
    _
  %s31 = ssub.s32 1, %s29
  %s32 = scalar_select 0, %s31, %s29
  %s33 = sshll.u32 %s0, 4
  %s34 = int_to_ptr.vmem [resolvable:$true] %s33
  %36 = dma.vmem_to_smem %s34, 16, [#allocation4], [#allocation3]
  %37 = dma.done [#allocation3], 16
  %38 = sfence
  $region1: #{seq_share_vae_loss.1} parent=0
    #allocation5 [shape = 'u8[512]{0}', space=vmem, size = 0x400, scoped, tag = 'output window, operand 0, single buffered']
    #allocation6 [shape = 's32[1]{0}', space=sflag, size = 0x4, scoped, tag = 'scoped memory for seq_share_vae_loss.1']
    #allocation7 [shape = 'u8[512]{0}', space=vmem, size = 0x400, scoped, tag = 'output window, operand 1, single buffered']
    #allocation8 [shape = 's32[1]{0}', space=sflag, size = 0x4, scoped, tag = 'scoped memory for seq_share_vae_loss.1']
    #allocation9 [shape = 'u8[512]{0}', space=vmem, size = 0x400, scoped, tag = 'output window, operand 2, single buffered']
    #allocation10 [shape = 'u8[512]{0}', space=vmem, size = 0x400, scoped, tag = 'output window, operand 3, single buffered']
    #allocation11 [shape = 's32[1]{0}', space=sflag, size = 0x4, scoped, tag = 'scoped memory for seq_share_vae_loss.1']
    %39 = vsyncpa [#allocation6], 0
    %40 = vsyncpa [#allocation8], 0
    %41 = vsyncpa [#allocation11], 0
    // Predicated region
    $region2: #{seq_share_vae_loss.1} parent=1 // pred_check
      _
    $region3: #{seq_share_vae_loss.1} parent=1 // pred_check_branch
      %43 = sbr.rel (0) target = $region5
    $region4: #{seq_share_vae_loss.1} parent=1 // pred_region
      _
    $region5: #{seq_share_vae_loss.1} parent=1 // pred_fallthru
      _
    // Predicated region
    $region6: #{seq_share_vae_loss.1} parent=1 // pred_check
      _
    $region7: #{seq_share_vae_loss.1} parent=1 // pred_check_branch
      %45 = sbr.rel (0) target = $region9
    $region8: #{seq_share_vae_loss.1} parent=1 // pred_region
      _
    $region9: #{seq_share_vae_loss.1} parent=1 // pred_fallthru
      _
    // Predicated region
    $region10: #{seq_share_vae_loss.1} parent=1 // pred_check
      _
    $region11: #{seq_share_vae_loss.1} parent=1 // pred_check_branch
      %47 = sbr.rel (0) target = $region13
    $region12: #{seq_share_vae_loss.1} parent=1 // pred_region
      _
    $region13: #{seq_share_vae_loss.1} parent=1 // pred_fallthru
      _
    // Predicated region
    $region14: #{seq_share_vae_loss.1} parent=1 // pred_check
      _
    $region15: #{seq_share_vae_loss.1} parent=1 // pred_check_branch
      %49 = sbr.rel (0) target = $region17
    $region16: #{seq_share_vae_loss.1} parent=1 // pred_region
      _
    $region17: #{seq_share_vae_loss.1} parent=1 // pred_fallthru
      _
    // Predicated region
    $region18: #{seq_share_vae_loss.1} parent=1 // pred_check
      _
    $region19: #{seq_share_vae_loss.1} parent=1 // pred_check_branch
      %51 = sbr.rel (0) target = $region21
    $region20: #{seq_share_vae_loss.1} parent=1 // pred_region
      _
    $region21: #{seq_share_vae_loss.1} parent=1 // pred_fallthru
      _
    // Predicated region
    $region22: #{seq_share_vae_loss.1} parent=1 // pred_check
      _
    $region23: #{seq_share_vae_loss.1} parent=1 // pred_check_branch
      %53 = sbr.rel (0) target = $region25
    $region24: #{seq_share_vae_loss.1} parent=1 // pred_region
      _
    $region25: #{seq_share_vae_loss.1} parent=1 // pred_fallthru
      _
    // Predicated region
    $region26: #{seq_share_vae_loss.1} parent=1 // pred_check
      _
    $region27: #{seq_share_vae_loss.1} parent=1 // pred_check_branch
      %55 = sbr.rel (0) target = $region29
    $region28: #{seq_share_vae_loss.1} parent=1 // pred_region
      _
    $region29: #{seq_share_vae_loss.1} parent=1 // pred_fallthru
      _
    // Predicated region
    $region30: #{seq_share_vae_loss.1} parent=1 // pred_check
      _
    $region31: #{seq_share_vae_loss.1} parent=1 // pred_check_branch
      %57 = sbr.rel (0) target = $region33
    $region32: #{seq_share_vae_loss.1} parent=1 // pred_region
      _
    $region33: #{seq_share_vae_loss.1} parent=1 // pred_fallthru
      _
    // Predicated region
    $region34: #{seq_share_vae_loss.1} parent=1 // pred_check
      _
    $region35: #{seq_share_vae_loss.1} parent=1 // pred_check_branch
      %59 = sbr.rel (0) target = $region37
    $region36: #{seq_share_vae_loss.1} parent=1 // pred_region
      _
    $region37: #{seq_share_vae_loss.1} parent=1 // pred_fallthru
      _
    // Predicated region
    $region38: #{seq_share_vae_loss.1} parent=1 // pred_check
      _
    $region39: #{seq_share_vae_loss.1} parent=1 // pred_check_branch
      %61 = sbr.rel (0) target = $region41
    $region40: #{seq_share_vae_loss.1} parent=1 // pred_region
      _
    $region41: #{seq_share_vae_loss.1} parent=1 // pred_fallthru
      _
    // Predicated region
    $region42: #{seq_share_vae_loss.1} parent=1 // pred_check
      _
    $region43: #{seq_share_vae_loss.1} parent=1 // pred_check_branch
      %63 = sbr.rel (0) target = $region45
    $region44: #{seq_share_vae_loss.1} parent=1 // pred_region
      _
    $region45: #{seq_share_vae_loss.1} parent=1 // pred_fallthru
      _
    // Predicated region
    $region46: #{seq_share_vae_loss.1} parent=1 // pred_check
      _
    $region47: #{seq_share_vae_loss.1} parent=1 // pred_check_branch
      %65 = sbr.rel (0) target = $region49
    $region48: #{seq_share_vae_loss.1} parent=1 // pred_region
      _
    $region49: #{seq_share_vae_loss.1} parent=1 // pred_fallthru
      _
    // Predicated region
    $region50: #{seq_share_vae_loss.1} parent=1 // pred_check
      _
    $region51: #{seq_share_vae_loss.1} parent=1 // pred_check_branch
      %67 = sbr.rel (0) target = $region53
    $region52: #{seq_share_vae_loss.1} parent=1 // pred_region
      _
    $region53: #{seq_share_vae_loss.1} parent=1 // pred_fallthru
      _
    // Predicated region
    $region54: #{seq_share_vae_loss.1} parent=1 // pred_check
      _
    $region55: #{seq_share_vae_loss.1} parent=1 // pred_check_branch
      %69 = sbr.rel (0) target = $region57
    $region56: #{seq_share_vae_loss.1} parent=1 // pred_region
      _
    $region57: #{seq_share_vae_loss.1} parent=1 // pred_fallthru
      _
    // Predicated region
    $region58: #{seq_share_vae_loss.1} parent=1 // pred_check
      _
    $region59: #{seq_share_vae_loss.1} parent=1 // pred_check_branch
      %71 = sbr.rel (0) target = $region61
    $region60: #{seq_share_vae_loss.1} parent=1 // pred_region
      _
    $region61: #{seq_share_vae_loss.1} parent=1 // pred_fallthru
      _
    // Predicated region
    $region62: #{seq_share_vae_loss.1} parent=1 // pred_check
      _
    $region63: #{seq_share_vae_loss.1} parent=1 // pred_check_branch
      %73 = sbr.rel (0) target = $region65
    $region64: #{seq_share_vae_loss.1} parent=1 // pred_region
      _
    $region65: #{seq_share_vae_loss.1} parent=1 // pred_fallthru
      _
    // Predicated region
    $region66: #{seq_share_vae_loss.1} parent=1 // pred_check
      _
    $region67: #{seq_share_vae_loss.1} parent=1 // pred_check_branch
      %75 = sbr.rel (0) target = $region69
    $region68: #{seq_share_vae_loss.1} parent=1 // pred_region
      _
    $region69: #{seq_share_vae_loss.1} parent=1 // pred_fallthru
      _
    // Predicated region
    $region70: #{seq_share_vae_loss.1} parent=1 // pred_check
      _
    $region71: #{seq_share_vae_loss.1} parent=1 // pred_check_branch
      %77 = sbr.rel (0) target = $region73
    $region72: #{seq_share_vae_loss.1} parent=1 // pred_region
      _
    $region73: #{seq_share_vae_loss.1} parent=1 // pred_fallthru
      _
    // Predicated region
    $region74: #{seq_share_vae_loss.1} parent=1 // pred_check
      _
    $region75: #{seq_share_vae_loss.1} parent=1 // pred_check_branch
      %79 = sbr.rel (0) target = $region77
    $region76: #{seq_share_vae_loss.1} parent=1 // pred_region
      _
    $region77: #{seq_share_vae_loss.1} parent=1 // pred_fallthru
      _
    // Predicated region
    $region78: #{seq_share_vae_loss.1} parent=1 // pred_check
      _
    $region79: #{seq_share_vae_loss.1} parent=1 // pred_check_branch
      %81 = sbr.rel (0) target = $region81
    $region80: #{seq_share_vae_loss.1} parent=1 // pred_region
      _
    $region81: #{seq_share_vae_loss.1} parent=1 // pred_fallthru
      _
    // Predicated region
    $region82: #{seq_share_vae_loss.1} parent=1 // pred_check
      _
    $region83: #{seq_share_vae_loss.1} parent=1 // pred_check_branch
      %83 = sbr.rel (0) target = $region85
    $region84: #{seq_share_vae_loss.1} parent=1 // pred_region
      _
    $region85: #{seq_share_vae_loss.1} parent=1 // pred_fallthru
      _
    // Predicated region
    $region86: #{seq_share_vae_loss.1} parent=1 // pred_check
      _
    $region87: #{seq_share_vae_loss.1} parent=1 // pred_check_branch
      %85 = sbr.rel (0) target = $region89
    $region88: #{seq_share_vae_loss.1} parent=1 // pred_region
      _
    $region89: #{seq_share_vae_loss.1} parent=1 // pred_fallthru
      _
    // Predicated region
    $region90: #{seq_share_vae_loss.1} parent=1 // pred_check
      _
    $region91: #{seq_share_vae_loss.1} parent=1 // pred_check_branch
      %87 = sbr.rel (0) target = $region93
    $region92: #{seq_share_vae_loss.1} parent=1 // pred_region
      _
    $region93: #{seq_share_vae_loss.1} parent=1 // pred_fallthru
      _
    %v89 = vld [vmem:[%s1] sm:$0xff]
    %v90 = vld [vmem:[%s1 + $0x8] sm:$0xff]
    %v91 = vld [vmem:[%s7] sm:$0x1]
    %v92 = vld [vmem:[%s8] sm:$0x1]
    %v93 = vld [vmem:[%s2] sm:$0x3]
    %v94 = vlaneseq
    %v95 = vshrl.u32 %v94, 7
    %v96 = vlaneseq
    %v97 = vand.u32 %v96, 127
    %vm98 = vcmp.le.s32.totalorder %v97, %v95
    %v99 = vsel %vm98, 1, 0
    %v100 = vcvt.s32.f32 %v99
    %v103 = vunpack.c.l.s4 1966171168
    %v104 = vunpack.c.0.s8 %v103
    %v105 = vlaneseq
    %v106 = vshrl.u32 %v105, 7
    %v107 = vsub.s32 %v104, %v106
    %v108 = vrot.slane %v93, %v107
    %v109 = vcombine.high %v108, %v108
    %v111 = vunpack.c.l.s4 1966171168
    %v112 = vunpack.c.0.s8 %v111
    %v113 = vlaneseq
    %v114 = vshrl.u32 %v113, 7
    %v115 = vsub.s32 %v112, %v114
    %v116 = vrot.slane %v108, %v115
    %v118 = vunpack.c.l.s4 1966171168
    %v119 = vunpack.c.0.s8 %v118
    %v120 = vlaneseq
    %v121 = vshrl.u32 %v120, 7
    %v122 = vsub.s32 %v119, %v121
    %v123 = vrot.slane %v109, %v122
    %v124 = vlaneseq
    %v125 = vshrl.u32 %v124, 7
    %v126 = vsub.s32 0, %v125
    %v127 = vrot.slane %v116, %v126
    %v128 = vlaneseq
    %v129 = vshrl.u32 %v128, 7
    %v130 = vsub.s32 0, %v129
    %v131 = vrot.slane %v123, %v130
    %v134 = vmul.f32 %v100, %v127
    %v135 = vmul.f32 %v100, %v131
    %v136 = vsub.f32 %v134, 1.0
    %v137 = vsub.f32 %v135, 1.0
    %v138 = vmul.f32 %v136, 1e+09
    %v139 = vmul.f32 %v137, 1e+09
    %vm140 = vcmask 261120
    %v141 = vsel %vm140, %v89, 0.0
    %142 = vadd.xlane.f32.xlu0 %v141
    %v143 = vpop.xlane.xlu0 %142
    %v144 = vsel %vm140, %v90, 0.0
    %145 = vadd.xlane.f32.xlu0 %v144
    %v146 = vpop.xlane.xlu0 %145
    %v147 = vrcp.pop 32.0
    %v148 = vmul.f32 %v143, %v147
    %v149 = vmul.f32 %v146, %v147
    %v150 = vsub.f32 %v89, %v148
    %v151 = vsub.f32 %v90, %v149
    %v152 = vmul.f32 %v150, %v150
    %v153 = vmul.f32 %v151, %v151
    %v154 = vsel %vm140, %v152, 0.0
    %155 = vadd.xlane.f32.xlu0 %v154
    %v156 = vpop.xlane.xlu0 %155
    %v157 = vsel %vm140, %v153, 0.0
    %158 = vadd.xlane.f32.xlu0 %v157
    %v159 = vpop.xlane.xlu0 %158
    %v160 = vmul.f32 %v156, %v147
    %v161 = vmul.f32 %v159, %v147
    %v162 = vadd.f32 %v160, 1e-06
    %v163 = vadd.f32 %v161, 1e-06
    %v164 = vrsqrt.pop %v162
    %v165 = vrsqrt.pop %v163
    %v166 = vmul.f32 %v150, %v164
    %v167 = vmul.f32 %v151, %v165
    %v169 = vlaneseq
    %v170 = vshrl.u32 %v169, 7
    %v171 = vsub.s32 0, %v170
    %v172 = vrot.slane %v91, %v171
    %v174 = vmul.f32 %v166, %v172
    %v175 = vmul.f32 %v167, %v172
    %v177 = vlaneseq
    %v178 = vshrl.u32 %v177, 7
    %v179 = vsub.s32 0, %v178
    %v180 = vrot.slane %v92, %v179
    %v182 = vadd.f32 %v174, %v180
    %v183 = vadd.f32 %v175, %v180
    %v184 = vld [vmem:[%s14] sm:$0xf]
    %v185 = vld [vmem:[%s14 + $0x4] sm:$0xf]
    %v186 = vld [vmem:[%s14 + $0x8] sm:$0xf]
    %v187 = vld [vmem:[%s14 + $0xc] sm:$0xf]
    %v188 = vpack.c.bf16 %v183, %v182
    %v193 = vunpack.c.l.b16 %v184
    %v194 = vunpack.c.l.b16 %v185
    %v195 = vunpack.c.l.b16 %v186
    %v196 = vunpack.c.l.b16 %v187
    %v197 = vpack.c.b16 %v194, %v193
    %v198 = vpack.c.b16 %v196, %v195
    %v202 = vsel %vm140, %v188, 0
    %204 = vmatprep.subr.bf16.mxu0 0
    %205 = vmatpush1.bf16.msra.mxu0 %v197
    %206 = vmatprep.subr.bf16.mxu0 0
    %207 = vmatpush1.bf16.msra.mxu0 %v198
    %208 = vmatprep.subr.bf16.mxu0 0
    %209 = vmatpush1.bf16.msra.mxu0 0
    %210 = vmatprep.subr.bf16.mxu0 0
    %211 = vmatpush1.bf16.msra.mxu0 0
    %212 = vmatprep.subr.bf16.mxu0 0
    %213 = vmatpush1.bf16.msra.mxu0 0
    %214 = vmatprep.subr.bf16.mxu0 0
    %215 = vmatpush1.bf16.msra.mxu0 0
    %216 = vmatprep.subr.bf16.mxu0 0
    %217 = vmatpush1.bf16.msra.mxu0 0
    %218 = vmatprep.subr.bf16.mxu0 0
    %219 = vmatpush1.bf16.msra.mxu0 0
    %220 = vmatprep.subr.bf16.mxu0 0
    %221 = vmatpush1.bf16.msra.mxu0 0
    %222 = vmatprep.subr.bf16.mxu0 0
    %223 = vmatpush1.bf16.msra.mxu0 0
    %224 = vmatprep.subr.bf16.mxu0 0
    %225 = vmatpush1.bf16.msra.mxu0 0
    %226 = vmatprep.subr.bf16.mxu0 0
    %227 = vmatpush1.bf16.msra.mxu0 0
    %228 = vmatprep.subr.bf16.mxu0 0
    %229 = vmatpush1.bf16.msra.mxu0 0
    %230 = vmatprep.subr.bf16.mxu0 0
    %231 = vmatpush1.bf16.msra.mxu0 0
    %232 = vmatprep.subr.bf16.mxu0 0
    %233 = vmatpush1.bf16.msra.mxu0 0
    %234 = vmatprep.subr.bf16.mxu0 0
    %235 = vmatpush1.bf16.msra.mxu0 0
    %236 = vmatprep.mubr.bf16.mxu0 0
    %237 = vmatmul.mubr.bf16.gmra.mrb[0].mxu0 %v202
    %v238 = vpop.f32.mrb[0].mxu0
    %v239 = vadd.f32 0.0, %v238
    %v240 = vpop.f32.mrb[0].mxu0
    %v241 = vpop.f32.mrb[0].mxu0
    %v242 = vadd.f32 0.0, %v241
    %v243 = vpop.f32.mrb[0].mxu0
    %244 = vdwg.mxu0
    %v245 = vpack.c.bf16 %v239, %v239
    %v246 = vpack.c.bf16 %v242, %v242
    %248 = vrot.lane.b32.xlu0 %v245, 96
    %v249 = vpop.permute.xlu0 %248
    %vm250 = vcmask 130048
    %v252 = vsel %vm250, %v245, 0
    %v255 = vsel %vm250, %v249, 0
    %257 = vmatprep.subr.bf16.mxu0 0
    %258 = vmatpush1.bf16.xpose.msra.mxu0 %v255
    %259 = vmatprep.subr.bf16.mxu0 0
    %260 = vmatpush1.bf16.xpose.msra.mxu0 0
    %261 = vmatprep.subr.bf16.mxu0 0
    %262 = vmatpush1.bf16.xpose.msra.mxu0 0
    %263 = vmatprep.subr.bf16.mxu0 0
    %264 = vmatpush1.bf16.xpose.msra.mxu0 0
    %265 = vmatprep.subr.bf16.mxu0 0
    %266 = vmatpush1.bf16.xpose.msra.mxu0 0
    %267 = vmatprep.subr.bf16.mxu0 0
    %268 = vmatpush1.bf16.xpose.msra.mxu0 0
    %269 = vmatprep.subr.bf16.mxu0 0
    %270 = vmatpush1.bf16.xpose.msra.mxu0 0
    %271 = vmatprep.subr.bf16.mxu0 0
    %272 = vmatpush1.bf16.xpose.msra.mxu0 0
    %273 = vmatprep.subr.bf16.mxu0 0
    %274 = vmatpush1.bf16.xpose.msra.mxu0 0
    %275 = vmatprep.subr.bf16.mxu0 0
    %276 = vmatpush1.bf16.xpose.msra.mxu0 0
    %277 = vmatprep.subr.bf16.mxu0 0
    %278 = vmatpush1.bf16.xpose.msra.mxu0 0
    %279 = vmatprep.subr.bf16.mxu0 0
    %280 = vmatpush1.bf16.xpose.msra.mxu0 0
    %281 = vmatprep.subr.bf16.mxu0 0
    %282 = vmatpush1.bf16.xpose.msra.mxu0 0
    %283 = vmatprep.subr.bf16.mxu0 0
    %284 = vmatpush1.bf16.xpose.msra.mxu0 0
    %285 = vmatprep.subr.bf16.mxu0 0
    %286 = vmatpush1.bf16.xpose.msra.mxu0 0
    %287 = vmatprep.subr.bf16.mxu0 0
    %288 = vmatpush1.bf16.xpose.msra.mxu0 0
    %289 = vmatprep.mubr.bf16.mxu0 0
    %290 = vmatmul.mubr.bf16.gmra.mrb[0].mxu0 %v252
    %v291 = vpop.f32.mrb[0].mxu0
    %v292 = vadd.f32 0.0, %v291
    %v293 = vpop.f32.mrb[0].mxu0
    %v294 = vpop.f32.mrb[0].mxu0
    %v295 = vpop.f32.mrb[0].mxu0
    %296 = vdwg.mxu0
    %298 = vrot.lane.b32.xlu0 %v246, 96
    %v299 = vpop.permute.xlu0 %298
    %v301 = vsel %vm250, %v246, 0
    %v304 = vsel %vm250, %v299, 0
    %306 = vmatprep.subr.bf16.mxu0 0
    %307 = vmatpush1.bf16.xpose.msra.mxu0 %v304
    %308 = vmatprep.subr.bf16.mxu0 0
    %309 = vmatpush1.bf16.xpose.msra.mxu0 0
    %310 = vmatprep.subr.bf16.mxu0 0
    %311 = vmatpush1.bf16.xpose.msra.mxu0 0
    %312 = vmatprep.subr.bf16.mxu0 0
    %313 = vmatpush1.bf16.xpose.msra.mxu0 0
    %314 = vmatprep.subr.bf16.mxu0 0
    %315 = vmatpush1.bf16.xpose.msra.mxu0 0
    %316 = vmatprep.subr.bf16.mxu0 0
    %317 = vmatpush1.bf16.xpose.msra.mxu0 0
    %318 = vmatprep.subr.bf16.mxu0 0
    %319 = vmatpush1.bf16.xpose.msra.mxu0 0
    %320 = vmatprep.subr.bf16.mxu0 0
    %321 = vmatpush1.bf16.xpose.msra.mxu0 0
    %322 = vmatprep.subr.bf16.mxu0 0
    %323 = vmatpush1.bf16.xpose.msra.mxu0 0
    %324 = vmatprep.subr.bf16.mxu0 0
    %325 = vmatpush1.bf16.xpose.msra.mxu0 0
    %326 = vmatprep.subr.bf16.mxu0 0
    %327 = vmatpush1.bf16.xpose.msra.mxu0 0
    %328 = vmatprep.subr.bf16.mxu0 0
    %329 = vmatpush1.bf16.xpose.msra.mxu0 0
    %330 = vmatprep.subr.bf16.mxu0 0
    %331 = vmatpush1.bf16.xpose.msra.mxu0 0
    %332 = vmatprep.subr.bf16.mxu0 0
    %333 = vmatpush1.bf16.xpose.msra.mxu0 0
    %334 = vmatprep.subr.bf16.mxu0 0
    %335 = vmatpush1.bf16.xpose.msra.mxu0 0
    %336 = vmatprep.subr.bf16.mxu0 0
    %337 = vmatpush1.bf16.xpose.msra.mxu0 0
    %338 = vmatprep.mubr.bf16.mxu0 0
    %339 = vmatmul.mubr.bf16.gmra.mrb[0].mxu0 %v301
    %v340 = vpop.f32.mrb[0].mxu0
    %v341 = vadd.f32 0.0, %v340
    %v342 = vpop.f32.mrb[0].mxu0
    %v343 = vpop.f32.mrb[0].mxu0
    %v344 = vpop.f32.mrb[0].mxu0
    %345 = vdwg.mxu0
    %v346 = vmul.f32 %v292, 0.25
    %v347 = vmul.f32 %v341, 0.25
    %v348 = vadd.f32 %v346, %v138
    %v349 = vadd.f32 %v347, %v139
    %vm350 = vcmask 64512
    %v351 = vsel %vm350, %v348, -inf
    %352 = vmax.xlane.f32.xlu0 %v351
    %v353 = vpop.xlane.xlu0 %352
    %v354 = vsel %vm350, %v349, -inf
    %355 = vmax.xlane.f32.xlu0 %v354
    %v356 = vpop.xlane.xlu0 %355
    %v357 = vsub.f32 %v348, %v353
    %v358 = vsub.f32 %v349, %v356
    %v359 = vmul.f32 %v357, 1.442695
    %v360 = vpow.pop %v359
    %v361 = vmul.f32 %v358, 1.442695
    %v362 = vpow.pop %v361
    %v363 = vsel %vm350, %v360, 0.0
    %364 = vadd.xlane.f32.xlu0 %v363
    %v365 = vpop.xlane.xlu0 %364
    %v366 = vsel %vm350, %v362, 0.0
    %367 = vadd.xlane.f32.xlu0 %v366
    %v368 = vpop.xlane.xlu0 %367
    %v369 = vrcp.pop %v365
    %v370 = vmul.f32 %v360, %v369
    %v371 = vrcp.pop %v368
    %v372 = vmul.f32 %v362, %v371
    %v373 = vpack.c.bf16 %v370, %v370
    %v374 = vpack.c.bf16 %v372, %v372
    %375 = vrot.lane.b32.xlu0 %v245, 64
    %v376 = vpop.permute.xlu0 %375
    %v378 = vsel %vm350, %v373, 0
    %vm380 = vcmask 1043456
    %v382 = vsel %vm380, %v376, 0
    %384 = vmatprep.subr.bf16.mxu0 0
    %385 = vmatpush1.bf16.msra.mxu0 %v382
    %386 = vmatprep.subr.bf16.mxu0 0
    %387 = vmatpush1.bf16.msra.mxu0 0
    %388 = vmatprep.subr.bf16.mxu0 0
    %389 = vmatpush1.bf16.msra.mxu0 0
    %390 = vmatprep.subr.bf16.mxu0 0
    %391 = vmatpush1.bf16.msra.mxu0 0
    %392 = vmatprep.subr.bf16.mxu0 0
    %393 = vmatpush1.bf16.msra.mxu0 0
    %394 = vmatprep.subr.bf16.mxu0 0
    %395 = vmatpush1.bf16.msra.mxu0 0
    %396 = vmatprep.subr.bf16.mxu0 0
    %397 = vmatpush1.bf16.msra.mxu0 0
    %398 = vmatprep.subr.bf16.mxu0 0
    %399 = vmatpush1.bf16.msra.mxu0 0
    %400 = vmatprep.subr.bf16.mxu0 0
    %401 = vmatpush1.bf16.msra.mxu0 0
    %402 = vmatprep.subr.bf16.mxu0 0
    %403 = vmatpush1.bf16.msra.mxu0 0
    %404 = vmatprep.subr.bf16.mxu0 0
    %405 = vmatpush1.bf16.msra.mxu0 0
    %406 = vmatprep.subr.bf16.mxu0 0
    %407 = vmatpush1.bf16.msra.mxu0 0
    %408 = vmatprep.subr.bf16.mxu0 0
    %409 = vmatpush1.bf16.msra.mxu0 0
    %410 = vmatprep.subr.bf16.mxu0 0
    %411 = vmatpush1.bf16.msra.mxu0 0
    %412 = vmatprep.subr.bf16.mxu0 0
    %413 = vmatpush1.bf16.msra.mxu0 0
    %414 = vmatprep.subr.bf16.mxu0 0
    %415 = vmatpush1.bf16.msra.mxu0 0
    %416 = vmatprep.mubr.bf16.mxu0 0
    %417 = vmatmul.mubr.bf16.gmra.mrb[0].mxu0 %v378
    %v418 = vpop.f32.mrb[0].mxu0
    %v419 = vadd.f32 0.0, %v418
    %v420 = vpop.f32.mrb[0].mxu0
    %v421 = vpop.f32.mrb[0].mxu0
    %v422 = vpop.f32.mrb[0].mxu0
    %423 = vdwg.mxu0
    %424 = vrot.lane.b32.xlu0 %v246, 64
    %v425 = vpop.permute.xlu0 %424
    %v427 = vsel %vm350, %v374, 0
    %v430 = vsel %vm380, %v425, 0
    %432 = vmatprep.subr.bf16.mxu0 0
    %433 = vmatpush1.bf16.msra.mxu0 %v430
    %434 = vmatprep.subr.bf16.mxu0 0
    %435 = vmatpush1.bf16.msra.mxu0 0
    %436 = vmatprep.subr.bf16.mxu0 0
    %437 = vmatpush1.bf16.msra.mxu0 0
    %438 = vmatprep.subr.bf16.mxu0 0
    %439 = vmatpush1.bf16.msra.mxu0 0
    %440 = vmatprep.subr.bf16.mxu0 0
    %441 = vmatpush1.bf16.msra.mxu0 0
    %442 = vmatprep.subr.bf16.mxu0 0
    %443 = vmatpush1.bf16.msra.mxu0 0
    %444 = vmatprep.subr.bf16.mxu0 0
    %445 = vmatpush1.bf16.msra.mxu0 0
    %446 = vmatprep.subr.bf16.mxu0 0
    %447 = vmatpush1.bf16.msra.mxu0 0
    %448 = vmatprep.subr.bf16.mxu0 0
    %449 = vmatpush1.bf16.msra.mxu0 0
    %450 = vmatprep.subr.bf16.mxu0 0
    %451 = vmatpush1.bf16.msra.mxu0 0
    %452 = vmatprep.subr.bf16.mxu0 0
    %453 = vmatpush1.bf16.msra.mxu0 0
    %454 = vmatprep.subr.bf16.mxu0 0
    %455 = vmatpush1.bf16.msra.mxu0 0
    %456 = vmatprep.subr.bf16.mxu0 0
    %457 = vmatpush1.bf16.msra.mxu0 0
    %458 = vmatprep.subr.bf16.mxu0 0
    %459 = vmatpush1.bf16.msra.mxu0 0
    %460 = vmatprep.subr.bf16.mxu0 0
    %461 = vmatpush1.bf16.msra.mxu0 0
    %462 = vmatprep.subr.bf16.mxu0 0
    %463 = vmatpush1.bf16.msra.mxu0 0
    %464 = vmatprep.mubr.bf16.mxu0 0
    %465 = vmatmul.mubr.bf16.gmra.mrb[0].mxu0 %v427
    %v466 = vpop.f32.mrb[0].mxu0
    %v467 = vadd.f32 0.0, %v466
    %v468 = vpop.f32.mrb[0].mxu0
    %v469 = vpop.f32.mrb[0].mxu0
    %v470 = vpop.f32.mrb[0].mxu0
    %471 = vdwg.mxu0
    %472 = vrot.lane.b32.xlu0 %v245, 112
    %v473 = vpop.permute.xlu0 %472
    %474 = vrot.lane.b32.xlu0 %v245, 80
    %v475 = vpop.permute.xlu0 %474
    %v477 = vsel %vm250, %v473, 0
    %v480 = vsel %vm250, %v475, 0
    %482 = vmatprep.subr.bf16.mxu0 0
    %483 = vmatpush1.bf16.xpose.msra.mxu0 %v480
    %484 = vmatprep.subr.bf16.mxu0 0
    %485 = vmatpush1.bf16.xpose.msra.mxu0 0
    %486 = vmatprep.subr.bf16.mxu0 0
    %487 = vmatpush1.bf16.xpose.msra.mxu0 0
    %488 = vmatprep.subr.bf16.mxu0 0
    %489 = vmatpush1.bf16.xpose.msra.mxu0 0
    %490 = vmatprep.subr.bf16.mxu0 0
    %491 = vmatpush1.bf16.xpose.msra.mxu0 0
    %492 = vmatprep.subr.bf16.mxu0 0
    %493 = vmatpush1.bf16.xpose.msra.mxu0 0
    %494 = vmatprep.subr.bf16.mxu0 0
    %495 = vmatpush1.bf16.xpose.msra.mxu0 0
    %496 = vmatprep.subr.bf16.mxu0 0
    %497 = vmatpush1.bf16.xpose.msra.mxu0 0
    %498 = vmatprep.subr.bf16.mxu0 0
    %499 = vmatpush1.bf16.xpose.msra.mxu0 0
    %500 = vmatprep.subr.bf16.mxu0 0
    %501 = vmatpush1.bf16.xpose.msra.mxu0 0
    %502 = vmatprep.subr.bf16.mxu0 0
    %503 = vmatpush1.bf16.xpose.msra.mxu0 0
    %504 = vmatprep.subr.bf16.mxu0 0
    %505 = vmatpush1.bf16.xpose.msra.mxu0 0
    %506 = vmatprep.subr.bf16.mxu0 0
    %507 = vmatpush1.bf16.xpose.msra.mxu0 0
    %508 = vmatprep.subr.bf16.mxu0 0
    %509 = vmatpush1.bf16.xpose.msra.mxu0 0
    %510 = vmatprep.subr.bf16.mxu0 0
    %511 = vmatpush1.bf16.xpose.msra.mxu0 0
    %512 = vmatprep.subr.bf16.mxu0 0
    %513 = vmatpush1.bf16.xpose.msra.mxu0 0
    %514 = vmatprep.mubr.bf16.mxu0 0
    %515 = vmatmul.mubr.bf16.gmra.mrb[0].mxu0 %v477
    %v516 = vpop.f32.mrb[0].mxu0
    %v517 = vadd.f32 0.0, %v516
    %v518 = vpop.f32.mrb[0].mxu0
    %v519 = vpop.f32.mrb[0].mxu0
    %v520 = vpop.f32.mrb[0].mxu0
    %521 = vdwg.mxu0
    %522 = vrot.lane.b32.xlu0 %v246, 112
    %v523 = vpop.permute.xlu0 %522
    %524 = vrot.lane.b32.xlu0 %v246, 80
    %v525 = vpop.permute.xlu0 %524
    %v527 = vsel %vm250, %v523, 0
    %v530 = vsel %vm250, %v525, 0
    %532 = vmatprep.subr.bf16.mxu0 0
    %533 = vmatpush1.bf16.xpose.msra.mxu0 %v530
    %534 = vmatprep.subr.bf16.mxu0 0
    %535 = vmatpush1.bf16.xpose.msra.mxu0 0
    %536 = vmatprep.subr.bf16.mxu0 0
    %537 = vmatpush1.bf16.xpose.msra.mxu0 0
    %538 = vmatprep.subr.bf16.mxu0 0
    %539 = vmatpush1.bf16.xpose.msra.mxu0 0
    %540 = vmatprep.subr.bf16.mxu0 0
    %541 = vmatpush1.bf16.xpose.msra.mxu0 0
    %542 = vmatprep.subr.bf16.mxu0 0
    %543 = vmatpush1.bf16.xpose.msra.mxu0 0
    %544 = vmatprep.subr.bf16.mxu0 0
    %545 = vmatpush1.bf16.xpose.msra.mxu0 0
    %546 = vmatprep.subr.bf16.mxu0 0
    %547 = vmatpush1.bf16.xpose.msra.mxu0 0
    %548 = vmatprep.subr.bf16.mxu0 0
    %549 = vmatpush1.bf16.xpose.msra.mxu0 0
    %550 = vmatprep.subr.bf16.mxu0 0
    %551 = vmatpush1.bf16.xpose.msra.mxu0 0
    %552 = vmatprep.subr.bf16.mxu0 0
    %553 = vmatpush1.bf16.xpose.msra.mxu0 0
    %554 = vmatprep.subr.bf16.mxu0 0
    %555 = vmatpush1.bf16.xpose.msra.mxu0 0
    %556 = vmatprep.subr.bf16.mxu0 0
    %557 = vmatpush1.bf16.xpose.msra.mxu0 0
    %558 = vmatprep.subr.bf16.mxu0 0
    %559 = vmatpush1.bf16.xpose.msra.mxu0 0
    %560 = vmatprep.subr.bf16.mxu0 0
    %561 = vmatpush1.bf16.xpose.msra.mxu0 0
    %562 = vmatprep.subr.bf16.mxu0 0
    %563 = vmatpush1.bf16.xpose.msra.mxu0 0
    %564 = vmatprep.mubr.bf16.mxu0 0
    %565 = vmatmul.mubr.bf16.gmra.mrb[0].mxu0 %v527
    %v566 = vpop.f32.mrb[0].mxu0
    %v567 = vadd.f32 0.0, %v566
    %v568 = vpop.f32.mrb[0].mxu0
    %v569 = vpop.f32.mrb[0].mxu0
    %v570 = vpop.f32.mrb[0].mxu0
    %571 = vdwg.mxu0
    %v572 = vmul.f32 %v517, 0.25
    %v573 = vmul.f32 %v567, 0.25
    %v574 = vadd.f32 %v572, %v138
    %v575 = vadd.f32 %v573, %v139
    %v576 = vsel %vm350, %v574, -inf
    %577 = vmax.xlane.f32.xlu0 %v576
    %v578 = vpop.xlane.xlu0 %577
    %v579 = vsel %vm350, %v575, -inf
    %580 = vmax.xlane.f32.xlu0 %v579
    %v581 = vpop.xlane.xlu0 %580
    %v582 = vsub.f32 %v574, %v578
    %v583 = vsub.f32 %v575, %v581
    %v584 = vmul.f32 %v582, 1.442695
    %v585 = vpow.pop %v584
    %v586 = vmul.f32 %v583, 1.442695
    %v587 = vpow.pop %v586
    %v588 = vsel %vm350, %v585, 0.0
    %589 = vadd.xlane.f32.xlu0 %v588
    %v590 = vpop.xlane.xlu0 %589
    %v591 = vsel %vm350, %v587, 0.0
    %592 = vadd.xlane.f32.xlu0 %v591
    %v593 = vpop.xlane.xlu0 %592
    %v594 = vrcp.pop %v590
    %v595 = vmul.f32 %v585, %v594
    %v596 = vrcp.pop %v593
    %v597 = vmul.f32 %v587, %v596
    %v598 = vpack.c.bf16 %v595, %v595
    %v599 = vpack.c.bf16 %v597, %v597
    %600 = vrot.lane.b32.xlu0 %v245, 48
    %v601 = vpop.permute.xlu0 %600
    %v603 = vsel %vm350, %v598, 0
    %v606 = vsel %vm380, %v601, 0
    %608 = vmatprep.subr.bf16.mxu0 0
    %609 = vmatpush1.bf16.msra.mxu0 %v606
    %610 = vmatprep.subr.bf16.mxu0 0
    %611 = vmatpush1.bf16.msra.mxu0 0
    %612 = vmatprep.subr.bf16.mxu0 0
    %613 = vmatpush1.bf16.msra.mxu0 0
    %614 = vmatprep.subr.bf16.mxu0 0
    %615 = vmatpush1.bf16.msra.mxu0 0
    %616 = vmatprep.subr.bf16.mxu0 0
    %617 = vmatpush1.bf16.msra.mxu0 0
    %618 = vmatprep.subr.bf16.mxu0 0
    %619 = vmatpush1.bf16.msra.mxu0 0
    %620 = vmatprep.subr.bf16.mxu0 0
    %621 = vmatpush1.bf16.msra.mxu0 0
    %622 = vmatprep.subr.bf16.mxu0 0
    %623 = vmatpush1.bf16.msra.mxu0 0
    %624 = vmatprep.subr.bf16.mxu0 0
    %625 = vmatpush1.bf16.msra.mxu0 0
    %626 = vmatprep.subr.bf16.mxu0 0
    %627 = vmatpush1.bf16.msra.mxu0 0
    %628 = vmatprep.subr.bf16.mxu0 0
    %629 = vmatpush1.bf16.msra.mxu0 0
    %630 = vmatprep.subr.bf16.mxu0 0
    %631 = vmatpush1.bf16.msra.mxu0 0
    %632 = vmatprep.subr.bf16.mxu0 0
    %633 = vmatpush1.bf16.msra.mxu0 0
    %634 = vmatprep.subr.bf16.mxu0 0
    %635 = vmatpush1.bf16.msra.mxu0 0
    %636 = vmatprep.subr.bf16.mxu0 0
    %637 = vmatpush1.bf16.msra.mxu0 0
    %638 = vmatprep.subr.bf16.mxu0 0
    %639 = vmatpush1.bf16.msra.mxu0 0
    %640 = vmatprep.mubr.bf16.mxu0 0
    %641 = vmatmul.mubr.bf16.gmra.mrb[0].mxu0 %v603
    %v642 = vpop.f32.mrb[0].mxu0
    %v643 = vadd.f32 0.0, %v642
    %v644 = vpop.f32.mrb[0].mxu0
    %v645 = vpop.f32.mrb[0].mxu0
    %v646 = vpop.f32.mrb[0].mxu0
    %647 = vdwg.mxu0
    %648 = vrot.lane.b32.xlu0 %v246, 48
    %v649 = vpop.permute.xlu0 %648
    %v651 = vsel %vm350, %v599, 0
    %v654 = vsel %vm380, %v649, 0
    %656 = vmatprep.subr.bf16.mxu0 0
    %657 = vmatpush1.bf16.msra.mxu0 %v654
    %658 = vmatprep.subr.bf16.mxu0 0
    %659 = vmatpush1.bf16.msra.mxu0 0
    %660 = vmatprep.subr.bf16.mxu0 0
    %661 = vmatpush1.bf16.msra.mxu0 0
    %662 = vmatprep.subr.bf16.mxu0 0
    %663 = vmatpush1.bf16.msra.mxu0 0
    %664 = vmatprep.subr.bf16.mxu0 0
    %665 = vmatpush1.bf16.msra.mxu0 0
    %666 = vmatprep.subr.bf16.mxu0 0
    %667 = vmatpush1.bf16.msra.mxu0 0
    %668 = vmatprep.subr.bf16.mxu0 0
    %669 = vmatpush1.bf16.msra.mxu0 0
    %670 = vmatprep.subr.bf16.mxu0 0
    %671 = vmatpush1.bf16.msra.mxu0 0
    %672 = vmatprep.subr.bf16.mxu0 0
    %673 = vmatpush1.bf16.msra.mxu0 0
    %674 = vmatprep.subr.bf16.mxu0 0
    %675 = vmatpush1.bf16.msra.mxu0 0
    %676 = vmatprep.subr.bf16.mxu0 0
    %677 = vmatpush1.bf16.msra.mxu0 0
    %678 = vmatprep.subr.bf16.mxu0 0
    %679 = vmatpush1.bf16.msra.mxu0 0
    %680 = vmatprep.subr.bf16.mxu0 0
    %681 = vmatpush1.bf16.msra.mxu0 0
    %682 = vmatprep.subr.bf16.mxu0 0
    %683 = vmatpush1.bf16.msra.mxu0 0
    %684 = vmatprep.subr.bf16.mxu0 0
    %685 = vmatpush1.bf16.msra.mxu0 0
    %686 = vmatprep.subr.bf16.mxu0 0
    %687 = vmatpush1.bf16.msra.mxu0 0
    %688 = vmatprep.mubr.bf16.mxu0 0
    %689 = vmatmul.mubr.bf16.gmra.mrb[0].mxu0 %v651
    %v690 = vpop.f32.mrb[0].mxu0
    %v691 = vadd.f32 0.0, %v690
    %v692 = vpop.f32.mrb[0].mxu0
    %v693 = vpop.f32.mrb[0].mxu0
    %v694 = vpop.f32.mrb[0].mxu0
    %695 = vdwg.mxu0
    %698 = vrot.lane.b32.xlu0 %v643, 16
    %v699 = vpop.permute.xlu0 %698
    %700 = vrot.lane.b32.xlu0 %v691, 16
    %v701 = vpop.permute.xlu0 %700
    %v704 = vsel %vm250, %v419, %v699
    %v705 = vsel %vm250, %v467, %v701
    %v706 = vld [vmem:[%s15] sm:$0xf]
    %v707 = vld [vmem:[%s15 + $0x4] sm:$0xf]
    %v708 = vld [vmem:[%s15 + $0x8] sm:$0xf]
    %v709 = vld [vmem:[%s15 + $0xc] sm:$0xf]
    %v710 = vpack.c.bf16 %v705, %v704
    %v715 = vunpack.c.l.b16 %v706
    %v716 = vunpack.c.l.b16 %v707
    %v717 = vunpack.c.l.b16 %v708
    %v718 = vunpack.c.l.b16 %v709
    %v719 = vpack.c.b16 %v716, %v715
    %v720 = vpack.c.b16 %v718, %v717
    %v724 = vsel %vm140, %v710, 0
    %726 = vmatprep.subr.bf16.mxu0 0
    %727 = vmatpush1.bf16.msra.mxu0 %v719
    %728 = vmatprep.subr.bf16.mxu0 0
    %729 = vmatpush1.bf16.msra.mxu0 %v720
    %730 = vmatprep.subr.bf16.mxu0 0
    %731 = vmatpush1.bf16.msra.mxu0 0
    %732 = vmatprep.subr.bf16.mxu0 0
    %733 = vmatpush1.bf16.msra.mxu0 0
    %734 = vmatprep.subr.bf16.mxu0 0
    %735 = vmatpush1.bf16.msra.mxu0 0
    %736 = vmatprep.subr.bf16.mxu0 0
    %737 = vmatpush1.bf16.msra.mxu0 0
    %738 = vmatprep.subr.bf16.mxu0 0
    %739 = vmatpush1.bf16.msra.mxu0 0
    %740 = vmatprep.subr.bf16.mxu0 0
    %741 = vmatpush1.bf16.msra.mxu0 0
    %742 = vmatprep.subr.bf16.mxu0 0
    %743 = vmatpush1.bf16.msra.mxu0 0
    %744 = vmatprep.subr.bf16.mxu0 0
    %745 = vmatpush1.bf16.msra.mxu0 0
    %746 = vmatprep.subr.bf16.mxu0 0
    %747 = vmatpush1.bf16.msra.mxu0 0
    %748 = vmatprep.subr.bf16.mxu0 0
    %749 = vmatpush1.bf16.msra.mxu0 0
    %750 = vmatprep.subr.bf16.mxu0 0
    %751 = vmatpush1.bf16.msra.mxu0 0
    %752 = vmatprep.subr.bf16.mxu0 0
    %753 = vmatpush1.bf16.msra.mxu0 0
    %754 = vmatprep.subr.bf16.mxu0 0
    %755 = vmatpush1.bf16.msra.mxu0 0
    %756 = vmatprep.subr.bf16.mxu0 0
    %757 = vmatpush1.bf16.msra.mxu0 0
    %758 = vmatprep.mubr.bf16.mxu0 0
    %759 = vmatmul.mubr.bf16.gmra.mrb[0].mxu0 %v724
    %v760 = vpop.f32.mrb[0].mxu0
    %v761 = vadd.f32 %v182, %v760
    %v762 = vpop.f32.mrb[0].mxu0
    %v763 = vpop.f32.mrb[0].mxu0
    %v764 = vadd.f32 %v183, %v763
    %v765 = vpop.f32.mrb[0].mxu0
    %766 = vdwg.mxu0
    %v767 = vld [vmem:[%s16] sm:$0x1]
    %v768 = vld [vmem:[%s17] sm:$0x1]
    %v769 = vsel %vm140, %v761, 0.0
    %770 = vadd.xlane.f32.xlu0 %v769
    %v771 = vpop.xlane.xlu0 %770
    %v772 = vsel %vm140, %v764, 0.0
    %773 = vadd.xlane.f32.xlu0 %v772
    %v774 = vpop.xlane.xlu0 %773
    %v775 = vmul.f32 %v771, %v147
    %v776 = vmul.f32 %v774, %v147
    %v777 = vsub.f32 %v761, %v775
    %v778 = vsub.f32 %v764, %v776
    %v779 = vmul.f32 %v777, %v777
    %v780 = vmul.f32 %v778, %v778
    %v781 = vsel %vm140, %v779, 0.0
    %782 = vadd.xlane.f32.xlu0 %v781
    %v783 = vpop.xlane.xlu0 %782
    %v784 = vsel %vm140, %v780, 0.0
    %785 = vadd.xlane.f32.xlu0 %v784
    %v786 = vpop.xlane.xlu0 %785
    %v787 = vmul.f32 %v783, %v147
    %v788 = vmul.f32 %v786, %v147
    %v789 = vadd.f32 %v787, 1e-06
    %v790 = vadd.f32 %v788, 1e-06
    %v791 = vrsqrt.pop %v789
    %v792 = vrsqrt.pop %v790
    %v793 = vmul.f32 %v777, %v791
    %v794 = vmul.f32 %v778, %v792
    %v796 = vlaneseq
    %v797 = vshrl.u32 %v796, 7
    %v798 = vsub.s32 0, %v797
    %v799 = vrot.slane %v767, %v798
    %v801 = vmul.f32 %v793, %v799
    %v802 = vmul.f32 %v794, %v799
    %v804 = vlaneseq
    %v805 = vshrl.u32 %v804, 7
    %v806 = vsub.s32 0, %v805
    %v807 = vrot.slane %v768, %v806
    %v809 = vadd.f32 %v801, %v807
    %v810 = vadd.f32 %v802, %v807
    %v811 = vld [vmem:[%s18] sm:$0xf]
    %v812 = vld [vmem:[%s18 + $0x4] sm:$0xf]
    %v813 = vld [vmem:[%s18 + $0x8] sm:$0xf]
    %v814 = vld [vmem:[%s18 + $0xc] sm:$0xf]
    %v815 = vpack.c.bf16 %v810, %v809
    %v816 = vld [vmem:[%s19] sm:$0x1]
    %v818 = vlaneseq
    %v819 = vshrl.u32 %v818, 7
    %v820 = vsub.s32 0, %v819
    %v821 = vrot.slane %v816, %v820
    %v827 = vunpack.c.l.b16 %v811
    %v828 = vunpack.c.l.b16 %v812
    %v829 = vunpack.c.l.b16 %v813
    %v830 = vunpack.c.l.b16 %v814
    %v831 = vpack.c.b16 %v828, %v827
    %v832 = vpack.c.b16 %v830, %v829
    %v836 = vsel %vm140, %v815, 0
    %838 = vmatprep.subr.bf16.mxu0 0
    %839 = vmatpush1.bf16.msra.mxu0 %v831
    %840 = vmatprep.subr.bf16.mxu0 0
    %841 = vmatpush1.bf16.msra.mxu0 %v832
    %842 = vmatprep.subr.bf16.mxu0 0
    %843 = vmatpush1.bf16.msra.mxu0 0
    %844 = vmatprep.subr.bf16.mxu0 0
    %845 = vmatpush1.bf16.msra.mxu0 0
    %846 = vmatprep.subr.bf16.mxu0 0
    %847 = vmatpush1.bf16.msra.mxu0 0
    %848 = vmatprep.subr.bf16.mxu0 0
    %849 = vmatpush1.bf16.msra.mxu0 0
    %850 = vmatprep.subr.bf16.mxu0 0
    %851 = vmatpush1.bf16.msra.mxu0 0
    %852 = vmatprep.subr.bf16.mxu0 0
    %853 = vmatpush1.bf16.msra.mxu0 0
    %854 = vmatprep.subr.bf16.mxu0 0
    %855 = vmatpush1.bf16.msra.mxu0 0
    %856 = vmatprep.subr.bf16.mxu0 0
    %857 = vmatpush1.bf16.msra.mxu0 0
    %858 = vmatprep.subr.bf16.mxu0 0
    %859 = vmatpush1.bf16.msra.mxu0 0
    %860 = vmatprep.subr.bf16.mxu0 0
    %861 = vmatpush1.bf16.msra.mxu0 0
    %862 = vmatprep.subr.bf16.mxu0 0
    %863 = vmatpush1.bf16.msra.mxu0 0
    %864 = vmatprep.subr.bf16.mxu0 0
    %865 = vmatpush1.bf16.msra.mxu0 0
    %866 = vmatprep.subr.bf16.mxu0 0
    %867 = vmatpush1.bf16.msra.mxu0 0
    %868 = vmatprep.subr.bf16.mxu0 0
    %869 = vmatpush1.bf16.msra.mxu0 0
    %870 = vmatprep.mubr.bf16.mxu0 0
    %871 = vmatmul.mubr.bf16.gmra.mrb[0].mxu0 %v836
    %v872 = vpop.f32.mrb[0].mxu0
    %v873 = vadd.f32 %v821, %v872
    %v874 = vpop.f32.mrb[0].mxu0
    %v875 = vpop.f32.mrb[0].mxu0
    %v876 = vadd.f32 %v821, %v875
    %v877 = vpop.f32.mrb[0].mxu0
    %878 = vdwg.mxu0
    %v879 = vmax.f32 %v873, 0.0
    %v880 = vmax.f32 %v876, 0.0
    %v881 = vld [vmem:[%s20] sm:$0xf]
    %v882 = vld [vmem:[%s20 + $0x4] sm:$0xf]
    %v883 = vld [vmem:[%s20 + $0x8] sm:$0xf]
    %v884 = vld [vmem:[%s20 + $0xc] sm:$0xf]
    %v885 = vld [vmem:[%s20 + $0x10] sm:$0xf]
    %v886 = vld [vmem:[%s20 + $0x14] sm:$0xf]
    %v887 = vld [vmem:[%s20 + $0x18] sm:$0xf]
    %v888 = vld [vmem:[%s20 + $0x1c] sm:$0xf]
    %v889 = vpack.c.bf16 %v880, %v879
    %v890 = vld [vmem:[%s21] sm:$0x1]
    %v892 = vlaneseq
    %v893 = vshrl.u32 %v892, 7
    %v894 = vsub.s32 0, %v893
    %v895 = vrot.slane %v890, %v894
    %v905 = vunpack.c.l.b16 %v881
    %v906 = vunpack.c.l.b16 %v882
    %v907 = vunpack.c.l.b16 %v883
    %v908 = vunpack.c.l.b16 %v884
    %v909 = vunpack.c.l.b16 %v885
    %v910 = vunpack.c.l.b16 %v886
    %v911 = vunpack.c.l.b16 %v887
    %v912 = vunpack.c.l.b16 %v888
    %v913 = vpack.c.b16 %v906, %v905
    %v914 = vpack.c.b16 %v908, %v907
    %v915 = vpack.c.b16 %v910, %v909
    %v916 = vpack.c.b16 %v912, %v911
    %vm921 = vcmask 523264
    %v923 = vsel %vm921, %v889, 0
    %925 = vmatprep.subr.bf16.mxu0 0
    %926 = vmatpush1.bf16.msra.mxu0 %v913
    %927 = vmatprep.subr.bf16.mxu0 0
    %928 = vmatpush1.bf16.msra.mxu0 %v914
    %929 = vmatprep.subr.bf16.mxu0 0
    %930 = vmatpush1.bf16.msra.mxu0 %v915
    %931 = vmatprep.subr.bf16.mxu0 0
    %932 = vmatpush1.bf16.msra.mxu0 %v916
    %933 = vmatprep.subr.bf16.mxu0 0
    %934 = vmatpush1.bf16.msra.mxu0 0
    %935 = vmatprep.subr.bf16.mxu0 0
    %936 = vmatpush1.bf16.msra.mxu0 0
    %937 = vmatprep.subr.bf16.mxu0 0
    %938 = vmatpush1.bf16.msra.mxu0 0
    %939 = vmatprep.subr.bf16.mxu0 0
    %940 = vmatpush1.bf16.msra.mxu0 0
    %941 = vmatprep.subr.bf16.mxu0 0
    %942 = vmatpush1.bf16.msra.mxu0 0
    %943 = vmatprep.subr.bf16.mxu0 0
    %944 = vmatpush1.bf16.msra.mxu0 0
    %945 = vmatprep.subr.bf16.mxu0 0
    %946 = vmatpush1.bf16.msra.mxu0 0
    %947 = vmatprep.subr.bf16.mxu0 0
    %948 = vmatpush1.bf16.msra.mxu0 0
    %949 = vmatprep.subr.bf16.mxu0 0
    %950 = vmatpush1.bf16.msra.mxu0 0
    %951 = vmatprep.subr.bf16.mxu0 0
    %952 = vmatpush1.bf16.msra.mxu0 0
    %953 = vmatprep.subr.bf16.mxu0 0
    %954 = vmatpush1.bf16.msra.mxu0 0
    %955 = vmatprep.subr.bf16.mxu0 0
    %956 = vmatpush1.bf16.msra.mxu0 0
    %957 = vmatprep.mubr.bf16.mxu0 0
    %958 = vmatmul.mubr.bf16.gmra.mrb[0].mxu0 %v923
    %v959 = vpop.f32.mrb[0].mxu0
    %v960 = vadd.f32 %v895, %v959
    %v961 = vpop.f32.mrb[0].mxu0
    %v962 = vpop.f32.mrb[0].mxu0
    %v963 = vadd.f32 %v895, %v962
    %v964 = vpop.f32.mrb[0].mxu0
    %965 = vdwg.mxu0
    %v966 = vadd.f32 %v960, %v809
    %v967 = vadd.f32 %v963, %v810
    %v968 = vld [vmem:[%s22] sm:$0x1]
    %v969 = vld [vmem:[%s23] sm:$0x1]
    %v970 = vsel %vm140, %v966, 0.0
    %971 = vadd.xlane.f32.xlu0 %v970
    %v972 = vpop.xlane.xlu0 %971
    %v973 = vsel %vm140, %v967, 0.0
    %974 = vadd.xlane.f32.xlu0 %v973
    %v975 = vpop.xlane.xlu0 %974
    %v976 = vmul.f32 %v972, %v147
    %v977 = vmul.f32 %v975, %v147
    %v978 = vsub.f32 %v966, %v976
    %v979 = vsub.f32 %v967, %v977
    %v980 = vmul.f32 %v978, %v978
    %v981 = vmul.f32 %v979, %v979
    %v982 = vsel %vm140, %v980, 0.0
    %983 = vadd.xlane.f32.xlu0 %v982
    %v984 = vpop.xlane.xlu0 %983
    %v985 = vsel %vm140, %v981, 0.0
    %986 = vadd.xlane.f32.xlu0 %v985
    %v987 = vpop.xlane.xlu0 %986
    %v988 = vmul.f32 %v984, %v147
    %v989 = vmul.f32 %v987, %v147
    %v990 = vadd.f32 %v988, 1e-06
    %v991 = vadd.f32 %v989, 1e-06
    %v992 = vrsqrt.pop %v990
    %v993 = vrsqrt.pop %v991
    %v994 = vmul.f32 %v978, %v992
    %v995 = vmul.f32 %v979, %v993
    %v997 = vlaneseq
    %v998 = vshrl.u32 %v997, 7
    %v999 = vsub.s32 0, %v998
    %v1000 = vrot.slane %v968, %v999
    %v1002 = vmul.f32 %v994, %v1000
    %v1003 = vmul.f32 %v995, %v1000
    %v1005 = vlaneseq
    %v1006 = vshrl.u32 %v1005, 7
    %v1007 = vsub.s32 0, %v1006
    %v1008 = vrot.slane %v969, %v1007
    %v1010 = vadd.f32 %v1002, %v1008
    %v1011 = vadd.f32 %v1003, %v1008
    %s1012 = scalar_lea.vmem %s14, 16
    %v1013 = vld [vmem:[%s1012] sm:$0xf]
    %v1014 = vld [vmem:[%s1012 + $0x4] sm:$0xf]
    %v1015 = vld [vmem:[%s1012 + $0x8] sm:$0xf]
    %v1016 = vld [vmem:[%s1012 + $0xc] sm:$0xf]
    %v1017 = vpack.c.bf16 %v1011, %v1010
    %v1022 = vunpack.c.l.b16 %v1013
    %v1023 = vunpack.c.l.b16 %v1014
    %v1024 = vunpack.c.l.b16 %v1015
    %v1025 = vunpack.c.l.b16 %v1016
    %v1026 = vpack.c.b16 %v1023, %v1022
    %v1027 = vpack.c.b16 %v1025, %v1024
    %v1031 = vsel %vm140, %v1017, 0
    %1033 = vmatprep.subr.bf16.mxu0 0
    %1034 = vmatpush1.bf16.msra.mxu0 %v1026
    %1035 = vmatprep.subr.bf16.mxu0 0
    %1036 = vmatpush1.bf16.msra.mxu0 %v1027
    %1037 = vmatprep.subr.bf16.mxu0 0
    %1038 = vmatpush1.bf16.msra.mxu0 0
    %1039 = vmatprep.subr.bf16.mxu0 0
    %1040 = vmatpush1.bf16.msra.mxu0 0
    %1041 = vmatprep.subr.bf16.mxu0 0
    %1042 = vmatpush1.bf16.msra.mxu0 0
    %1043 = vmatprep.subr.bf16.mxu0 0
    %1044 = vmatpush1.bf16.msra.mxu0 0
    %1045 = vmatprep.subr.bf16.mxu0 0
    %1046 = vmatpush1.bf16.msra.mxu0 0
    %1047 = vmatprep.subr.bf16.mxu0 0
    %1048 = vmatpush1.bf16.msra.mxu0 0
    %1049 = vmatprep.subr.bf16.mxu0 0
    %1050 = vmatpush1.bf16.msra.mxu0 0
    %1051 = vmatprep.subr.bf16.mxu0 0
    %1052 = vmatpush1.bf16.msra.mxu0 0
    %1053 = vmatprep.subr.bf16.mxu0 0
    %1054 = vmatpush1.bf16.msra.mxu0 0
    %1055 = vmatprep.subr.bf16.mxu0 0
    %1056 = vmatpush1.bf16.msra.mxu0 0
    %1057 = vmatprep.subr.bf16.mxu0 0
    %1058 = vmatpush1.bf16.msra.mxu0 0
    %1059 = vmatprep.subr.bf16.mxu0 0
    %1060 = vmatpush1.bf16.msra.mxu0 0
    %1061 = vmatprep.subr.bf16.mxu0 0
    %1062 = vmatpush1.bf16.msra.mxu0 0
    %1063 = vmatprep.subr.bf16.mxu0 0
    %1064 = vmatpush1.bf16.msra.mxu0 0
    %1065 = vmatprep.mubr.bf16.mxu0 0
    %1066 = vmatmul.mubr.bf16.gmra.mrb[0].mxu0 %v1031
    %v1067 = vpop.f32.mrb[0].mxu0
    %v1068 = vadd.f32 0.0, %v1067
    %v1069 = vpop.f32.mrb[0].mxu0
    %v1070 = vpop.f32.mrb[0].mxu0
    %v1071 = vadd.f32 0.0, %v1070
    %v1072 = vpop.f32.mrb[0].mxu0
    %1073 = vdwg.mxu0
    %v1074 = vpack.c.bf16 %v1068, %v1068
    %v1075 = vpack.c.bf16 %v1071, %v1071
    %1077 = vrot.lane.b32.xlu0 %v1074, 96
    %v1078 = vpop.permute.xlu0 %1077
    %v1080 = vsel %vm250, %v1074, 0
    %v1083 = vsel %vm250, %v1078, 0
    %1085 = vmatprep.subr.bf16.mxu0 0
    %1086 = vmatpush1.bf16.xpose.msra.mxu0 %v1083
    %1087 = vmatprep.subr.bf16.mxu0 0
    %1088 = vmatpush1.bf16.xpose.msra.mxu0 0
    %1089 = vmatprep.subr.bf16.mxu0 0
    %1090 = vmatpush1.bf16.xpose.msra.mxu0 0
    %1091 = vmatprep.subr.bf16.mxu0 0
    %1092 = vmatpush1.bf16.xpose.msra.mxu0 0
    %1093 = vmatprep.subr.bf16.mxu0 0
    %1094 = vmatpush1.bf16.xpose.msra.mxu0 0
    %1095 = vmatprep.subr.bf16.mxu0 0
    %1096 = vmatpush1.bf16.xpose.msra.mxu0 0
    %1097 = vmatprep.subr.bf16.mxu0 0
    %1098 = vmatpush1.bf16.xpose.msra.mxu0 0
    %1099 = vmatprep.subr.bf16.mxu0 0
    %1100 = vmatpush1.bf16.xpose.msra.mxu0 0
    %1101 = vmatprep.subr.bf16.mxu0 0
    %1102 = vmatpush1.bf16.xpose.msra.mxu0 0
    %1103 = vmatprep.subr.bf16.mxu0 0
    %1104 = vmatpush1.bf16.xpose.msra.mxu0 0
    %1105 = vmatprep.subr.bf16.mxu0 0
    %1106 = vmatpush1.bf16.xpose.msra.mxu0 0
    %1107 = vmatprep.subr.bf16.mxu0 0
    %1108 = vmatpush1.bf16.xpose.msra.mxu0 0
    %1109 = vmatprep.subr.bf16.mxu0 0
    %1110 = vmatpush1.bf16.xpose.msra.mxu0 0
    %1111 = vmatprep.subr.bf16.mxu0 0
    %1112 = vmatpush1.bf16.xpose.msra.mxu0 0
    %1113 = vmatprep.subr.bf16.mxu0 0
    %1114 = vmatpush1.bf16.xpose.msra.mxu0 0
    %1115 = vmatprep.subr.bf16.mxu0 0
    %1116 = vmatpush1.bf16.xpose.msra.mxu0 0
    %1117 = vmatprep.mubr.bf16.mxu0 0
    %1118 = vmatmul.mubr.bf16.gmra.mrb[0].mxu0 %v1080
    %v1119 = vpop.f32.mrb[0].mxu0
    %v1120 = vadd.f32 0.0, %v1119
    %v1121 = vpop.f32.mrb[0].mxu0
    %v1122 = vpop.f32.mrb[0].mxu0
    %v1123 = vpop.f32.mrb[0].mxu0
    %1124 = vdwg.mxu0
    %1126 = vrot.lane.b32.xlu0 %v1075, 96
    %v1127 = vpop.permute.xlu0 %1126
    %v1129 = vsel %vm250, %v1075, 0
    %v1132 = vsel %vm250, %v1127, 0
    %1134 = vmatprep.subr.bf16.mxu0 0
    %1135 = vmatpush1.bf16.xpose.msra.mxu0 %v1132
    %1136 = vmatprep.subr.bf16.mxu0 0
    %1137 = vmatpush1.bf16.xpose.msra.mxu0 0
    %1138 = vmatprep.subr.bf16.mxu0 0
    %1139 = vmatpush1.bf16.xpose.msra.mxu0 0
    %1140 = vmatprep.subr.bf16.mxu0 0
    %1141 = vmatpush1.bf16.xpose.msra.mxu0 0
    %1142 = vmatprep.subr.bf16.mxu0 0
    %1143 = vmatpush1.bf16.xpose.msra.mxu0 0
    %1144 = vmatprep.subr.bf16.mxu0 0
    %1145 = vmatpush1.bf16.xpose.msra.mxu0 0
    %1146 = vmatprep.subr.bf16.mxu0 0
    %1147 = vmatpush1.bf16.xpose.msra.mxu0 0
    %1148 = vmatprep.subr.bf16.mxu0 0
    %1149 = vmatpush1.bf16.xpose.msra.mxu0 0
    %1150 = vmatprep.subr.bf16.mxu0 0
    %1151 = vmatpush1.bf16.xpose.msra.mxu0 0
    %1152 = vmatprep.subr.bf16.mxu0 0
    %1153 = vmatpush1.bf16.xpose.msra.mxu0 0
    %1154 = vmatprep.subr.bf16.mxu0 0
    %1155 = vmatpush1.bf16.xpose.msra.mxu0 0
    %1156 = vmatprep.subr.bf16.mxu0 0
    %1157 = vmatpush1.bf16.xpose.msra.mxu0 0
    %1158 = vmatprep.subr.bf16.mxu0 0
    %1159 = vmatpush1.bf16.xpose.msra.mxu0 0
    %1160 = vmatprep.subr.bf16.mxu0 0
    %1161 = vmatpush1.bf16.xpose.msra.mxu0 0
    %1162 = vmatprep.subr.bf16.mxu0 0
    %1163 = vmatpush1.bf16.xpose.msra.mxu0 0
    %1164 = vmatprep.subr.bf16.mxu0 0
    %1165 = vmatpush1.bf16.xpose.msra.mxu0 0
    %1166 = vmatprep.mubr.bf16.mxu0 0
    %1167 = vmatmul.mubr.bf16.gmra.mrb[0].mxu0 %v1129
    %v1168 = vpop.f32.mrb[0].mxu0
    %v1169 = vadd.f32 0.0, %v1168
    %v1170 = vpop.f32.mrb[0].mxu0
    %v1171 = vpop.f32.mrb[0].mxu0
    %v1172 = vpop.f32.mrb[0].mxu0
    %1173 = vdwg.mxu0
    %v1174 = vmul.f32 %v1120, 0.25
    %v1175 = vmul.f32 %v1169, 0.25
    %v1176 = vadd.f32 %v1174, %v138
    %v1177 = vadd.f32 %v1175, %v139
    %v1178 = vsel %vm350, %v1176, -inf
    %1179 = vmax.xlane.f32.xlu0 %v1178
    %v1180 = vpop.xlane.xlu0 %1179
    %v1181 = vsel %vm350, %v1177, -inf
    %1182 = vmax.xlane.f32.xlu0 %v1181
    %v1183 = vpop.xlane.xlu0 %1182
    %v1184 = vsub.f32 %v1176, %v1180
    %v1185 = vsub.f32 %v1177, %v1183
    %v1186 = vmul.f32 %v1184, 1.442695
    %v1187 = vpow.pop %v1186
    %v1188 = vmul.f32 %v1185, 1.442695
    %v1189 = vpow.pop %v1188
    %v1190 = vsel %vm350, %v1187, 0.0
    %1191 = vadd.xlane.f32.xlu0 %v1190
    %v1192 = vpop.xlane.xlu0 %1191
    %v1193 = vsel %vm350, %v1189, 0.0
    %1194 = vadd.xlane.f32.xlu0 %v1193
    %v1195 = vpop.xlane.xlu0 %1194
    %v1196 = vrcp.pop %v1192
    %v1197 = vmul.f32 %v1187, %v1196
    %v1198 = vrcp.pop %v1195
    %v1199 = vmul.f32 %v1189, %v1198
    %v1200 = vpack.c.bf16 %v1197, %v1197
    %v1201 = vpack.c.bf16 %v1199, %v1199
    %1202 = vrot.lane.b32.xlu0 %v1074, 64
    %v1203 = vpop.permute.xlu0 %1202
    %v1205 = vsel %vm350, %v1200, 0
    %v1208 = vsel %vm380, %v1203, 0
    %1210 = vmatprep.subr.bf16.mxu0 0
    %1211 = vmatpush1.bf16.msra.mxu0 %v1208
    %1212 = vmatprep.subr.bf16.mxu0 0
    %1213 = vmatpush1.bf16.msra.mxu0 0
    %1214 = vmatprep.subr.bf16.mxu0 0
    %1215 = vmatpush1.bf16.msra.mxu0 0
    %1216 = vmatprep.subr.bf16.mxu0 0
    %1217 = vmatpush1.bf16.msra.mxu0 0
    %1218 = vmatprep.subr.bf16.mxu0 0
    %1219 = vmatpush1.bf16.msra.mxu0 0
    %1220 = vmatprep.subr.bf16.mxu0 0
    %1221 = vmatpush1.bf16.msra.mxu0 0
    %1222 = vmatprep.subr.bf16.mxu0 0
    %1223 = vmatpush1.bf16.msra.mxu0 0
    %1224 = vmatprep.subr.bf16.mxu0 0
    %1225 = vmatpush1.bf16.msra.mxu0 0
    %1226 = vmatprep.subr.bf16.mxu0 0
    %1227 = vmatpush1.bf16.msra.mxu0 0
    %1228 = vmatprep.subr.bf16.mxu0 0
    %1229 = vmatpush1.bf16.msra.mxu0 0
    %1230 = vmatprep.subr.bf16.mxu0 0
    %1231 = vmatpush1.bf16.msra.mxu0 0
    %1232 = vmatprep.subr.bf16.mxu0 0
    %1233 = vmatpush1.bf16.msra.mxu0 0
    %1234 = vmatprep.subr.bf16.mxu0 0
    %1235 = vmatpush1.bf16.msra.mxu0 0
    %1236 = vmatprep.subr.bf16.mxu0 0
    %1237 = vmatpush1.bf16.msra.mxu0 0
    %1238 = vmatprep.subr.bf16.mxu0 0
    %1239 = vmatpush1.bf16.msra.mxu0 0
    %1240 = vmatprep.subr.bf16.mxu0 0
    %1241 = vmatpush1.bf16.msra.mxu0 0
    %1242 = vmatprep.mubr.bf16.mxu0 0
    %1243 = vmatmul.mubr.bf16.gmra.mrb[0].mxu0 %v1205
    %v1244 = vpop.f32.mrb[0].mxu0
    %v1245 = vadd.f32 0.0, %v1244
    %v1246 = vpop.f32.mrb[0].mxu0
    %v1247 = vpop.f32.mrb[0].mxu0
    %v1248 = vpop.f32.mrb[0].mxu0
    %1249 = vdwg.mxu0
    %1250 = vrot.lane.b32.xlu0 %v1075, 64
    %v1251 = vpop.permute.xlu0 %1250
    %v1253 = vsel %vm350, %v1201, 0
    %v1256 = vsel %vm380, %v1251, 0
    %1258 = vmatprep.subr.bf16.mxu0 0
    %1259 = vmatpush1.bf16.msra.mxu0 %v1256
    %1260 = vmatprep.subr.bf16.mxu0 0
    %1261 = vmatpush1.bf16.msra.mxu0 0
    %1262 = vmatprep.subr.bf16.mxu0 0
    %1263 = vmatpush1.bf16.msra.mxu0 0
    %1264 = vmatprep.subr.bf16.mxu0 0
    %1265 = vmatpush1.bf16.msra.mxu0 0
    %1266 = vmatprep.subr.bf16.mxu0 0
    %1267 = vmatpush1.bf16.msra.mxu0 0
    %1268 = vmatprep.subr.bf16.mxu0 0
    %1269 = vmatpush1.bf16.msra.mxu0 0
    %1270 = vmatprep.subr.bf16.mxu0 0
    %1271 = vmatpush1.bf16.msra.mxu0 0
    %1272 = vmatprep.subr.bf16.mxu0 0
    %1273 = vmatpush1.bf16.msra.mxu0 0
    %1274 = vmatprep.subr.bf16.mxu0 0
    %1275 = vmatpush1.bf16.msra.mxu0 0
    %1276 = vmatprep.subr.bf16.mxu0 0
    %1277 = vmatpush1.bf16.msra.mxu0 0
    %1278 = vmatprep.subr.bf16.mxu0 0
    %1279 = vmatpush1.bf16.msra.mxu0 0
    %1280 = vmatprep.subr.bf16.mxu0 0
    %1281 = vmatpush1.bf16.msra.mxu0 0
    %1282 = vmatprep.subr.bf16.mxu0 0
    %1283 = vmatpush1.bf16.msra.mxu0 0
    %1284 = vmatprep.subr.bf16.mxu0 0
    %1285 = vmatpush1.bf16.msra.mxu0 0
    %1286 = vmatprep.subr.bf16.mxu0 0
    %1287 = vmatpush1.bf16.msra.mxu0 0
    %1288 = vmatprep.subr.bf16.mxu0 0
    %1289 = vmatpush1.bf16.msra.mxu0 0
    %1290 = vmatprep.mubr.bf16.mxu0 0
    %1291 = vmatmul.mubr.bf16.gmra.mrb[0].mxu0 %v1253
    %v1292 = vpop.f32.mrb[0].mxu0
    %v1293 = vadd.f32 0.0, %v1292
    %v1294 = vpop.f32.mrb[0].mxu0
    %v1295 = vpop.f32.mrb[0].mxu0
    %v1296 = vpop.f32.mrb[0].mxu0
    %1297 = vdwg.mxu0
    %1298 = vrot.lane.b32.xlu0 %v1074, 112
    %v1299 = vpop.permute.xlu0 %1298
    %1300 = vrot.lane.b32.xlu0 %v1074, 80
    %v1301 = vpop.permute.xlu0 %1300
    %v1303 = vsel %vm250, %v1299, 0
    %v1306 = vsel %vm250, %v1301, 0
    %1308 = vmatprep.subr.bf16.mxu0 0
    %1309 = vmatpush1.bf16.xpose.msra.mxu0 %v1306
    %1310 = vmatprep.subr.bf16.mxu0 0
    %1311 = vmatpush1.bf16.xpose.msra.mxu0 0
    %1312 = vmatprep.subr.bf16.mxu0 0
    %1313 = vmatpush1.bf16.xpose.msra.mxu0 0
    %1314 = vmatprep.subr.bf16.mxu0 0
    %1315 = vmatpush1.bf16.xpose.msra.mxu0 0
    %1316 = vmatprep.subr.bf16.mxu0 0
    %1317 = vmatpush1.bf16.xpose.msra.mxu0 0
    %1318 = vmatprep.subr.bf16.mxu0 0
    %1319 = vmatpush1.bf16.xpose.msra.mxu0 0
    %1320 = vmatprep.subr.bf16.mxu0 0
    %1321 = vmatpush1.bf16.xpose.msra.mxu0 0
    %1322 = vmatprep.subr.bf16.mxu0 0
    %1323 = vmatpush1.bf16.xpose.msra.mxu0 0
    %1324 = vmatprep.subr.bf16.mxu0 0
    %1325 = vmatpush1.bf16.xpose.msra.mxu0 0
    %1326 = vmatprep.subr.bf16.mxu0 0
    %1327 = vmatpush1.bf16.xpose.msra.mxu0 0
    %1328 = vmatprep.subr.bf16.mxu0 0
    %1329 = vmatpush1.bf16.xpose.msra.mxu0 0
    %1330 = vmatprep.subr.bf16.mxu0 0
    %1331 = vmatpush1.bf16.xpose.msra.mxu0 0
    %1332 = vmatprep.subr.bf16.mxu0 0
    %1333 = vmatpush1.bf16.xpose.msra.mxu0 0
    %1334 = vmatprep.subr.bf16.mxu0 0
    %1335 = vmatpush1.bf16.xpose.msra.mxu0 0
    %1336 = vmatprep.subr.bf16.mxu0 0
    %1337 = vmatpush1.bf16.xpose.msra.mxu0 0
    %1338 = vmatprep.subr.bf16.mxu0 0
    %1339 = vmatpush1.bf16.xpose.msra.mxu0 0
    %1340 = vmatprep.mubr.bf16.mxu0 0
    %1341 = vmatmul.mubr.bf16.gmra.mrb[0].mxu0 %v1303
    %v1342 = vpop.f32.mrb[0].mxu0
    %v1343 = vadd.f32 0.0, %v1342
    %v1344 = vpop.f32.mrb[0].mxu0
    %v1345 = vpop.f32.mrb[0].mxu0
    %v1346 = vpop.f32.mrb[0].mxu0
    %1347 = vdwg.mxu0
    %1348 = vrot.lane.b32.xlu0 %v1075, 112
    %v1349 = vpop.permute.xlu0 %1348
    %1350 = vrot.lane.b32.xlu0 %v1075, 80
    %v1351 = vpop.permute.xlu0 %1350
    %v1353 = vsel %vm250, %v1349, 0
    %v1356 = vsel %vm250, %v1351, 0
    %1358 = vmatprep.subr.bf16.mxu0 0
    %1359 = vmatpush1.bf16.xpose.msra.mxu0 %v1356
    %1360 = vmatprep.subr.bf16.mxu0 0
    %1361 = vmatpush1.bf16.xpose.msra.mxu0 0
    %1362 = vmatprep.subr.bf16.mxu0 0
    %1363 = vmatpush1.bf16.xpose.msra.mxu0 0
    %1364 = vmatprep.subr.bf16.mxu0 0
    %1365 = vmatpush1.bf16.xpose.msra.mxu0 0
    %1366 = vmatprep.subr.bf16.mxu0 0
    %1367 = vmatpush1.bf16.xpose.msra.mxu0 0
    %1368 = vmatprep.subr.bf16.mxu0 0
    %1369 = vmatpush1.bf16.xpose.msra.mxu0 0
    %1370 = vmatprep.subr.bf16.mxu0 0
    %1371 = vmatpush1.bf16.xpose.msra.mxu0 0
    %1372 = vmatprep.subr.bf16.mxu0 0
    %1373 = vmatpush1.bf16.xpose.msra.mxu0 0
    %1374 = vmatprep.subr.bf16.mxu0 0
    %1375 = vmatpush1.bf16.xpose.msra.mxu0 0
    %1376 = vmatprep.subr.bf16.mxu0 0
    %1377 = vmatpush1.bf16.xpose.msra.mxu0 0
    %1378 = vmatprep.subr.bf16.mxu0 0
    %1379 = vmatpush1.bf16.xpose.msra.mxu0 0
    %1380 = vmatprep.subr.bf16.mxu0 0
    %1381 = vmatpush1.bf16.xpose.msra.mxu0 0
    %1382 = vmatprep.subr.bf16.mxu0 0
    %1383 = vmatpush1.bf16.xpose.msra.mxu0 0
    %1384 = vmatprep.subr.bf16.mxu0 0
    %1385 = vmatpush1.bf16.xpose.msra.mxu0 0
    %1386 = vmatprep.subr.bf16.mxu0 0
    %1387 = vmatpush1.bf16.xpose.msra.mxu0 0
    %1388 = vmatprep.subr.bf16.mxu0 0
    %1389 = vmatpush1.bf16.xpose.msra.mxu0 0
    %1390 = vmatprep.mubr.bf16.mxu0 0
    %1391 = vmatmul.mubr.bf16.gmra.mrb[0].mxu0 %v1353
    %v1392 = vpop.f32.mrb[0].mxu0
    %v1393 = vadd.f32 0.0, %v1392
    %v1394 = vpop.f32.mrb[0].mxu0
    %v1395 = vpop.f32.mrb[0].mxu0
    %v1396 = vpop.f32.mrb[0].mxu0
    %1397 = vdwg.mxu0
    %v1398 = vmul.f32 %v1343, 0.25
    %v1399 = vmul.f32 %v1393, 0.25
    %v1400 = vadd.f32 %v1398, %v138
    %v1401 = vadd.f32 %v1399, %v139
    %v1402 = vsel %vm350, %v1400, -inf
    %1403 = vmax.xlane.f32.xlu0 %v1402
    %v1404 = vpop.xlane.xlu0 %1403
    %v1405 = vsel %vm350, %v1401, -inf
    %1406 = vmax.xlane.f32.xlu0 %v1405
    %v1407 = vpop.xlane.xlu0 %1406
    %v1408 = vsub.f32 %v1400, %v1404
    %v1409 = vsub.f32 %v1401, %v1407
    %v1410 = vmul.f32 %v1408, 1.442695
    %v1411 = vpow.pop %v1410
    %v1412 = vmul.f32 %v1409, 1.442695
    %v1413 = vpow.pop %v1412
    %v1414 = vsel %vm350, %v1411, 0.0
    %1415 = vadd.xlane.f32.xlu0 %v1414
    %v1416 = vpop.xlane.xlu0 %1415
    %v1417 = vsel %vm350, %v1413, 0.0
    %1418 = vadd.xlane.f32.xlu0 %v1417
    %v1419 = vpop.xlane.xlu0 %1418
    %v1420 = vrcp.pop %v1416
    %v1421 = vmul.f32 %v1411, %v1420
    %v1422 = vrcp.pop %v1419
    %v1423 = vmul.f32 %v1413, %v1422
    %v1424 = vpack.c.bf16 %v1421, %v1421
    %v1425 = vpack.c.bf16 %v1423, %v1423
    %1426 = vrot.lane.b32.xlu0 %v1074, 48
    %v1427 = vpop.permute.xlu0 %1426
    %v1429 = vsel %vm350, %v1424, 0
    %v1432 = vsel %vm380, %v1427, 0
    %1434 = vmatprep.subr.bf16.mxu0 0
    %1435 = vmatpush1.bf16.msra.mxu0 %v1432
    %1436 = vmatprep.subr.bf16.mxu0 0
    %1437 = vmatpush1.bf16.msra.mxu0 0
    %1438 = vmatprep.subr.bf16.mxu0 0
    %1439 = vmatpush1.bf16.msra.mxu0 0
    %1440 = vmatprep.subr.bf16.mxu0 0
    %1441 = vmatpush1.bf16.msra.mxu0 0
    %1442 = vmatprep.subr.bf16.mxu0 0
    %1443 = vmatpush1.bf16.msra.mxu0 0
    %1444 = vmatprep.subr.bf16.mxu0 0
    %1445 = vmatpush1.bf16.msra.mxu0 0
    %1446 = vmatprep.subr.bf16.mxu0 0
    %1447 = vmatpush1.bf16.msra.mxu0 0
    %1448 = vmatprep.subr.bf16.mxu0 0
    %1449 = vmatpush1.bf16.msra.mxu0 0
    %1450 = vmatprep.subr.bf16.mxu0 0
    %1451 = vmatpush1.bf16.msra.mxu0 0
    %1452 = vmatprep.subr.bf16.mxu0 0
    %1453 = vmatpush1.bf16.msra.mxu0 0
    %1454 = vmatprep.subr.bf16.mxu0 0
    %1455 = vmatpush1.bf16.msra.mxu0 0
    %1456 = vmatprep.subr.bf16.mxu0 0
    %1457 = vmatpush1.bf16.msra.mxu0 0
    %1458 = vmatprep.subr.bf16.mxu0 0
    %1459 = vmatpush1.bf16.msra.mxu0 0
    %1460 = vmatprep.subr.bf16.mxu0 0
    %1461 = vmatpush1.bf16.msra.mxu0 0
    %1462 = vmatprep.subr.bf16.mxu0 0
    %1463 = vmatpush1.bf16.msra.mxu0 0
    %1464 = vmatprep.subr.bf16.mxu0 0
    %1465 = vmatpush1.bf16.msra.mxu0 0
    %1466 = vmatprep.mubr.bf16.mxu0 0
    %1467 = vmatmul.mubr.bf16.gmra.mrb[0].mxu0 %v1429
    %v1468 = vpop.f32.mrb[0].mxu0
    %v1469 = vadd.f32 0.0, %v1468
    %v1470 = vpop.f32.mrb[0].mxu0
    %v1471 = vpop.f32.mrb[0].mxu0
    %v1472 = vpop.f32.mrb[0].mxu0
    %1473 = vdwg.mxu0
    %1474 = vrot.lane.b32.xlu0 %v1075, 48
    %v1475 = vpop.permute.xlu0 %1474
    %v1477 = vsel %vm350, %v1425, 0
    %v1480 = vsel %vm380, %v1475, 0
    %1482 = vmatprep.subr.bf16.mxu0 0
    %1483 = vmatpush1.bf16.msra.mxu0 %v1480
    %1484 = vmatprep.subr.bf16.mxu0 0
    %1485 = vmatpush1.bf16.msra.mxu0 0
    %1486 = vmatprep.subr.bf16.mxu0 0
    %1487 = vmatpush1.bf16.msra.mxu0 0
    %1488 = vmatprep.subr.bf16.mxu0 0
    %1489 = vmatpush1.bf16.msra.mxu0 0
    %1490 = vmatprep.subr.bf16.mxu0 0
    %1491 = vmatpush1.bf16.msra.mxu0 0
    %1492 = vmatprep.subr.bf16.mxu0 0
    %1493 = vmatpush1.bf16.msra.mxu0 0
    %1494 = vmatprep.subr.bf16.mxu0 0
    %1495 = vmatpush1.bf16.msra.mxu0 0
    %1496 = vmatprep.subr.bf16.mxu0 0
    %1497 = vmatpush1.bf16.msra.mxu0 0
    %1498 = vmatprep.subr.bf16.mxu0 0
    %1499 = vmatpush1.bf16.msra.mxu0 0
    %1500 = vmatprep.subr.bf16.mxu0 0
    %1501 = vmatpush1.bf16.msra.mxu0 0
    %1502 = vmatprep.subr.bf16.mxu0 0
    %1503 = vmatpush1.bf16.msra.mxu0 0
    %1504 = vmatprep.subr.bf16.mxu0 0
    %1505 = vmatpush1.bf16.msra.mxu0 0
    %1506 = vmatprep.subr.bf16.mxu0 0
    %1507 = vmatpush1.bf16.msra.mxu0 0
    %1508 = vmatprep.subr.bf16.mxu0 0
    %1509 = vmatpush1.bf16.msra.mxu0 0
    %1510 = vmatprep.subr.bf16.mxu0 0
    %1511 = vmatpush1.bf16.msra.mxu0 0
    %1512 = vmatprep.subr.bf16.mxu0 0
    %1513 = vmatpush1.bf16.msra.mxu0 0
    %1514 = vmatprep.mubr.bf16.mxu0 0
    %1515 = vmatmul.mubr.bf16.gmra.mrb[0].mxu0 %v1477
    %v1516 = vpop.f32.mrb[0].mxu0
    %v1517 = vadd.f32 0.0, %v1516
    %v1518 = vpop.f32.mrb[0].mxu0
    %v1519 = vpop.f32.mrb[0].mxu0
    %v1520 = vpop.f32.mrb[0].mxu0
    %1521 = vdwg.mxu0
    %1524 = vrot.lane.b32.xlu0 %v1469, 16
    %v1525 = vpop.permute.xlu0 %1524
    %1526 = vrot.lane.b32.xlu0 %v1517, 16
    %v1527 = vpop.permute.xlu0 %1526
    %v1530 = vsel %vm250, %v1245, %v1525
    %v1531 = vsel %vm250, %v1293, %v1527
    %s1532 = scalar_lea.vmem %s15, 16
    %v1533 = vld [vmem:[%s1532] sm:$0xf]
    %v1534 = vld [vmem:[%s1532 + $0x4] sm:$0xf]
    %v1535 = vld [vmem:[%s1532 + $0x8] sm:$0xf]
    %v1536 = vld [vmem:[%s1532 + $0xc] sm:$0xf]
    %v1537 = vpack.c.bf16 %v1531, %v1530
    %v1542 = vunpack.c.l.b16 %v1533
    %v1543 = vunpack.c.l.b16 %v1534
    %v1544 = vunpack.c.l.b16 %v1535
    %v1545 = vunpack.c.l.b16 %v1536
    %v1546 = vpack.c.b16 %v1543, %v1542
    %v1547 = vpack.c.b16 %v1545, %v1544
    %v1551 = vsel %vm140, %v1537, 0
    %1553 = vmatprep.subr.bf16.mxu0 0
    %1554 = vmatpush1.bf16.msra.mxu0 %v1546
    %1555 = vmatprep.subr.bf16.mxu0 0
    %1556 = vmatpush1.bf16.msra.mxu0 %v1547
    %1557 = vmatprep.subr.bf16.mxu0 0
    %1558 = vmatpush1.bf16.msra.mxu0 0
    %1559 = vmatprep.subr.bf16.mxu0 0
    %1560 = vmatpush1.bf16.msra.mxu0 0
    %1561 = vmatprep.subr.bf16.mxu0 0
    %1562 = vmatpush1.bf16.msra.mxu0 0
    %1563 = vmatprep.subr.bf16.mxu0 0
    %1564 = vmatpush1.bf16.msra.mxu0 0
    %1565 = vmatprep.subr.bf16.mxu0 0
    %1566 = vmatpush1.bf16.msra.mxu0 0
    %1567 = vmatprep.subr.bf16.mxu0 0
    %1568 = vmatpush1.bf16.msra.mxu0 0
    %1569 = vmatprep.subr.bf16.mxu0 0
    %1570 = vmatpush1.bf16.msra.mxu0 0
    %1571 = vmatprep.subr.bf16.mxu0 0
    %1572 = vmatpush1.bf16.msra.mxu0 0
    %1573 = vmatprep.subr.bf16.mxu0 0
    %1574 = vmatpush1.bf16.msra.mxu0 0
    %1575 = vmatprep.subr.bf16.mxu0 0
    %1576 = vmatpush1.bf16.msra.mxu0 0
    %1577 = vmatprep.subr.bf16.mxu0 0
    %1578 = vmatpush1.bf16.msra.mxu0 0
    %1579 = vmatprep.subr.bf16.mxu0 0
    %1580 = vmatpush1.bf16.msra.mxu0 0
    %1581 = vmatprep.subr.bf16.mxu0 0
    %1582 = vmatpush1.bf16.msra.mxu0 0
    %1583 = vmatprep.subr.bf16.mxu0 0
    %1584 = vmatpush1.bf16.msra.mxu0 0
    %1585 = vmatprep.mubr.bf16.mxu0 0
    %1586 = vmatmul.mubr.bf16.gmra.mrb[0].mxu0 %v1551
    %v1587 = vpop.f32.mrb[0].mxu0
    %v1588 = vadd.f32 %v1010, %v1587
    %v1589 = vpop.f32.mrb[0].mxu0
    %v1590 = vpop.f32.mrb[0].mxu0
    %v1591 = vadd.f32 %v1011, %v1590
    %v1592 = vpop.f32.mrb[0].mxu0
    %1593 = vdwg.mxu0
    %s1594 = scalar_lea.vmem %s16, 1
    %v1595 = vld [vmem:[%s1594] sm:$0x1]
    %s1596 = scalar_lea.vmem %s17, 1
    %v1597 = vld [vmem:[%s1596] sm:$0x1]
    %v1598 = vsel %vm140, %v1588, 0.0
    %1599 = vadd.xlane.f32.xlu0 %v1598
    %v1600 = vpop.xlane.xlu0 %1599
    %v1601 = vsel %vm140, %v1591, 0.0
    %1602 = vadd.xlane.f32.xlu0 %v1601
    %v1603 = vpop.xlane.xlu0 %1602
    %v1604 = vmul.f32 %v1600, %v147
    %v1605 = vmul.f32 %v1603, %v147
    %v1606 = vsub.f32 %v1588, %v1604
    %v1607 = vsub.f32 %v1591, %v1605
    %v1608 = vmul.f32 %v1606, %v1606
    %v1609 = vmul.f32 %v1607, %v1607
    %v1610 = vsel %vm140, %v1608, 0.0
    %1611 = vadd.xlane.f32.xlu0 %v1610
    %v1612 = vpop.xlane.xlu0 %1611
    %v1613 = vsel %vm140, %v1609, 0.0
    %1614 = vadd.xlane.f32.xlu0 %v1613
    %v1615 = vpop.xlane.xlu0 %1614
    %v1616 = vmul.f32 %v1612, %v147
    %v1617 = vmul.f32 %v1615, %v147
    %v1618 = vadd.f32 %v1616, 1e-06
    %v1619 = vadd.f32 %v1617, 1e-06
    %v1620 = vrsqrt.pop %v1618
    %v1621 = vrsqrt.pop %v1619
    %v1622 = vmul.f32 %v1606, %v1620
    %v1623 = vmul.f32 %v1607, %v1621
    %v1625 = vlaneseq
    %v1626 = vshrl.u32 %v1625, 7
    %v1627 = vsub.s32 0, %v1626
    %v1628 = vrot.slane %v1595, %v1627
    %v1630 = vmul.f32 %v1622, %v1628
    %v1631 = vmul.f32 %v1623, %v1628
    %v1633 = vlaneseq
    %v1634 = vshrl.u32 %v1633, 7
    %v1635 = vsub.s32 0, %v1634
    %v1636 = vrot.slane %v1597, %v1635
    %v1638 = vadd.f32 %v1630, %v1636
    %v1639 = vadd.f32 %v1631, %v1636
    %s1640 = scalar_lea.vmem %s18, 16
    %v1641 = vld [vmem:[%s1640] sm:$0xf]
    %v1642 = vld [vmem:[%s1640 + $0x4] sm:$0xf]
    %v1643 = vld [vmem:[%s1640 + $0x8] sm:$0xf]
    %v1644 = vld [vmem:[%s1640 + $0xc] sm:$0xf]
    %v1645 = vpack.c.bf16 %v1639, %v1638
    %s1646 = scalar_lea.vmem %s19, 1
    %v1647 = vld [vmem:[%s1646] sm:$0x1]
    %v1649 = vlaneseq
    %v1650 = vshrl.u32 %v1649, 7
    %v1651 = vsub.s32 0, %v1650
    %v1652 = vrot.slane %v1647, %v1651
    %v1658 = vunpack.c.l.b16 %v1641
    %v1659 = vunpack.c.l.b16 %v1642
    %v1660 = vunpack.c.l.b16 %v1643
    %v1661 = vunpack.c.l.b16 %v1644
    %v1662 = vpack.c.b16 %v1659, %v1658
    %v1663 = vpack.c.b16 %v1661, %v1660
    %v1667 = vsel %vm140, %v1645, 0
    %1669 = vmatprep.subr.bf16.mxu0 0
    %1670 = vmatpush1.bf16.msra.mxu0 %v1662
    %1671 = vmatprep.subr.bf16.mxu0 0
    %1672 = vmatpush1.bf16.msra.mxu0 %v1663
    %1673 = vmatprep.subr.bf16.mxu0 0
    %1674 = vmatpush1.bf16.msra.mxu0 0
    %1675 = vmatprep.subr.bf16.mxu0 0
    %1676 = vmatpush1.bf16.msra.mxu0 0
    %1677 = vmatprep.subr.bf16.mxu0 0
    %1678 = vmatpush1.bf16.msra.mxu0 0
    %1679 = vmatprep.subr.bf16.mxu0 0
    %1680 = vmatpush1.bf16.msra.mxu0 0
    %1681 = vmatprep.subr.bf16.mxu0 0
    %1682 = vmatpush1.bf16.msra.mxu0 0
    %1683 = vmatprep.subr.bf16.mxu0 0
    %1684 = vmatpush1.bf16.msra.mxu0 0
    %1685 = vmatprep.subr.bf16.mxu0 0
    %1686 = vmatpush1.bf16.msra.mxu0 0
    %1687 = vmatprep.subr.bf16.mxu0 0
    %1688 = vmatpush1.bf16.msra.mxu0 0
    %1689 = vmatprep.subr.bf16.mxu0 0
    %1690 = vmatpush1.bf16.msra.mxu0 0
    %1691 = vmatprep.subr.bf16.mxu0 0
    %1692 = vmatpush1.bf16.msra.mxu0 0
    %1693 = vmatprep.subr.bf16.mxu0 0
    %1694 = vmatpush1.bf16.msra.mxu0 0
    %1695 = vmatprep.subr.bf16.mxu0 0
    %1696 = vmatpush1.bf16.msra.mxu0 0
    %1697 = vmatprep.subr.bf16.mxu0 0
    %1698 = vmatpush1.bf16.msra.mxu0 0
    %1699 = vmatprep.subr.bf16.mxu0 0
    %1700 = vmatpush1.bf16.msra.mxu0 0
    %1701 = vmatprep.mubr.bf16.mxu0 0
    %1702 = vmatmul.mubr.bf16.gmra.mrb[0].mxu0 %v1667
    %v1703 = vpop.f32.mrb[0].mxu0
    %v1704 = vadd.f32 %v1652, %v1703
    %v1705 = vpop.f32.mrb[0].mxu0
    %v1706 = vpop.f32.mrb[0].mxu0
    %v1707 = vadd.f32 %v1652, %v1706
    %v1708 = vpop.f32.mrb[0].mxu0
    %1709 = vdwg.mxu0
    %v1710 = vmax.f32 %v1704, 0.0
    %v1711 = vmax.f32 %v1707, 0.0
    %s1712 = scalar_lea.vmem %s20, 32
    %v1713 = vld [vmem:[%s1712] sm:$0xf]
    %v1714 = vld [vmem:[%s1712 + $0x4] sm:$0xf]
    %v1715 = vld [vmem:[%s1712 + $0x8] sm:$0xf]
    %v1716 = vld [vmem:[%s1712 + $0xc] sm:$0xf]
    %v1717 = vld [vmem:[%s1712 + $0x10] sm:$0xf]
    %v1718 = vld [vmem:[%s1712 + $0x14] sm:$0xf]
    %v1719 = vld [vmem:[%s1712 + $0x18] sm:$0xf]
    %v1720 = vld [vmem:[%s1712 + $0x1c] sm:$0xf]
    %v1721 = vpack.c.bf16 %v1711, %v1710
    %s1722 = scalar_lea.vmem %s21, 1
    %v1723 = vld [vmem:[%s1722] sm:$0x1]
    %v1725 = vlaneseq
    %v1726 = vshrl.u32 %v1725, 7
    %v1727 = vsub.s32 0, %v1726
    %v1728 = vrot.slane %v1723, %v1727
    %v1738 = vunpack.c.l.b16 %v1713
    %v1739 = vunpack.c.l.b16 %v1714
    %v1740 = vunpack.c.l.b16 %v1715
    %v1741 = vunpack.c.l.b16 %v1716
    %v1742 = vunpack.c.l.b16 %v1717
    %v1743 = vunpack.c.l.b16 %v1718
    %v1744 = vunpack.c.l.b16 %v1719
    %v1745 = vunpack.c.l.b16 %v1720
    %v1746 = vpack.c.b16 %v1739, %v1738
    %v1747 = vpack.c.b16 %v1741, %v1740
    %v1748 = vpack.c.b16 %v1743, %v1742
    %v1749 = vpack.c.b16 %v1745, %v1744
    %v1755 = vsel %vm921, %v1721, 0
    %1757 = vmatprep.subr.bf16.mxu0 0
    %1758 = vmatpush1.bf16.msra.mxu0 %v1746
    %1759 = vmatprep.subr.bf16.mxu0 0
    %1760 = vmatpush1.bf16.msra.mxu0 %v1747
    %1761 = vmatprep.subr.bf16.mxu0 0
    %1762 = vmatpush1.bf16.msra.mxu0 %v1748
    %1763 = vmatprep.subr.bf16.mxu0 0
    %1764 = vmatpush1.bf16.msra.mxu0 %v1749
    %1765 = vmatprep.subr.bf16.mxu0 0
    %1766 = vmatpush1.bf16.msra.mxu0 0
    %1767 = vmatprep.subr.bf16.mxu0 0
    %1768 = vmatpush1.bf16.msra.mxu0 0
    %1769 = vmatprep.subr.bf16.mxu0 0
    %1770 = vmatpush1.bf16.msra.mxu0 0
    %1771 = vmatprep.subr.bf16.mxu0 0
    %1772 = vmatpush1.bf16.msra.mxu0 0
    %1773 = vmatprep.subr.bf16.mxu0 0
    %1774 = vmatpush1.bf16.msra.mxu0 0
    %1775 = vmatprep.subr.bf16.mxu0 0
    %1776 = vmatpush1.bf16.msra.mxu0 0
    %1777 = vmatprep.subr.bf16.mxu0 0
    %1778 = vmatpush1.bf16.msra.mxu0 0
    %1779 = vmatprep.subr.bf16.mxu0 0
    %1780 = vmatpush1.bf16.msra.mxu0 0
    %1781 = vmatprep.subr.bf16.mxu0 0
    %1782 = vmatpush1.bf16.msra.mxu0 0
    %1783 = vmatprep.subr.bf16.mxu0 0
    %1784 = vmatpush1.bf16.msra.mxu0 0
    %1785 = vmatprep.subr.bf16.mxu0 0
    %1786 = vmatpush1.bf16.msra.mxu0 0
    %1787 = vmatprep.subr.bf16.mxu0 0
    %1788 = vmatpush1.bf16.msra.mxu0 0
    %1789 = vmatprep.mubr.bf16.mxu0 0
    %1790 = vmatmul.mubr.bf16.gmra.mrb[0].mxu0 %v1755
    %v1791 = vpop.f32.mrb[0].mxu0
    %v1792 = vadd.f32 %v1728, %v1791
    %v1793 = vpop.f32.mrb[0].mxu0
    %v1794 = vpop.f32.mrb[0].mxu0
    %v1795 = vadd.f32 %v1728, %v1794
    %v1796 = vpop.f32.mrb[0].mxu0
    %1797 = vdwg.mxu0
    %v1798 = vadd.f32 %v1792, %v1638
    %v1799 = vadd.f32 %v1795, %v1639
    %s1800 = scalar_lea.vmem %s22, 1
    %v1801 = vld [vmem:[%s1800] sm:$0x1]
    %s1802 = scalar_lea.vmem %s23, 1
    %v1803 = vld [vmem:[%s1802] sm:$0x1]
    %v1804 = vsel %vm140, %v1798, 0.0
    %1805 = vadd.xlane.f32.xlu0 %v1804
    %v1806 = vpop.xlane.xlu0 %1805
    %v1807 = vsel %vm140, %v1799, 0.0
    %1808 = vadd.xlane.f32.xlu0 %v1807
    %v1809 = vpop.xlane.xlu0 %1808
    %v1810 = vmul.f32 %v1806, %v147
    %v1811 = vmul.f32 %v1809, %v147
    %v1812 = vsub.f32 %v1798, %v1810
    %v1813 = vsub.f32 %v1799, %v1811
    %v1814 = vmul.f32 %v1812, %v1812
    %v1815 = vmul.f32 %v1813, %v1813
    %v1816 = vsel %vm140, %v1814, 0.0
    %1817 = vadd.xlane.f32.xlu0 %v1816
    %v1818 = vpop.xlane.xlu0 %1817
    %v1819 = vsel %vm140, %v1815, 0.0
    %1820 = vadd.xlane.f32.xlu0 %v1819
    %v1821 = vpop.xlane.xlu0 %1820
    %v1822 = vmul.f32 %v1818, %v147
    %v1823 = vmul.f32 %v1821, %v147
    %v1824 = vadd.f32 %v1822, 1e-06
    %v1825 = vadd.f32 %v1823, 1e-06
    %v1826 = vrsqrt.pop %v1824
    %v1827 = vrsqrt.pop %v1825
    %v1828 = vmul.f32 %v1812, %v1826
    %v1829 = vmul.f32 %v1813, %v1827
    %v1831 = vlaneseq
    %v1832 = vshrl.u32 %v1831, 7
    %v1833 = vsub.s32 0, %v1832
    %v1834 = vrot.slane %v1801, %v1833
    %v1836 = vmul.f32 %v1828, %v1834
    %v1837 = vmul.f32 %v1829, %v1834
    %v1839 = vlaneseq
    %v1840 = vshrl.u32 %v1839, 7
    %v1841 = vsub.s32 0, %v1840
    %v1842 = vrot.slane %v1803, %v1841
    %v1844 = vadd.f32 %v1836, %v1842
    %v1845 = vadd.f32 %v1837, %v1842
    %1846 = vst.msk [vmem:[#allocation2] sm:$0xff] %vm140, %v1844
    %1847 = vst.msk [vmem:[#allocation2 + $0x8] sm:$0xff] %vm140, %v1845
    %s1848 = sld [smem:[#allocation4]]
    %s1849 = scalar_lea.vmem [#allocation2], %s1848
    %v1850 = vld [vmem:[%s1849] sm:$0x1]
    %s1851 = sld [smem:[#allocation4 + $0x1]]
    %s1852 = scalar_lea.vmem [#allocation2], %s1851
    %v1853 = vld [vmem:[%s1852] sm:$0x1]
    %v1855 = vrot.slane %v1853, 7
    %vm1857 = vcmask 1040384
    %v1858 = vsel %vm1857, %v1850, %v1855
    %v1859 = vld [vmem:[%s9] sm:$0xf]
    %v1860 = vld [vmem:[%s9 + $0x4] sm:$0xf]
    %v1861 = vld [vmem:[%s9 + $0x8] sm:$0xf]
    %v1862 = vld [vmem:[%s9 + $0xc] sm:$0xf]
    %v1863 = vpack.c.bf16 %v1858, %v1858
    %v1868 = vunpack.c.l.b16 %v1859
    %v1869 = vunpack.c.l.b16 %v1860
    %v1870 = vunpack.c.l.b16 %v1861
    %v1871 = vunpack.c.l.b16 %v1862
    %v1872 = vpack.c.b16 %v1869, %v1868
    %v1873 = vpack.c.b16 %v1871, %v1870
    %v1877 = vsel %vm140, %v1863, 0
    %1879 = vmatprep.subr.bf16.mxu0 0
    %1880 = vmatpush1.bf16.msra.mxu0 %v1872
    %1881 = vmatprep.subr.bf16.mxu0 0
    %1882 = vmatpush1.bf16.msra.mxu0 %v1873
    %1883 = vmatprep.subr.bf16.mxu0 0
    %1884 = vmatpush1.bf16.msra.mxu0 0
    %1885 = vmatprep.subr.bf16.mxu0 0
    %1886 = vmatpush1.bf16.msra.mxu0 0
    %1887 = vmatprep.subr.bf16.mxu0 0
    %1888 = vmatpush1.bf16.msra.mxu0 0
    %1889 = vmatprep.subr.bf16.mxu0 0
    %1890 = vmatpush1.bf16.msra.mxu0 0
    %1891 = vmatprep.subr.bf16.mxu0 0
    %1892 = vmatpush1.bf16.msra.mxu0 0
    %1893 = vmatprep.subr.bf16.mxu0 0
    %1894 = vmatpush1.bf16.msra.mxu0 0
    %1895 = vmatprep.subr.bf16.mxu0 0
    %1896 = vmatpush1.bf16.msra.mxu0 0
    %1897 = vmatprep.subr.bf16.mxu0 0
    %1898 = vmatpush1.bf16.msra.mxu0 0
    %1899 = vmatprep.subr.bf16.mxu0 0
    %1900 = vmatpush1.bf16.msra.mxu0 0
    %1901 = vmatprep.subr.bf16.mxu0 0
    %1902 = vmatpush1.bf16.msra.mxu0 0
    %1903 = vmatprep.subr.bf16.mxu0 0
    %1904 = vmatpush1.bf16.msra.mxu0 0
    %1905 = vmatprep.subr.bf16.mxu0 0
    %1906 = vmatpush1.bf16.msra.mxu0 0
    %1907 = vmatprep.subr.bf16.mxu0 0
    %1908 = vmatpush1.bf16.msra.mxu0 0
    %1909 = vmatprep.subr.bf16.mxu0 0
    %1910 = vmatpush1.bf16.msra.mxu0 0
    %1911 = vmatprep.mubr.bf16.mxu0 0
    %1912 = vmatmul.mubr.bf16.gmra.mrb[0].mxu0 %v1877
    %v1913 = vpop.f32.mrb[0].mxu0
    %v1914 = vadd.f32 0.0, %v1913
    %v1915 = vpop.f32.mrb[0].mxu0
    %v1916 = vpop.f32.mrb[0].mxu0
    %v1917 = vpop.f32.mrb[0].mxu0
    %1918 = vdwg.mxu0
    %v1919 = vld [vmem:[%s10] sm:$0xf]
    %v1920 = vld [vmem:[%s10 + $0x4] sm:$0xf]
    %v1921 = vld [vmem:[%s10 + $0x8] sm:$0xf]
    %v1922 = vld [vmem:[%s10 + $0xc] sm:$0xf]
    %v1927 = vunpack.c.l.b16 %v1919
    %v1928 = vunpack.c.l.b16 %v1920
    %v1929 = vunpack.c.l.b16 %v1921
    %v1930 = vunpack.c.l.b16 %v1922
    %v1931 = vpack.c.b16 %v1928, %v1927
    %v1932 = vpack.c.b16 %v1930, %v1929
    %1935 = vmatprep.subr.bf16.mxu0 0
    %1936 = vmatpush1.bf16.msra.mxu0 %v1931
    %1937 = vmatprep.subr.bf16.mxu0 0
    %1938 = vmatpush1.bf16.msra.mxu0 %v1932
    %1939 = vmatprep.subr.bf16.mxu0 0
    %1940 = vmatpush1.bf16.msra.mxu0 0
    %1941 = vmatprep.subr.bf16.mxu0 0
    %1942 = vmatpush1.bf16.msra.mxu0 0
    %1943 = vmatprep.subr.bf16.mxu0 0
    %1944 = vmatpush1.bf16.msra.mxu0 0
    %1945 = vmatprep.subr.bf16.mxu0 0
    %1946 = vmatpush1.bf16.msra.mxu0 0
    %1947 = vmatprep.subr.bf16.mxu0 0
    %1948 = vmatpush1.bf16.msra.mxu0 0
    %1949 = vmatprep.subr.bf16.mxu0 0
    %1950 = vmatpush1.bf16.msra.mxu0 0
    %1951 = vmatprep.subr.bf16.mxu0 0
    %1952 = vmatpush1.bf16.msra.mxu0 0
    %1953 = vmatprep.subr.bf16.mxu0 0
    %1954 = vmatpush1.bf16.msra.mxu0 0
    %1955 = vmatprep.subr.bf16.mxu0 0
    %1956 = vmatpush1.bf16.msra.mxu0 0
    %1957 = vmatprep.subr.bf16.mxu0 0
    %1958 = vmatpush1.bf16.msra.mxu0 0
    %1959 = vmatprep.subr.bf16.mxu0 0
    %1960 = vmatpush1.bf16.msra.mxu0 0
    %1961 = vmatprep.subr.bf16.mxu0 0
    %1962 = vmatpush1.bf16.msra.mxu0 0
    %1963 = vmatprep.subr.bf16.mxu0 0
    %1964 = vmatpush1.bf16.msra.mxu0 0
    %1965 = vmatprep.subr.bf16.mxu0 0
    %1966 = vmatpush1.bf16.msra.mxu0 0
    %1967 = vmatprep.mubr.bf16.mxu0 0
    %1968 = vmatmul.mubr.bf16.gmra.mrb[0].mxu0 %v1877
    %v1969 = vpop.f32.mrb[0].mxu0
    %v1970 = vadd.f32 0.0, %v1969
    %v1971 = vpop.f32.mrb[0].mxu0
    %v1972 = vpop.f32.mrb[0].mxu0
    %v1973 = vpop.f32.mrb[0].mxu0
    %1974 = vdwg.mxu0
    %v1975 = vld [vmem:[%s6] sm:$0x3]
    %v1976 = vmul.f32 %v1970, 0.5
    %v1977 = vmul.f32 %v1976, 1.442695
    %v1978 = vpow.pop %v1977
    %v1979 = vmul.f32 %v1975, %v1978
    %v1980 = vadd.f32 %v1979, %v1914
    %v1981 = vld [vmem:[%s11] sm:$0xf]
    %v1982 = vld [vmem:[%s11 + $0x4] sm:$0xf]
    %v1983 = vpack.c.bf16 %v1980, %v1980
    %v1984 = vld [vmem:[%s12] sm:$0x1]
    %v1986 = vlaneseq
    %v1987 = vshrl.u32 %v1986, 7
    %v1988 = vsub.s32 0, %v1987
    %v1989 = vrot.slane %v1984, %v1988
    %v1993 = vunpack.c.l.b16 %v1981
    %v1994 = vunpack.c.l.b16 %v1982
    %v1995 = vpack.c.b16 %v1994, %v1993
    %v1998 = vsel %vm250, %v1983, 0
    %2000 = vmatprep.subr.bf16.mxu0 0
    %2001 = vmatpush1.bf16.msra.mxu0 %v1995
    %2002 = vmatprep.subr.bf16.mxu0 0
    %2003 = vmatpush1.bf16.msra.mxu0 0
    %2004 = vmatprep.subr.bf16.mxu0 0
    %2005 = vmatpush1.bf16.msra.mxu0 0
    %2006 = vmatprep.subr.bf16.mxu0 0
    %2007 = vmatpush1.bf16.msra.mxu0 0
    %2008 = vmatprep.subr.bf16.mxu0 0
    %2009 = vmatpush1.bf16.msra.mxu0 0
    %2010 = vmatprep.subr.bf16.mxu0 0
    %2011 = vmatpush1.bf16.msra.mxu0 0
    %2012 = vmatprep.subr.bf16.mxu0 0
    %2013 = vmatpush1.bf16.msra.mxu0 0
    %2014 = vmatprep.subr.bf16.mxu0 0
    %2015 = vmatpush1.bf16.msra.mxu0 0
    %2016 = vmatprep.subr.bf16.mxu0 0
    %2017 = vmatpush1.bf16.msra.mxu0 0
    %2018 = vmatprep.subr.bf16.mxu0 0
    %2019 = vmatpush1.bf16.msra.mxu0 0
    %2020 = vmatprep.subr.bf16.mxu0 0
    %2021 = vmatpush1.bf16.msra.mxu0 0
    %2022 = vmatprep.subr.bf16.mxu0 0
    %2023 = vmatpush1.bf16.msra.mxu0 0
    %2024 = vmatprep.subr.bf16.mxu0 0
    %2025 = vmatpush1.bf16.msra.mxu0 0
    %2026 = vmatprep.subr.bf16.mxu0 0
    %2027 = vmatpush1.bf16.msra.mxu0 0
    %2028 = vmatprep.subr.bf16.mxu0 0
    %2029 = vmatpush1.bf16.msra.mxu0 0
    %2030 = vmatprep.subr.bf16.mxu0 0
    %2031 = vmatpush1.bf16.msra.mxu0 0
    %2032 = vmatprep.mubr.bf16.mxu0 0
    %2033 = vmatmul.mubr.bf16.gmra.mrb[0].mxu0 %v1998
    %v2034 = vpop.f32.mrb[0].mxu0
    %v2035 = vadd.f32 %v1989, %v2034
    %v2036 = vpop.f32.mrb[0].mxu0
    %v2037 = vpop.f32.mrb[0].mxu0
    %v2038 = vpop.f32.mrb[0].mxu0
    %2039 = vdwg.mxu0
    %v2040 = vadd.s32 %v95, 8
    %vm2041 = vcmp.eq.s32.totalorder %v95, 0
    %vm2042 = vcmp.eq.s32.totalorder %v2040, 0
    %v2043 = vmul.f32 %v2035, 5.656854
    %v2044 = vsel %vm2041, 1, 0
    %v2045 = vsel %vm2042, 1, 0
    %vm2046 = vcmp.eq.s32.totalorder %v2044, 1
    %vm2047 = vcmp.eq.s32.totalorder %v2045, 1
    %v2048 = vlaneseq
    %v2049 = vshrl.u32 %v2048, 7
    %v2050 = vsub.s32 0, %v2049
    %v2051 = vrot.slane %v2043, %v2050
    %v2052 = vsel %vm2046, %v2051, 0.0
    %v2053 = vsel %vm2047, %v2051, 0.0
    %vm2054 = vcmp.eq.s32.totalorder %v95, 8
    %vm2055 = vcmp.eq.s32.totalorder %v2040, 8
    %v2056 = vsel %vm2054, 1, 0
    %v2057 = vsel %vm2055, 1, 0
    %vm2058 = vcmp.eq.s32.totalorder %v2056, 1
    %vm2059 = vcmp.eq.s32.totalorder %v2057, 1
    %v2060 = vlaneseq
    %v2061 = vshrl.u32 %v2060, 7
    %v2062 = vsub.s32 1, %v2061
    %v2063 = vrot.slane %v2043, %v2062
    %v2064 = vsel %vm2058, %v2063, %v2052
    %v2065 = vsel %vm2059, %v2063, %v2053
    %v2066 = vld [vmem:[%s3] sm:$0x3]
    %v2069 = vunpack.c.l.s4 1966171168
    %v2070 = vunpack.c.0.s8 %v2069
    %v2071 = vlaneseq
    %v2072 = vshrl.u32 %v2071, 7
    %v2073 = vsub.s32 %v2070, %v2072
    %v2074 = vrot.slane %v2066, %v2073
    %v2075 = vcombine.high %v2074, %v2074
    %v2077 = vunpack.c.l.s4 1966171168
    %v2078 = vunpack.c.0.s8 %v2077
    %v2079 = vlaneseq
    %v2080 = vshrl.u32 %v2079, 7
    %v2081 = vsub.s32 %v2078, %v2080
    %v2082 = vrot.slane %v2074, %v2081
    %v2084 = vunpack.c.l.s4 1966171168
    %v2085 = vunpack.c.0.s8 %v2084
    %v2086 = vlaneseq
    %v2087 = vshrl.u32 %v2086, 7
    %v2088 = vsub.s32 %v2085, %v2087
    %v2089 = vrot.slane %v2075, %v2088
    %v2090 = vlaneseq
    %v2091 = vshrl.u32 %v2090, 7
    %v2092 = vsub.s32 0, %v2091
    %v2093 = vrot.slane %v2082, %v2092
    %v2094 = vlaneseq
    %v2095 = vshrl.u32 %v2094, 7
    %v2096 = vsub.s32 0, %v2095
    %v2097 = vrot.slane %v2089, %v2096
    %v2100 = vmul.f32 %v100, %v2093
    %v2101 = vmul.f32 %v100, %v2097
    %v2102 = vsub.f32 %v2100, 1.0
    %v2103 = vsub.f32 %v2101, 1.0
    %v2104 = vmul.f32 %v2102, 1e+09
    %v2105 = vmul.f32 %v2103, 1e+09
    %v2106 = vadd.f32 %v89, %v2064
    %v2107 = vadd.f32 %v90, %v2065
    %v2108 = vsel %vm140, %v2106, 0.0
    %2109 = vadd.xlane.f32.xlu0 %v2108
    %v2110 = vpop.xlane.xlu0 %2109
    %v2111 = vsel %vm140, %v2107, 0.0
    %2112 = vadd.xlane.f32.xlu0 %v2111
    %v2113 = vpop.xlane.xlu0 %2112
    %v2114 = vmul.f32 %v2110, %v147
    %v2115 = vmul.f32 %v2113, %v147
    %v2116 = vsub.f32 %v2106, %v2114
    %v2117 = vsub.f32 %v2107, %v2115
    %v2118 = vmul.f32 %v2116, %v2116
    %v2119 = vmul.f32 %v2117, %v2117
    %v2120 = vsel %vm140, %v2118, 0.0
    %2121 = vadd.xlane.f32.xlu0 %v2120
    %v2122 = vpop.xlane.xlu0 %2121
    %v2123 = vsel %vm140, %v2119, 0.0
    %2124 = vadd.xlane.f32.xlu0 %v2123
    %v2125 = vpop.xlane.xlu0 %2124
    %v2126 = vmul.f32 %v2122, %v147
    %v2127 = vmul.f32 %v2125, %v147
    %v2128 = vadd.f32 %v2126, 1e-06
    %v2129 = vadd.f32 %v2127, 1e-06
    %v2130 = vrsqrt.pop %v2128
    %v2131 = vrsqrt.pop %v2129
    %v2132 = vmul.f32 %v2116, %v2130
    %v2133 = vmul.f32 %v2117, %v2131
    %v2134 = vmul.f32 %v2132, %v172
    %v2135 = vmul.f32 %v2133, %v172
    %v2136 = vadd.f32 %v2134, %v180
    %v2137 = vadd.f32 %v2135, %v180
    %v2138 = vld [vmem:[%s14] sm:$0xf]
    %v2139 = vld [vmem:[%s14 + $0x4] sm:$0xf]
    %v2140 = vld [vmem:[%s14 + $0x8] sm:$0xf]
    %v2141 = vld [vmem:[%s14 + $0xc] sm:$0xf]
    %v2142 = vpack.c.bf16 %v2137, %v2136
    %v2147 = vunpack.c.l.b16 %v2138
    %v2148 = vunpack.c.l.b16 %v2139
    %v2149 = vunpack.c.l.b16 %v2140
    %v2150 = vunpack.c.l.b16 %v2141
    %v2151 = vpack.c.b16 %v2148, %v2147
    %v2152 = vpack.c.b16 %v2150, %v2149
    %v2156 = vsel %vm140, %v2142, 0
    %2158 = vmatprep.subr.bf16.mxu0 0
    %2159 = vmatpush1.bf16.msra.mxu0 %v2151
    %2160 = vmatprep.subr.bf16.mxu0 0
    %2161 = vmatpush1.bf16.msra.mxu0 %v2152
    %2162 = vmatprep.subr.bf16.mxu0 0
    %2163 = vmatpush1.bf16.msra.mxu0 0
    %2164 = vmatprep.subr.bf16.mxu0 0
    %2165 = vmatpush1.bf16.msra.mxu0 0
    %2166 = vmatprep.subr.bf16.mxu0 0
    %2167 = vmatpush1.bf16.msra.mxu0 0
    %2168 = vmatprep.subr.bf16.mxu0 0
    %2169 = vmatpush1.bf16.msra.mxu0 0
    %2170 = vmatprep.subr.bf16.mxu0 0
    %2171 = vmatpush1.bf16.msra.mxu0 0
    %2172 = vmatprep.subr.bf16.mxu0 0
    %2173 = vmatpush1.bf16.msra.mxu0 0
    %2174 = vmatprep.subr.bf16.mxu0 0
    %2175 = vmatpush1.bf16.msra.mxu0 0
    %2176 = vmatprep.subr.bf16.mxu0 0
    %2177 = vmatpush1.bf16.msra.mxu0 0
    %2178 = vmatprep.subr.bf16.mxu0 0
    %2179 = vmatpush1.bf16.msra.mxu0 0
    %2180 = vmatprep.subr.bf16.mxu0 0
    %2181 = vmatpush1.bf16.msra.mxu0 0
    %2182 = vmatprep.subr.bf16.mxu0 0
    %2183 = vmatpush1.bf16.msra.mxu0 0
    %2184 = vmatprep.subr.bf16.mxu0 0
    %2185 = vmatpush1.bf16.msra.mxu0 0
    %2186 = vmatprep.subr.bf16.mxu0 0
    %2187 = vmatpush1.bf16.msra.mxu0 0
    %2188 = vmatprep.subr.bf16.mxu0 0
    %2189 = vmatpush1.bf16.msra.mxu0 0
    %2190 = vmatprep.mubr.bf16.mxu0 0
    %2191 = vmatmul.mubr.bf16.gmra.mrb[0].mxu0 %v2156
    %v2192 = vpop.f32.mrb[0].mxu0
    %v2193 = vadd.f32 0.0, %v2192
    %v2194 = vpop.f32.mrb[0].mxu0
    %v2195 = vpop.f32.mrb[0].mxu0
    %v2196 = vadd.f32 0.0, %v2195
    %v2197 = vpop.f32.mrb[0].mxu0
    %2198 = vdwg.mxu0
    %v2199 = vpack.c.bf16 %v2193, %v2193
    %v2200 = vpack.c.bf16 %v2196, %v2196
    %2202 = vrot.lane.b32.xlu0 %v2199, 96
    %v2203 = vpop.permute.xlu0 %2202
    %v2205 = vsel %vm250, %v2199, 0
    %v2208 = vsel %vm250, %v2203, 0
    %2210 = vmatprep.subr.bf16.mxu0 0
    %2211 = vmatpush1.bf16.xpose.msra.mxu0 %v2208
    %2212 = vmatprep.subr.bf16.mxu0 0
    %2213 = vmatpush1.bf16.xpose.msra.mxu0 0
    %2214 = vmatprep.subr.bf16.mxu0 0
    %2215 = vmatpush1.bf16.xpose.msra.mxu0 0
    %2216 = vmatprep.subr.bf16.mxu0 0
    %2217 = vmatpush1.bf16.xpose.msra.mxu0 0
    %2218 = vmatprep.subr.bf16.mxu0 0
    %2219 = vmatpush1.bf16.xpose.msra.mxu0 0
    %2220 = vmatprep.subr.bf16.mxu0 0
    %2221 = vmatpush1.bf16.xpose.msra.mxu0 0
    %2222 = vmatprep.subr.bf16.mxu0 0
    %2223 = vmatpush1.bf16.xpose.msra.mxu0 0
    %2224 = vmatprep.subr.bf16.mxu0 0
    %2225 = vmatpush1.bf16.xpose.msra.mxu0 0
    %2226 = vmatprep.subr.bf16.mxu0 0
    %2227 = vmatpush1.bf16.xpose.msra.mxu0 0
    %2228 = vmatprep.subr.bf16.mxu0 0
    %2229 = vmatpush1.bf16.xpose.msra.mxu0 0
    %2230 = vmatprep.subr.bf16.mxu0 0
    %2231 = vmatpush1.bf16.xpose.msra.mxu0 0
    %2232 = vmatprep.subr.bf16.mxu0 0
    %2233 = vmatpush1.bf16.xpose.msra.mxu0 0
    %2234 = vmatprep.subr.bf16.mxu0 0
    %2235 = vmatpush1.bf16.xpose.msra.mxu0 0
    %2236 = vmatprep.subr.bf16.mxu0 0
    %2237 = vmatpush1.bf16.xpose.msra.mxu0 0
    %2238 = vmatprep.subr.bf16.mxu0 0
    %2239 = vmatpush1.bf16.xpose.msra.mxu0 0
    %2240 = vmatprep.subr.bf16.mxu0 0
    %2241 = vmatpush1.bf16.xpose.msra.mxu0 0
    %2242 = vmatprep.mubr.bf16.mxu0 0
    %2243 = vmatmul.mubr.bf16.gmra.mrb[0].mxu0 %v2205
    %v2244 = vpop.f32.mrb[0].mxu0
    %v2245 = vadd.f32 0.0, %v2244
    %v2246 = vpop.f32.mrb[0].mxu0
    %v2247 = vpop.f32.mrb[0].mxu0
    %v2248 = vpop.f32.mrb[0].mxu0
    %2249 = vdwg.mxu0
    %2251 = vrot.lane.b32.xlu0 %v2200, 96
    %v2252 = vpop.permute.xlu0 %2251
    %v2254 = vsel %vm250, %v2200, 0
    %v2257 = vsel %vm250, %v2252, 0
    %2259 = vmatprep.subr.bf16.mxu0 0
    %2260 = vmatpush1.bf16.xpose.msra.mxu0 %v2257
    %2261 = vmatprep.subr.bf16.mxu0 0
    %2262 = vmatpush1.bf16.xpose.msra.mxu0 0
    %2263 = vmatprep.subr.bf16.mxu0 0
    %2264 = vmatpush1.bf16.xpose.msra.mxu0 0
    %2265 = vmatprep.subr.bf16.mxu0 0
    %2266 = vmatpush1.bf16.xpose.msra.mxu0 0
    %2267 = vmatprep.subr.bf16.mxu0 0
    %2268 = vmatpush1.bf16.xpose.msra.mxu0 0
    %2269 = vmatprep.subr.bf16.mxu0 0
    %2270 = vmatpush1.bf16.xpose.msra.mxu0 0
    %2271 = vmatprep.subr.bf16.mxu0 0
    %2272 = vmatpush1.bf16.xpose.msra.mxu0 0
    %2273 = vmatprep.subr.bf16.mxu0 0
    %2274 = vmatpush1.bf16.xpose.msra.mxu0 0
    %2275 = vmatprep.subr.bf16.mxu0 0
    %2276 = vmatpush1.bf16.xpose.msra.mxu0 0
    %2277 = vmatprep.subr.bf16.mxu0 0
    %2278 = vmatpush1.bf16.xpose.msra.mxu0 0
    %2279 = vmatprep.subr.bf16.mxu0 0
    %2280 = vmatpush1.bf16.xpose.msra.mxu0 0
    %2281 = vmatprep.subr.bf16.mxu0 0
    %2282 = vmatpush1.bf16.xpose.msra.mxu0 0
    %2283 = vmatprep.subr.bf16.mxu0 0
    %2284 = vmatpush1.bf16.xpose.msra.mxu0 0
    %2285 = vmatprep.subr.bf16.mxu0 0
    %2286 = vmatpush1.bf16.xpose.msra.mxu0 0
    %2287 = vmatprep.subr.bf16.mxu0 0
    %2288 = vmatpush1.bf16.xpose.msra.mxu0 0
    %2289 = vmatprep.subr.bf16.mxu0 0
    %2290 = vmatpush1.bf16.xpose.msra.mxu0 0
    %2291 = vmatprep.mubr.bf16.mxu0 0
    %2292 = vmatmul.mubr.bf16.gmra.mrb[0].mxu0 %v2254
    %v2293 = vpop.f32.mrb[0].mxu0
    %v2294 = vadd.f32 0.0, %v2293
    %v2295 = vpop.f32.mrb[0].mxu0
    %v2296 = vpop.f32.mrb[0].mxu0
    %v2297 = vpop.f32.mrb[0].mxu0
    %2298 = vdwg.mxu0
    %v2299 = vmul.f32 %v2245, 0.25
    %v2300 = vmul.f32 %v2294, 0.25
    %v2301 = vadd.f32 %v2299, %v2104
    %v2302 = vadd.f32 %v2300, %v2105
    %v2303 = vsel %vm350, %v2301, -inf
    %2304 = vmax.xlane.f32.xlu0 %v2303
    %v2305 = vpop.xlane.xlu0 %2304
    %v2306 = vsel %vm350, %v2302, -inf
    %2307 = vmax.xlane.f32.xlu0 %v2306
    %v2308 = vpop.xlane.xlu0 %2307
    %v2309 = vsub.f32 %v2301, %v2305
    %v2310 = vsub.f32 %v2302, %v2308
    %v2311 = vmul.f32 %v2309, 1.442695
    %v2312 = vpow.pop %v2311
    %v2313 = vmul.f32 %v2310, 1.442695
    %v2314 = vpow.pop %v2313
    %v2315 = vsel %vm350, %v2312, 0.0
    %2316 = vadd.xlane.f32.xlu0 %v2315
    %v2317 = vpop.xlane.xlu0 %2316
    %v2318 = vsel %vm350, %v2314, 0.0
    %2319 = vadd.xlane.f32.xlu0 %v2318
    %v2320 = vpop.xlane.xlu0 %2319
    %v2321 = vrcp.pop %v2317
    %v2322 = vmul.f32 %v2312, %v2321
    %v2323 = vrcp.pop %v2320
    %v2324 = vmul.f32 %v2314, %v2323
    %v2325 = vpack.c.bf16 %v2322, %v2322
    %v2326 = vpack.c.bf16 %v2324, %v2324
    %2327 = vrot.lane.b32.xlu0 %v2199, 64
    %v2328 = vpop.permute.xlu0 %2327
    %v2330 = vsel %vm350, %v2325, 0
    %v2333 = vsel %vm380, %v2328, 0
    %2335 = vmatprep.subr.bf16.mxu0 0
    %2336 = vmatpush1.bf16.msra.mxu0 %v2333
    %2337 = vmatprep.subr.bf16.mxu0 0
    %2338 = vmatpush1.bf16.msra.mxu0 0
    %2339 = vmatprep.subr.bf16.mxu0 0
    %2340 = vmatpush1.bf16.msra.mxu0 0
    %2341 = vmatprep.subr.bf16.mxu0 0
    %2342 = vmatpush1.bf16.msra.mxu0 0
    %2343 = vmatprep.subr.bf16.mxu0 0
    %2344 = vmatpush1.bf16.msra.mxu0 0
    %2345 = vmatprep.subr.bf16.mxu0 0
    %2346 = vmatpush1.bf16.msra.mxu0 0
    %2347 = vmatprep.subr.bf16.mxu0 0
    %2348 = vmatpush1.bf16.msra.mxu0 0
    %2349 = vmatprep.subr.bf16.mxu0 0
    %2350 = vmatpush1.bf16.msra.mxu0 0
    %2351 = vmatprep.subr.bf16.mxu0 0
    %2352 = vmatpush1.bf16.msra.mxu0 0
    %2353 = vmatprep.subr.bf16.mxu0 0
    %2354 = vmatpush1.bf16.msra.mxu0 0
    %2355 = vmatprep.subr.bf16.mxu0 0
    %2356 = vmatpush1.bf16.msra.mxu0 0
    %2357 = vmatprep.subr.bf16.mxu0 0
    %2358 = vmatpush1.bf16.msra.mxu0 0
    %2359 = vmatprep.subr.bf16.mxu0 0
    %2360 = vmatpush1.bf16.msra.mxu0 0
    %2361 = vmatprep.subr.bf16.mxu0 0
    %2362 = vmatpush1.bf16.msra.mxu0 0
    %2363 = vmatprep.subr.bf16.mxu0 0
    %2364 = vmatpush1.bf16.msra.mxu0 0
    %2365 = vmatprep.subr.bf16.mxu0 0
    %2366 = vmatpush1.bf16.msra.mxu0 0
    %2367 = vmatprep.mubr.bf16.mxu0 0
    %2368 = vmatmul.mubr.bf16.gmra.mrb[0].mxu0 %v2330
    %v2369 = vpop.f32.mrb[0].mxu0
    %v2370 = vadd.f32 0.0, %v2369
    %v2371 = vpop.f32.mrb[0].mxu0
    %v2372 = vpop.f32.mrb[0].mxu0
    %v2373 = vpop.f32.mrb[0].mxu0
    %2374 = vdwg.mxu0
    %2375 = vrot.lane.b32.xlu0 %v2200, 64
    %v2376 = vpop.permute.xlu0 %2375
    %v2378 = vsel %vm350, %v2326, 0
    %v2381 = vsel %vm380, %v2376, 0
    %2383 = vmatprep.subr.bf16.mxu0 0
    %2384 = vmatpush1.bf16.msra.mxu0 %v2381
    %2385 = vmatprep.subr.bf16.mxu0 0
    %2386 = vmatpush1.bf16.msra.mxu0 0
    %2387 = vmatprep.subr.bf16.mxu0 0
    %2388 = vmatpush1.bf16.msra.mxu0 0
    %2389 = vmatprep.subr.bf16.mxu0 0
    %2390 = vmatpush1.bf16.msra.mxu0 0
    %2391 = vmatprep.subr.bf16.mxu0 0
    %2392 = vmatpush1.bf16.msra.mxu0 0
    %2393 = vmatprep.subr.bf16.mxu0 0
    %2394 = vmatpush1.bf16.msra.mxu0 0
    %2395 = vmatprep.subr.bf16.mxu0 0
    %2396 = vmatpush1.bf16.msra.mxu0 0
    %2397 = vmatprep.subr.bf16.mxu0 0
    %2398 = vmatpush1.bf16.msra.mxu0 0
    %2399 = vmatprep.subr.bf16.mxu0 0
    %2400 = vmatpush1.bf16.msra.mxu0 0
    %2401 = vmatprep.subr.bf16.mxu0 0
    %2402 = vmatpush1.bf16.msra.mxu0 0
    %2403 = vmatprep.subr.bf16.mxu0 0
    %2404 = vmatpush1.bf16.msra.mxu0 0
    %2405 = vmatprep.subr.bf16.mxu0 0
    %2406 = vmatpush1.bf16.msra.mxu0 0
    %2407 = vmatprep.subr.bf16.mxu0 0
    %2408 = vmatpush1.bf16.msra.mxu0 0
    %2409 = vmatprep.subr.bf16.mxu0 0
    %2410 = vmatpush1.bf16.msra.mxu0 0
    %2411 = vmatprep.subr.bf16.mxu0 0
    %2412 = vmatpush1.bf16.msra.mxu0 0
    %2413 = vmatprep.subr.bf16.mxu0 0
    %2414 = vmatpush1.bf16.msra.mxu0 0
    %2415 = vmatprep.mubr.bf16.mxu0 0
    %2416 = vmatmul.mubr.bf16.gmra.mrb[0].mxu0 %v2378
    %v2417 = vpop.f32.mrb[0].mxu0
    %v2418 = vadd.f32 0.0, %v2417
    %v2419 = vpop.f32.mrb[0].mxu0
    %v2420 = vpop.f32.mrb[0].mxu0
    %v2421 = vpop.f32.mrb[0].mxu0
    %2422 = vdwg.mxu0
    %2423 = vrot.lane.b32.xlu0 %v2199, 112
    %v2424 = vpop.permute.xlu0 %2423
    %2425 = vrot.lane.b32.xlu0 %v2199, 80
    %v2426 = vpop.permute.xlu0 %2425
    %v2428 = vsel %vm250, %v2424, 0
    %v2431 = vsel %vm250, %v2426, 0
    %2433 = vmatprep.subr.bf16.mxu0 0
    %2434 = vmatpush1.bf16.xpose.msra.mxu0 %v2431
    %2435 = vmatprep.subr.bf16.mxu0 0
    %2436 = vmatpush1.bf16.xpose.msra.mxu0 0
    %2437 = vmatprep.subr.bf16.mxu0 0
    %2438 = vmatpush1.bf16.xpose.msra.mxu0 0
    %2439 = vmatprep.subr.bf16.mxu0 0
    %2440 = vmatpush1.bf16.xpose.msra.mxu0 0
    %2441 = vmatprep.subr.bf16.mxu0 0
    %2442 = vmatpush1.bf16.xpose.msra.mxu0 0
    %2443 = vmatprep.subr.bf16.mxu0 0
    %2444 = vmatpush1.bf16.xpose.msra.mxu0 0
    %2445 = vmatprep.subr.bf16.mxu0 0
    %2446 = vmatpush1.bf16.xpose.msra.mxu0 0
    %2447 = vmatprep.subr.bf16.mxu0 0
    %2448 = vmatpush1.bf16.xpose.msra.mxu0 0
    %2449 = vmatprep.subr.bf16.mxu0 0
    %2450 = vmatpush1.bf16.xpose.msra.mxu0 0
    %2451 = vmatprep.subr.bf16.mxu0 0
    %2452 = vmatpush1.bf16.xpose.msra.mxu0 0
    %2453 = vmatprep.subr.bf16.mxu0 0
    %2454 = vmatpush1.bf16.xpose.msra.mxu0 0
    %2455 = vmatprep.subr.bf16.mxu0 0
    %2456 = vmatpush1.bf16.xpose.msra.mxu0 0
    %2457 = vmatprep.subr.bf16.mxu0 0
    %2458 = vmatpush1.bf16.xpose.msra.mxu0 0
    %2459 = vmatprep.subr.bf16.mxu0 0
    %2460 = vmatpush1.bf16.xpose.msra.mxu0 0
    %2461 = vmatprep.subr.bf16.mxu0 0
    %2462 = vmatpush1.bf16.xpose.msra.mxu0 0
    %2463 = vmatprep.subr.bf16.mxu0 0
    %2464 = vmatpush1.bf16.xpose.msra.mxu0 0
    %2465 = vmatprep.mubr.bf16.mxu0 0
    %2466 = vmatmul.mubr.bf16.gmra.mrb[0].mxu0 %v2428
    %v2467 = vpop.f32.mrb[0].mxu0
    %v2468 = vadd.f32 0.0, %v2467
    %v2469 = vpop.f32.mrb[0].mxu0
    %v2470 = vpop.f32.mrb[0].mxu0
    %v2471 = vpop.f32.mrb[0].mxu0
    %2472 = vdwg.mxu0
    %2473 = vrot.lane.b32.xlu0 %v2200, 112
    %v2474 = vpop.permute.xlu0 %2473
    %2475 = vrot.lane.b32.xlu0 %v2200, 80
    %v2476 = vpop.permute.xlu0 %2475
    %v2478 = vsel %vm250, %v2474, 0
    %v2481 = vsel %vm250, %v2476, 0
    %2483 = vmatprep.subr.bf16.mxu0 0
    %2484 = vmatpush1.bf16.xpose.msra.mxu0 %v2481
    %2485 = vmatprep.subr.bf16.mxu0 0
    %2486 = vmatpush1.bf16.xpose.msra.mxu0 0
    %2487 = vmatprep.subr.bf16.mxu0 0
    %2488 = vmatpush1.bf16.xpose.msra.mxu0 0
    %2489 = vmatprep.subr.bf16.mxu0 0
    %2490 = vmatpush1.bf16.xpose.msra.mxu0 0
    %2491 = vmatprep.subr.bf16.mxu0 0
    %2492 = vmatpush1.bf16.xpose.msra.mxu0 0
    %2493 = vmatprep.subr.bf16.mxu0 0
    %2494 = vmatpush1.bf16.xpose.msra.mxu0 0
    %2495 = vmatprep.subr.bf16.mxu0 0
    %2496 = vmatpush1.bf16.xpose.msra.mxu0 0
    %2497 = vmatprep.subr.bf16.mxu0 0
    %2498 = vmatpush1.bf16.xpose.msra.mxu0 0
    %2499 = vmatprep.subr.bf16.mxu0 0
    %2500 = vmatpush1.bf16.xpose.msra.mxu0 0
    %2501 = vmatprep.subr.bf16.mxu0 0
    %2502 = vmatpush1.bf16.xpose.msra.mxu0 0
    %2503 = vmatprep.subr.bf16.mxu0 0
    %2504 = vmatpush1.bf16.xpose.msra.mxu0 0
    %2505 = vmatprep.subr.bf16.mxu0 0
    %2506 = vmatpush1.bf16.xpose.msra.mxu0 0
    %2507 = vmatprep.subr.bf16.mxu0 0
    %2508 = vmatpush1.bf16.xpose.msra.mxu0 0
    %2509 = vmatprep.subr.bf16.mxu0 0
    %2510 = vmatpush1.bf16.xpose.msra.mxu0 0
    %2511 = vmatprep.subr.bf16.mxu0 0
    %2512 = vmatpush1.bf16.xpose.msra.mxu0 0
    %2513 = vmatprep.subr.bf16.mxu0 0
    %2514 = vmatpush1.bf16.xpose.msra.mxu0 0
    %2515 = vmatprep.mubr.bf16.mxu0 0
    %2516 = vmatmul.mubr.bf16.gmra.mrb[0].mxu0 %v2478
    %v2517 = vpop.f32.mrb[0].mxu0
    %v2518 = vadd.f32 0.0, %v2517
    %v2519 = vpop.f32.mrb[0].mxu0
    %v2520 = vpop.f32.mrb[0].mxu0
    %v2521 = vpop.f32.mrb[0].mxu0
    %2522 = vdwg.mxu0
    %v2523 = vmul.f32 %v2468, 0.25
    %v2524 = vmul.f32 %v2518, 0.25
    %v2525 = vadd.f32 %v2523, %v2104
    %v2526 = vadd.f32 %v2524, %v2105
    %v2527 = vsel %vm350, %v2525, -inf
    %2528 = vmax.xlane.f32.xlu0 %v2527
    %v2529 = vpop.xlane.xlu0 %2528
    %v2530 = vsel %vm350, %v2526, -inf
    %2531 = vmax.xlane.f32.xlu0 %v2530
    %v2532 = vpop.xlane.xlu0 %2531
    %v2533 = vsub.f32 %v2525, %v2529
    %v2534 = vsub.f32 %v2526, %v2532
    %v2535 = vmul.f32 %v2533, 1.442695
    %v2536 = vpow.pop %v2535
    %v2537 = vmul.f32 %v2534, 1.442695
    %v2538 = vpow.pop %v2537
    %v2539 = vsel %vm350, %v2536, 0.0
    %2540 = vadd.xlane.f32.xlu0 %v2539
    %v2541 = vpop.xlane.xlu0 %2540
    %v2542 = vsel %vm350, %v2538, 0.0
    %2543 = vadd.xlane.f32.xlu0 %v2542
    %v2544 = vpop.xlane.xlu0 %2543
    %v2545 = vrcp.pop %v2541
    %v2546 = vmul.f32 %v2536, %v2545
    %v2547 = vrcp.pop %v2544
    %v2548 = vmul.f32 %v2538, %v2547
    %v2549 = vpack.c.bf16 %v2546, %v2546
    %v2550 = vpack.c.bf16 %v2548, %v2548
    %2551 = vrot.lane.b32.xlu0 %v2199, 48
    %v2552 = vpop.permute.xlu0 %2551
    %v2554 = vsel %vm350, %v2549, 0
    %v2557 = vsel %vm380, %v2552, 0
    %2559 = vmatprep.subr.bf16.mxu0 0
    %2560 = vmatpush1.bf16.msra.mxu0 %v2557
    %2561 = vmatprep.subr.bf16.mxu0 0
    %2562 = vmatpush1.bf16.msra.mxu0 0
    %2563 = vmatprep.subr.bf16.mxu0 0
    %2564 = vmatpush1.bf16.msra.mxu0 0
    %2565 = vmatprep.subr.bf16.mxu0 0
    %2566 = vmatpush1.bf16.msra.mxu0 0
    %2567 = vmatprep.subr.bf16.mxu0 0
    %2568 = vmatpush1.bf16.msra.mxu0 0
    %2569 = vmatprep.subr.bf16.mxu0 0
    %2570 = vmatpush1.bf16.msra.mxu0 0
    %2571 = vmatprep.subr.bf16.mxu0 0
    %2572 = vmatpush1.bf16.msra.mxu0 0
    %2573 = vmatprep.subr.bf16.mxu0 0
    %2574 = vmatpush1.bf16.msra.mxu0 0
    %2575 = vmatprep.subr.bf16.mxu0 0
    %2576 = vmatpush1.bf16.msra.mxu0 0
    %2577 = vmatprep.subr.bf16.mxu0 0
    %2578 = vmatpush1.bf16.msra.mxu0 0
    %2579 = vmatprep.subr.bf16.mxu0 0
    %2580 = vmatpush1.bf16.msra.mxu0 0
    %2581 = vmatprep.subr.bf16.mxu0 0
    %2582 = vmatpush1.bf16.msra.mxu0 0
    %2583 = vmatprep.subr.bf16.mxu0 0
    %2584 = vmatpush1.bf16.msra.mxu0 0
    %2585 = vmatprep.subr.bf16.mxu0 0
    %2586 = vmatpush1.bf16.msra.mxu0 0
    %2587 = vmatprep.subr.bf16.mxu0 0
    %2588 = vmatpush1.bf16.msra.mxu0 0
    %2589 = vmatprep.subr.bf16.mxu0 0
    %2590 = vmatpush1.bf16.msra.mxu0 0
    %2591 = vmatprep.mubr.bf16.mxu0 0
    %2592 = vmatmul.mubr.bf16.gmra.mrb[0].mxu0 %v2554
    %v2593 = vpop.f32.mrb[0].mxu0
    %v2594 = vadd.f32 0.0, %v2593
    %v2595 = vpop.f32.mrb[0].mxu0
    %v2596 = vpop.f32.mrb[0].mxu0
    %v2597 = vpop.f32.mrb[0].mxu0
    %2598 = vdwg.mxu0
    %2599 = vrot.lane.b32.xlu0 %v2200, 48
    %v2600 = vpop.permute.xlu0 %2599
    %v2602 = vsel %vm350, %v2550, 0
    %v2605 = vsel %vm380, %v2600, 0
    %2607 = vmatprep.subr.bf16.mxu0 0
    %2608 = vmatpush1.bf16.msra.mxu0 %v2605
    %2609 = vmatprep.subr.bf16.mxu0 0
    %2610 = vmatpush1.bf16.msra.mxu0 0
    %2611 = vmatprep.subr.bf16.mxu0 0
    %2612 = vmatpush1.bf16.msra.mxu0 0
    %2613 = vmatprep.subr.bf16.mxu0 0
    %2614 = vmatpush1.bf16.msra.mxu0 0
    %2615 = vmatprep.subr.bf16.mxu0 0
    %2616 = vmatpush1.bf16.msra.mxu0 0
    %2617 = vmatprep.subr.bf16.mxu0 0
    %2618 = vmatpush1.bf16.msra.mxu0 0
    %2619 = vmatprep.subr.bf16.mxu0 0
    %2620 = vmatpush1.bf16.msra.mxu0 0
    %2621 = vmatprep.subr.bf16.mxu0 0
    %2622 = vmatpush1.bf16.msra.mxu0 0
    %2623 = vmatprep.subr.bf16.mxu0 0
    %2624 = vmatpush1.bf16.msra.mxu0 0
    %2625 = vmatprep.subr.bf16.mxu0 0
    %2626 = vmatpush1.bf16.msra.mxu0 0
    %2627 = vmatprep.subr.bf16.mxu0 0
    %2628 = vmatpush1.bf16.msra.mxu0 0
    %2629 = vmatprep.subr.bf16.mxu0 0
    %2630 = vmatpush1.bf16.msra.mxu0 0
    %2631 = vmatprep.subr.bf16.mxu0 0
    %2632 = vmatpush1.bf16.msra.mxu0 0
    %2633 = vmatprep.subr.bf16.mxu0 0
    %2634 = vmatpush1.bf16.msra.mxu0 0
    %2635 = vmatprep.subr.bf16.mxu0 0
    %2636 = vmatpush1.bf16.msra.mxu0 0
    %2637 = vmatprep.subr.bf16.mxu0 0
    %2638 = vmatpush1.bf16.msra.mxu0 0
    %2639 = vmatprep.mubr.bf16.mxu0 0
    %2640 = vmatmul.mubr.bf16.gmra.mrb[0].mxu0 %v2602
    %v2641 = vpop.f32.mrb[0].mxu0
    %v2642 = vadd.f32 0.0, %v2641
    %v2643 = vpop.f32.mrb[0].mxu0
    %v2644 = vpop.f32.mrb[0].mxu0
    %v2645 = vpop.f32.mrb[0].mxu0
    %2646 = vdwg.mxu0
    %2649 = vrot.lane.b32.xlu0 %v2594, 16
    %v2650 = vpop.permute.xlu0 %2649
    %2651 = vrot.lane.b32.xlu0 %v2642, 16
    %v2652 = vpop.permute.xlu0 %2651
    %v2655 = vsel %vm250, %v2370, %v2650
    %v2656 = vsel %vm250, %v2418, %v2652
    %v2657 = vld [vmem:[%s15] sm:$0xf]
    %v2658 = vld [vmem:[%s15 + $0x4] sm:$0xf]
    %v2659 = vld [vmem:[%s15 + $0x8] sm:$0xf]
    %v2660 = vld [vmem:[%s15 + $0xc] sm:$0xf]
    %v2661 = vpack.c.bf16 %v2656, %v2655
    %v2666 = vunpack.c.l.b16 %v2657
    %v2667 = vunpack.c.l.b16 %v2658
    %v2668 = vunpack.c.l.b16 %v2659
    %v2669 = vunpack.c.l.b16 %v2660
    %v2670 = vpack.c.b16 %v2667, %v2666
    %v2671 = vpack.c.b16 %v2669, %v2668
    %v2675 = vsel %vm140, %v2661, 0
    %2677 = vmatprep.subr.bf16.mxu0 0
    %2678 = vmatpush1.bf16.msra.mxu0 %v2670
    %2679 = vmatprep.subr.bf16.mxu0 0
    %2680 = vmatpush1.bf16.msra.mxu0 %v2671
    %2681 = vmatprep.subr.bf16.mxu0 0
    %2682 = vmatpush1.bf16.msra.mxu0 0
    %2683 = vmatprep.subr.bf16.mxu0 0
    %2684 = vmatpush1.bf16.msra.mxu0 0
    %2685 = vmatprep.subr.bf16.mxu0 0
    %2686 = vmatpush1.bf16.msra.mxu0 0
    %2687 = vmatprep.subr.bf16.mxu0 0
    %2688 = vmatpush1.bf16.msra.mxu0 0
    %2689 = vmatprep.subr.bf16.mxu0 0
    %2690 = vmatpush1.bf16.msra.mxu0 0
    %2691 = vmatprep.subr.bf16.mxu0 0
    %2692 = vmatpush1.bf16.msra.mxu0 0
    %2693 = vmatprep.subr.bf16.mxu0 0
    %2694 = vmatpush1.bf16.msra.mxu0 0
    %2695 = vmatprep.subr.bf16.mxu0 0
    %2696 = vmatpush1.bf16.msra.mxu0 0
    %2697 = vmatprep.subr.bf16.mxu0 0
    %2698 = vmatpush1.bf16.msra.mxu0 0
    %2699 = vmatprep.subr.bf16.mxu0 0
    %2700 = vmatpush1.bf16.msra.mxu0 0
    %2701 = vmatprep.subr.bf16.mxu0 0
    %2702 = vmatpush1.bf16.msra.mxu0 0
    %2703 = vmatprep.subr.bf16.mxu0 0
    %2704 = vmatpush1.bf16.msra.mxu0 0
    %2705 = vmatprep.subr.bf16.mxu0 0
    %2706 = vmatpush1.bf16.msra.mxu0 0
    %2707 = vmatprep.subr.bf16.mxu0 0
    %2708 = vmatpush1.bf16.msra.mxu0 0
    %2709 = vmatprep.mubr.bf16.mxu0 0
    %2710 = vmatmul.mubr.bf16.gmra.mrb[0].mxu0 %v2675
    %v2711 = vpop.f32.mrb[0].mxu0
    %v2712 = vadd.f32 %v2136, %v2711
    %v2713 = vpop.f32.mrb[0].mxu0
    %v2714 = vpop.f32.mrb[0].mxu0
    %v2715 = vadd.f32 %v2137, %v2714
    %v2716 = vpop.f32.mrb[0].mxu0
    %2717 = vdwg.mxu0
    %v2718 = vld [vmem:[%s16] sm:$0x1]
    %v2719 = vld [vmem:[%s17] sm:$0x1]
    %v2720 = vsel %vm140, %v2712, 0.0
    %2721 = vadd.xlane.f32.xlu0 %v2720
    %v2722 = vpop.xlane.xlu0 %2721
    %v2723 = vsel %vm140, %v2715, 0.0
    %2724 = vadd.xlane.f32.xlu0 %v2723
    %v2725 = vpop.xlane.xlu0 %2724
    %v2726 = vmul.f32 %v2722, %v147
    %v2727 = vmul.f32 %v2725, %v147
    %v2728 = vsub.f32 %v2712, %v2726
    %v2729 = vsub.f32 %v2715, %v2727
    %v2730 = vmul.f32 %v2728, %v2728
    %v2731 = vmul.f32 %v2729, %v2729
    %v2732 = vsel %vm140, %v2730, 0.0
    %2733 = vadd.xlane.f32.xlu0 %v2732
    %v2734 = vpop.xlane.xlu0 %2733
    %v2735 = vsel %vm140, %v2731, 0.0
    %2736 = vadd.xlane.f32.xlu0 %v2735
    %v2737 = vpop.xlane.xlu0 %2736
    %v2738 = vmul.f32 %v2734, %v147
    %v2739 = vmul.f32 %v2737, %v147
    %v2740 = vadd.f32 %v2738, 1e-06
    %v2741 = vadd.f32 %v2739, 1e-06
    %v2742 = vrsqrt.pop %v2740
    %v2743 = vrsqrt.pop %v2741
    %v2744 = vmul.f32 %v2728, %v2742
    %v2745 = vmul.f32 %v2729, %v2743
    %v2747 = vlaneseq
    %v2748 = vshrl.u32 %v2747, 7
    %v2749 = vsub.s32 0, %v2748
    %v2750 = vrot.slane %v2718, %v2749
    %v2752 = vmul.f32 %v2744, %v2750
    %v2753 = vmul.f32 %v2745, %v2750
    %v2755 = vlaneseq
    %v2756 = vshrl.u32 %v2755, 7
    %v2757 = vsub.s32 0, %v2756
    %v2758 = vrot.slane %v2719, %v2757
    %v2760 = vadd.f32 %v2752, %v2758
    %v2761 = vadd.f32 %v2753, %v2758
    %v2762 = vld [vmem:[%s18] sm:$0xf]
    %v2763 = vld [vmem:[%s18 + $0x4] sm:$0xf]
    %v2764 = vld [vmem:[%s18 + $0x8] sm:$0xf]
    %v2765 = vld [vmem:[%s18 + $0xc] sm:$0xf]
    %v2766 = vpack.c.bf16 %v2761, %v2760
    %v2767 = vld [vmem:[%s19] sm:$0x1]
    %v2769 = vlaneseq
    %v2770 = vshrl.u32 %v2769, 7
    %v2771 = vsub.s32 0, %v2770
    %v2772 = vrot.slane %v2767, %v2771
    %v2778 = vunpack.c.l.b16 %v2762
    %v2779 = vunpack.c.l.b16 %v2763
    %v2780 = vunpack.c.l.b16 %v2764
    %v2781 = vunpack.c.l.b16 %v2765
    %v2782 = vpack.c.b16 %v2779, %v2778
    %v2783 = vpack.c.b16 %v2781, %v2780
    %v2787 = vsel %vm140, %v2766, 0
    %2789 = vmatprep.subr.bf16.mxu0 0
    %2790 = vmatpush1.bf16.msra.mxu0 %v2782
    %2791 = vmatprep.subr.bf16.mxu0 0
    %2792 = vmatpush1.bf16.msra.mxu0 %v2783
    %2793 = vmatprep.subr.bf16.mxu0 0
    %2794 = vmatpush1.bf16.msra.mxu0 0
    %2795 = vmatprep.subr.bf16.mxu0 0
    %2796 = vmatpush1.bf16.msra.mxu0 0
    %2797 = vmatprep.subr.bf16.mxu0 0
    %2798 = vmatpush1.bf16.msra.mxu0 0
    %2799 = vmatprep.subr.bf16.mxu0 0
    %2800 = vmatpush1.bf16.msra.mxu0 0
    %2801 = vmatprep.subr.bf16.mxu0 0
    %2802 = vmatpush1.bf16.msra.mxu0 0
    %2803 = vmatprep.subr.bf16.mxu0 0
    %2804 = vmatpush1.bf16.msra.mxu0 0
    %2805 = vmatprep.subr.bf16.mxu0 0
    %2806 = vmatpush1.bf16.msra.mxu0 0
    %2807 = vmatprep.subr.bf16.mxu0 0
    %2808 = vmatpush1.bf16.msra.mxu0 0
    %2809 = vmatprep.subr.bf16.mxu0 0
    %2810 = vmatpush1.bf16.msra.mxu0 0
    %2811 = vmatprep.subr.bf16.mxu0 0
    %2812 = vmatpush1.bf16.msra.mxu0 0
    %2813 = vmatprep.subr.bf16.mxu0 0
    %2814 = vmatpush1.bf16.msra.mxu0 0
    %2815 = vmatprep.subr.bf16.mxu0 0
    %2816 = vmatpush1.bf16.msra.mxu0 0
    %2817 = vmatprep.subr.bf16.mxu0 0
    %2818 = vmatpush1.bf16.msra.mxu0 0
    %2819 = vmatprep.subr.bf16.mxu0 0
    %2820 = vmatpush1.bf16.msra.mxu0 0
    %2821 = vmatprep.mubr.bf16.mxu0 0
    %2822 = vmatmul.mubr.bf16.gmra.mrb[0].mxu0 %v2787
    %v2823 = vpop.f32.mrb[0].mxu0
    %v2824 = vadd.f32 %v2772, %v2823
    %v2825 = vpop.f32.mrb[0].mxu0
    %v2826 = vpop.f32.mrb[0].mxu0
    %v2827 = vadd.f32 %v2772, %v2826
    %v2828 = vpop.f32.mrb[0].mxu0
    %2829 = vdwg.mxu0
    %v2830 = vmax.f32 %v2824, 0.0
    %v2831 = vmax.f32 %v2827, 0.0
    %v2832 = vld [vmem:[%s20] sm:$0xf]
    %v2833 = vld [vmem:[%s20 + $0x4] sm:$0xf]
    %v2834 = vld [vmem:[%s20 + $0x8] sm:$0xf]
    %v2835 = vld [vmem:[%s20 + $0xc] sm:$0xf]
    %v2836 = vld [vmem:[%s20 + $0x10] sm:$0xf]
    %v2837 = vld [vmem:[%s20 + $0x14] sm:$0xf]
    %v2838 = vld [vmem:[%s20 + $0x18] sm:$0xf]
    %v2839 = vld [vmem:[%s20 + $0x1c] sm:$0xf]
    %v2840 = vpack.c.bf16 %v2831, %v2830
    %v2841 = vld [vmem:[%s21] sm:$0x1]
    %v2843 = vlaneseq
    %v2844 = vshrl.u32 %v2843, 7
    %v2845 = vsub.s32 0, %v2844
    %v2846 = vrot.slane %v2841, %v2845
    %v2856 = vunpack.c.l.b16 %v2832
    %v2857 = vunpack.c.l.b16 %v2833
    %v2858 = vunpack.c.l.b16 %v2834
    %v2859 = vunpack.c.l.b16 %v2835
    %v2860 = vunpack.c.l.b16 %v2836
    %v2861 = vunpack.c.l.b16 %v2837
    %v2862 = vunpack.c.l.b16 %v2838
    %v2863 = vunpack.c.l.b16 %v2839
    %v2864 = vpack.c.b16 %v2857, %v2856
    %v2865 = vpack.c.b16 %v2859, %v2858
    %v2866 = vpack.c.b16 %v2861, %v2860
    %v2867 = vpack.c.b16 %v2863, %v2862
    %v2873 = vsel %vm921, %v2840, 0
    %2875 = vmatprep.subr.bf16.mxu0 0
    %2876 = vmatpush1.bf16.msra.mxu0 %v2864
    %2877 = vmatprep.subr.bf16.mxu0 0
    %2878 = vmatpush1.bf16.msra.mxu0 %v2865
    %2879 = vmatprep.subr.bf16.mxu0 0
    %2880 = vmatpush1.bf16.msra.mxu0 %v2866
    %2881 = vmatprep.subr.bf16.mxu0 0
    %2882 = vmatpush1.bf16.msra.mxu0 %v2867
    %2883 = vmatprep.subr.bf16.mxu0 0
    %2884 = vmatpush1.bf16.msra.mxu0 0
    %2885 = vmatprep.subr.bf16.mxu0 0
    %2886 = vmatpush1.bf16.msra.mxu0 0
    %2887 = vmatprep.subr.bf16.mxu0 0
    %2888 = vmatpush1.bf16.msra.mxu0 0
    %2889 = vmatprep.subr.bf16.mxu0 0
    %2890 = vmatpush1.bf16.msra.mxu0 0
    %2891 = vmatprep.subr.bf16.mxu0 0
    %2892 = vmatpush1.bf16.msra.mxu0 0
    %2893 = vmatprep.subr.bf16.mxu0 0
    %2894 = vmatpush1.bf16.msra.mxu0 0
    %2895 = vmatprep.subr.bf16.mxu0 0
    %2896 = vmatpush1.bf16.msra.mxu0 0
    %2897 = vmatprep.subr.bf16.mxu0 0
    %2898 = vmatpush1.bf16.msra.mxu0 0
    %2899 = vmatprep.subr.bf16.mxu0 0
    %2900 = vmatpush1.bf16.msra.mxu0 0
    %2901 = vmatprep.subr.bf16.mxu0 0
    %2902 = vmatpush1.bf16.msra.mxu0 0
    %2903 = vmatprep.subr.bf16.mxu0 0
    %2904 = vmatpush1.bf16.msra.mxu0 0
    %2905 = vmatprep.subr.bf16.mxu0 0
    %2906 = vmatpush1.bf16.msra.mxu0 0
    %2907 = vmatprep.mubr.bf16.mxu0 0
    %2908 = vmatmul.mubr.bf16.gmra.mrb[0].mxu0 %v2873
    %v2909 = vpop.f32.mrb[0].mxu0
    %v2910 = vadd.f32 %v2846, %v2909
    %v2911 = vpop.f32.mrb[0].mxu0
    %v2912 = vpop.f32.mrb[0].mxu0
    %v2913 = vadd.f32 %v2846, %v2912
    %v2914 = vpop.f32.mrb[0].mxu0
    %2915 = vdwg.mxu0
    %v2916 = vadd.f32 %v2910, %v2760
    %v2917 = vadd.f32 %v2913, %v2761
    %v2918 = vld [vmem:[%s22] sm:$0x1]
    %v2919 = vld [vmem:[%s23] sm:$0x1]
    %v2920 = vsel %vm140, %v2916, 0.0
    %2921 = vadd.xlane.f32.xlu0 %v2920
    %v2922 = vpop.xlane.xlu0 %2921
    %v2923 = vsel %vm140, %v2917, 0.0
    %2924 = vadd.xlane.f32.xlu0 %v2923
    %v2925 = vpop.xlane.xlu0 %2924
    %v2926 = vmul.f32 %v2922, %v147
    %v2927 = vmul.f32 %v2925, %v147
    %v2928 = vsub.f32 %v2916, %v2926
    %v2929 = vsub.f32 %v2917, %v2927
    %v2930 = vmul.f32 %v2928, %v2928
    %v2931 = vmul.f32 %v2929, %v2929
    %v2932 = vsel %vm140, %v2930, 0.0
    %2933 = vadd.xlane.f32.xlu0 %v2932
    %v2934 = vpop.xlane.xlu0 %2933
    %v2935 = vsel %vm140, %v2931, 0.0
    %2936 = vadd.xlane.f32.xlu0 %v2935
    %v2937 = vpop.xlane.xlu0 %2936
    %v2938 = vmul.f32 %v2934, %v147
    %v2939 = vmul.f32 %v2937, %v147
    %v2940 = vadd.f32 %v2938, 1e-06
    %v2941 = vadd.f32 %v2939, 1e-06
    %v2942 = vrsqrt.pop %v2940
    %v2943 = vrsqrt.pop %v2941
    %v2944 = vmul.f32 %v2928, %v2942
    %v2945 = vmul.f32 %v2929, %v2943
    %v2947 = vlaneseq
    %v2948 = vshrl.u32 %v2947, 7
    %v2949 = vsub.s32 0, %v2948
    %v2950 = vrot.slane %v2918, %v2949
    %v2952 = vmul.f32 %v2944, %v2950
    %v2953 = vmul.f32 %v2945, %v2950
    %v2955 = vlaneseq
    %v2956 = vshrl.u32 %v2955, 7
    %v2957 = vsub.s32 0, %v2956
    %v2958 = vrot.slane %v2919, %v2957
    %v2960 = vadd.f32 %v2952, %v2958
    %v2961 = vadd.f32 %v2953, %v2958
    %v2962 = vld [vmem:[%s1012] sm:$0xf]
    %v2963 = vld [vmem:[%s1012 + $0x4] sm:$0xf]
    %v2964 = vld [vmem:[%s1012 + $0x8] sm:$0xf]
    %v2965 = vld [vmem:[%s1012 + $0xc] sm:$0xf]
    %v2966 = vpack.c.bf16 %v2961, %v2960
    %v2971 = vunpack.c.l.b16 %v2962
    %v2972 = vunpack.c.l.b16 %v2963
    %v2973 = vunpack.c.l.b16 %v2964
    %v2974 = vunpack.c.l.b16 %v2965
    %v2975 = vpack.c.b16 %v2972, %v2971
    %v2976 = vpack.c.b16 %v2974, %v2973
    %v2980 = vsel %vm140, %v2966, 0
    %2982 = vmatprep.subr.bf16.mxu0 0
    %2983 = vmatpush1.bf16.msra.mxu0 %v2975
    %2984 = vmatprep.subr.bf16.mxu0 0
    %2985 = vmatpush1.bf16.msra.mxu0 %v2976
    %2986 = vmatprep.subr.bf16.mxu0 0
    %2987 = vmatpush1.bf16.msra.mxu0 0
    %2988 = vmatprep.subr.bf16.mxu0 0
    %2989 = vmatpush1.bf16.msra.mxu0 0
    %2990 = vmatprep.subr.bf16.mxu0 0
    %2991 = vmatpush1.bf16.msra.mxu0 0
    %2992 = vmatprep.subr.bf16.mxu0 0
    %2993 = vmatpush1.bf16.msra.mxu0 0
    %2994 = vmatprep.subr.bf16.mxu0 0
    %2995 = vmatpush1.bf16.msra.mxu0 0
    %2996 = vmatprep.subr.bf16.mxu0 0
    %2997 = vmatpush1.bf16.msra.mxu0 0
    %2998 = vmatprep.subr.bf16.mxu0 0
    %2999 = vmatpush1.bf16.msra.mxu0 0
    %3000 = vmatprep.subr.bf16.mxu0 0
    %3001 = vmatpush1.bf16.msra.mxu0 0
    %3002 = vmatprep.subr.bf16.mxu0 0
    %3003 = vmatpush1.bf16.msra.mxu0 0
    %3004 = vmatprep.subr.bf16.mxu0 0
    %3005 = vmatpush1.bf16.msra.mxu0 0
    %3006 = vmatprep.subr.bf16.mxu0 0
    %3007 = vmatpush1.bf16.msra.mxu0 0
    %3008 = vmatprep.subr.bf16.mxu0 0
    %3009 = vmatpush1.bf16.msra.mxu0 0
    %3010 = vmatprep.subr.bf16.mxu0 0
    %3011 = vmatpush1.bf16.msra.mxu0 0
    %3012 = vmatprep.subr.bf16.mxu0 0
    %3013 = vmatpush1.bf16.msra.mxu0 0
    %3014 = vmatprep.mubr.bf16.mxu0 0
    %3015 = vmatmul.mubr.bf16.gmra.mrb[0].mxu0 %v2980
    %v3016 = vpop.f32.mrb[0].mxu0
    %v3017 = vadd.f32 0.0, %v3016
    %v3018 = vpop.f32.mrb[0].mxu0
    %v3019 = vpop.f32.mrb[0].mxu0
    %v3020 = vadd.f32 0.0, %v3019
    %v3021 = vpop.f32.mrb[0].mxu0
    %3022 = vdwg.mxu0
    %v3023 = vpack.c.bf16 %v3017, %v3017
    %v3024 = vpack.c.bf16 %v3020, %v3020
    %3026 = vrot.lane.b32.xlu0 %v3023, 96
    %v3027 = vpop.permute.xlu0 %3026
    %v3029 = vsel %vm250, %v3023, 0
    %v3032 = vsel %vm250, %v3027, 0
    %3034 = vmatprep.subr.bf16.mxu0 0
    %3035 = vmatpush1.bf16.xpose.msra.mxu0 %v3032
    %3036 = vmatprep.subr.bf16.mxu0 0
    %3037 = vmatpush1.bf16.xpose.msra.mxu0 0
    %3038 = vmatprep.subr.bf16.mxu0 0
    %3039 = vmatpush1.bf16.xpose.msra.mxu0 0
    %3040 = vmatprep.subr.bf16.mxu0 0
    %3041 = vmatpush1.bf16.xpose.msra.mxu0 0
    %3042 = vmatprep.subr.bf16.mxu0 0
    %3043 = vmatpush1.bf16.xpose.msra.mxu0 0
    %3044 = vmatprep.subr.bf16.mxu0 0
    %3045 = vmatpush1.bf16.xpose.msra.mxu0 0
    %3046 = vmatprep.subr.bf16.mxu0 0
    %3047 = vmatpush1.bf16.xpose.msra.mxu0 0
    %3048 = vmatprep.subr.bf16.mxu0 0
    %3049 = vmatpush1.bf16.xpose.msra.mxu0 0
    %3050 = vmatprep.subr.bf16.mxu0 0
    %3051 = vmatpush1.bf16.xpose.msra.mxu0 0
    %3052 = vmatprep.subr.bf16.mxu0 0
    %3053 = vmatpush1.bf16.xpose.msra.mxu0 0
    %3054 = vmatprep.subr.bf16.mxu0 0
    %3055 = vmatpush1.bf16.xpose.msra.mxu0 0
    %3056 = vmatprep.subr.bf16.mxu0 0
    %3057 = vmatpush1.bf16.xpose.msra.mxu0 0
    %3058 = vmatprep.subr.bf16.mxu0 0
    %3059 = vmatpush1.bf16.xpose.msra.mxu0 0
    %3060 = vmatprep.subr.bf16.mxu0 0
    %3061 = vmatpush1.bf16.xpose.msra.mxu0 0
    %3062 = vmatprep.subr.bf16.mxu0 0
    %3063 = vmatpush1.bf16.xpose.msra.mxu0 0
    %3064 = vmatprep.subr.bf16.mxu0 0
    %3065 = vmatpush1.bf16.xpose.msra.mxu0 0
    %3066 = vmatprep.mubr.bf16.mxu0 0
    %3067 = vmatmul.mubr.bf16.gmra.mrb[0].mxu0 %v3029
    %v3068 = vpop.f32.mrb[0].mxu0
    %v3069 = vadd.f32 0.0, %v3068
    %v3070 = vpop.f32.mrb[0].mxu0
    %v3071 = vpop.f32.mrb[0].mxu0
    %v3072 = vpop.f32.mrb[0].mxu0
    %3073 = vdwg.mxu0
    %3075 = vrot.lane.b32.xlu0 %v3024, 96
    %v3076 = vpop.permute.xlu0 %3075
    %v3078 = vsel %vm250, %v3024, 0
    %v3081 = vsel %vm250, %v3076, 0
    %3083 = vmatprep.subr.bf16.mxu0 0
    %3084 = vmatpush1.bf16.xpose.msra.mxu0 %v3081
    %3085 = vmatprep.subr.bf16.mxu0 0
    %3086 = vmatpush1.bf16.xpose.msra.mxu0 0
    %3087 = vmatprep.subr.bf16.mxu0 0
    %3088 = vmatpush1.bf16.xpose.msra.mxu0 0
    %3089 = vmatprep.subr.bf16.mxu0 0
    %3090 = vmatpush1.bf16.xpose.msra.mxu0 0
    %3091 = vmatprep.subr.bf16.mxu0 0
    %3092 = vmatpush1.bf16.xpose.msra.mxu0 0
    %3093 = vmatprep.subr.bf16.mxu0 0
    %3094 = vmatpush1.bf16.xpose.msra.mxu0 0
    %3095 = vmatprep.subr.bf16.mxu0 0
    %3096 = vmatpush1.bf16.xpose.msra.mxu0 0
    %3097 = vmatprep.subr.bf16.mxu0 0
    %3098 = vmatpush1.bf16.xpose.msra.mxu0 0
    %3099 = vmatprep.subr.bf16.mxu0 0
    %3100 = vmatpush1.bf16.xpose.msra.mxu0 0
    %3101 = vmatprep.subr.bf16.mxu0 0
    %3102 = vmatpush1.bf16.xpose.msra.mxu0 0
    %3103 = vmatprep.subr.bf16.mxu0 0
    %3104 = vmatpush1.bf16.xpose.msra.mxu0 0
    %3105 = vmatprep.subr.bf16.mxu0 0
    %3106 = vmatpush1.bf16.xpose.msra.mxu0 0
    %3107 = vmatprep.subr.bf16.mxu0 0
    %3108 = vmatpush1.bf16.xpose.msra.mxu0 0
    %3109 = vmatprep.subr.bf16.mxu0 0
    %3110 = vmatpush1.bf16.xpose.msra.mxu0 0
    %3111 = vmatprep.subr.bf16.mxu0 0
    %3112 = vmatpush1.bf16.xpose.msra.mxu0 0
    %3113 = vmatprep.subr.bf16.mxu0 0
    %3114 = vmatpush1.bf16.xpose.msra.mxu0 0
    %3115 = vmatprep.mubr.bf16.mxu0 0
    %3116 = vmatmul.mubr.bf16.gmra.mrb[0].mxu0 %v3078
    %v3117 = vpop.f32.mrb[0].mxu0
    %v3118 = vadd.f32 0.0, %v3117
    %v3119 = vpop.f32.mrb[0].mxu0
    %v3120 = vpop.f32.mrb[0].mxu0
    %v3121 = vpop.f32.mrb[0].mxu0
    %3122 = vdwg.mxu0
    %v3123 = vmul.f32 %v3069, 0.25
    %v3124 = vmul.f32 %v3118, 0.25
    %v3125 = vadd.f32 %v3123, %v2104
    %v3126 = vadd.f32 %v3124, %v2105
    %v3127 = vsel %vm350, %v3125, -inf
    %3128 = vmax.xlane.f32.xlu0 %v3127
    %v3129 = vpop.xlane.xlu0 %3128
    %v3130 = vsel %vm350, %v3126, -inf
    %3131 = vmax.xlane.f32.xlu0 %v3130
    %v3132 = vpop.xlane.xlu0 %3131
    %v3133 = vsub.f32 %v3125, %v3129
    %v3134 = vsub.f32 %v3126, %v3132
    %v3135 = vmul.f32 %v3133, 1.442695
    %v3136 = vpow.pop %v3135
    %v3137 = vmul.f32 %v3134, 1.442695
    %v3138 = vpow.pop %v3137
    %v3139 = vsel %vm350, %v3136, 0.0
    %3140 = vadd.xlane.f32.xlu0 %v3139
    %v3141 = vpop.xlane.xlu0 %3140
    %v3142 = vsel %vm350, %v3138, 0.0
    %3143 = vadd.xlane.f32.xlu0 %v3142
    %v3144 = vpop.xlane.xlu0 %3143
    %v3145 = vrcp.pop %v3141
    %v3146 = vmul.f32 %v3136, %v3145
    %v3147 = vrcp.pop %v3144
    %v3148 = vmul.f32 %v3138, %v3147
    %v3149 = vpack.c.bf16 %v3146, %v3146
    %v3150 = vpack.c.bf16 %v3148, %v3148
    %3151 = vrot.lane.b32.xlu0 %v3023, 64
    %v3152 = vpop.permute.xlu0 %3151
    %v3154 = vsel %vm350, %v3149, 0
    %v3157 = vsel %vm380, %v3152, 0
    %3159 = vmatprep.subr.bf16.mxu0 0
    %3160 = vmatpush1.bf16.msra.mxu0 %v3157
    %3161 = vmatprep.subr.bf16.mxu0 0
    %3162 = vmatpush1.bf16.msra.mxu0 0
    %3163 = vmatprep.subr.bf16.mxu0 0
    %3164 = vmatpush1.bf16.msra.mxu0 0
    %3165 = vmatprep.subr.bf16.mxu0 0
    %3166 = vmatpush1.bf16.msra.mxu0 0
    %3167 = vmatprep.subr.bf16.mxu0 0
    %3168 = vmatpush1.bf16.msra.mxu0 0
    %3169 = vmatprep.subr.bf16.mxu0 0
    %3170 = vmatpush1.bf16.msra.mxu0 0
    %3171 = vmatprep.subr.bf16.mxu0 0
    %3172 = vmatpush1.bf16.msra.mxu0 0
    %3173 = vmatprep.subr.bf16.mxu0 0
    %3174 = vmatpush1.bf16.msra.mxu0 0
    %3175 = vmatprep.subr.bf16.mxu0 0
    %3176 = vmatpush1.bf16.msra.mxu0 0
    %3177 = vmatprep.subr.bf16.mxu0 0
    %3178 = vmatpush1.bf16.msra.mxu0 0
    %3179 = vmatprep.subr.bf16.mxu0 0
    %3180 = vmatpush1.bf16.msra.mxu0 0
    %3181 = vmatprep.subr.bf16.mxu0 0
    %3182 = vmatpush1.bf16.msra.mxu0 0
    %3183 = vmatprep.subr.bf16.mxu0 0
    %3184 = vmatpush1.bf16.msra.mxu0 0
    %3185 = vmatprep.subr.bf16.mxu0 0
    %3186 = vmatpush1.bf16.msra.mxu0 0
    %3187 = vmatprep.subr.bf16.mxu0 0
    %3188 = vmatpush1.bf16.msra.mxu0 0
    %3189 = vmatprep.subr.bf16.mxu0 0
    %3190 = vmatpush1.bf16.msra.mxu0 0
    %3191 = vmatprep.mubr.bf16.mxu0 0
    %3192 = vmatmul.mubr.bf16.gmra.mrb[0].mxu0 %v3154
    %v3193 = vpop.f32.mrb[0].mxu0
    %v3194 = vadd.f32 0.0, %v3193
    %v3195 = vpop.f32.mrb[0].mxu0
    %v3196 = vpop.f32.mrb[0].mxu0
    %v3197 = vpop.f32.mrb[0].mxu0
    %3198 = vdwg.mxu0
    %3199 = vrot.lane.b32.xlu0 %v3024, 64
    %v3200 = vpop.permute.xlu0 %3199
    %v3202 = vsel %vm350, %v3150, 0
    %v3205 = vsel %vm380, %v3200, 0
    %3207 = vmatprep.subr.bf16.mxu0 0
    %3208 = vmatpush1.bf16.msra.mxu0 %v3205
    %3209 = vmatprep.subr.bf16.mxu0 0
    %3210 = vmatpush1.bf16.msra.mxu0 0
    %3211 = vmatprep.subr.bf16.mxu0 0
    %3212 = vmatpush1.bf16.msra.mxu0 0
    %3213 = vmatprep.subr.bf16.mxu0 0
    %3214 = vmatpush1.bf16.msra.mxu0 0
    %3215 = vmatprep.subr.bf16.mxu0 0
    %3216 = vmatpush1.bf16.msra.mxu0 0
    %3217 = vmatprep.subr.bf16.mxu0 0
    %3218 = vmatpush1.bf16.msra.mxu0 0
    %3219 = vmatprep.subr.bf16.mxu0 0
    %3220 = vmatpush1.bf16.msra.mxu0 0
    %3221 = vmatprep.subr.bf16.mxu0 0
    %3222 = vmatpush1.bf16.msra.mxu0 0
    %3223 = vmatprep.subr.bf16.mxu0 0
    %3224 = vmatpush1.bf16.msra.mxu0 0
    %3225 = vmatprep.subr.bf16.mxu0 0
    %3226 = vmatpush1.bf16.msra.mxu0 0
    %3227 = vmatprep.subr.bf16.mxu0 0
    %3228 = vmatpush1.bf16.msra.mxu0 0
    %3229 = vmatprep.subr.bf16.mxu0 0
    %3230 = vmatpush1.bf16.msra.mxu0 0
    %3231 = vmatprep.subr.bf16.mxu0 0
    %3232 = vmatpush1.bf16.msra.mxu0 0
    %3233 = vmatprep.subr.bf16.mxu0 0
    %3234 = vmatpush1.bf16.msra.mxu0 0
    %3235 = vmatprep.subr.bf16.mxu0 0
    %3236 = vmatpush1.bf16.msra.mxu0 0
    %3237 = vmatprep.subr.bf16.mxu0 0
    %3238 = vmatpush1.bf16.msra.mxu0 0
    %3239 = vmatprep.mubr.bf16.mxu0 0
    %3240 = vmatmul.mubr.bf16.gmra.mrb[0].mxu0 %v3202
    %v3241 = vpop.f32.mrb[0].mxu0
    %v3242 = vadd.f32 0.0, %v3241
    %v3243 = vpop.f32.mrb[0].mxu0
    %v3244 = vpop.f32.mrb[0].mxu0
    %v3245 = vpop.f32.mrb[0].mxu0
    %3246 = vdwg.mxu0
    %3247 = vrot.lane.b32.xlu0 %v3023, 112
    %v3248 = vpop.permute.xlu0 %3247
    %3249 = vrot.lane.b32.xlu0 %v3023, 80
    %v3250 = vpop.permute.xlu0 %3249
    %v3252 = vsel %vm250, %v3248, 0
    %v3255 = vsel %vm250, %v3250, 0
    %3257 = vmatprep.subr.bf16.mxu0 0
    %3258 = vmatpush1.bf16.xpose.msra.mxu0 %v3255
    %3259 = vmatprep.subr.bf16.mxu0 0
    %3260 = vmatpush1.bf16.xpose.msra.mxu0 0
    %3261 = vmatprep.subr.bf16.mxu0 0
    %3262 = vmatpush1.bf16.xpose.msra.mxu0 0
    %3263 = vmatprep.subr.bf16.mxu0 0
    %3264 = vmatpush1.bf16.xpose.msra.mxu0 0
    %3265 = vmatprep.subr.bf16.mxu0 0
    %3266 = vmatpush1.bf16.xpose.msra.mxu0 0
    %3267 = vmatprep.subr.bf16.mxu0 0
    %3268 = vmatpush1.bf16.xpose.msra.mxu0 0
    %3269 = vmatprep.subr.bf16.mxu0 0
    %3270 = vmatpush1.bf16.xpose.msra.mxu0 0
    %3271 = vmatprep.subr.bf16.mxu0 0
    %3272 = vmatpush1.bf16.xpose.msra.mxu0 0
    %3273 = vmatprep.subr.bf16.mxu0 0
    %3274 = vmatpush1.bf16.xpose.msra.mxu0 0
    %3275 = vmatprep.subr.bf16.mxu0 0
    %3276 = vmatpush1.bf16.xpose.msra.mxu0 0
    %3277 = vmatprep.subr.bf16.mxu0 0
    %3278 = vmatpush1.bf16.xpose.msra.mxu0 0
    %3279 = vmatprep.subr.bf16.mxu0 0
    %3280 = vmatpush1.bf16.xpose.msra.mxu0 0
    %3281 = vmatprep.subr.bf16.mxu0 0
    %3282 = vmatpush1.bf16.xpose.msra.mxu0 0
    %3283 = vmatprep.subr.bf16.mxu0 0
    %3284 = vmatpush1.bf16.xpose.msra.mxu0 0
    %3285 = vmatprep.subr.bf16.mxu0 0
    %3286 = vmatpush1.bf16.xpose.msra.mxu0 0
    %3287 = vmatprep.subr.bf16.mxu0 0
    %3288 = vmatpush1.bf16.xpose.msra.mxu0 0
    %3289 = vmatprep.mubr.bf16.mxu0 0
    %3290 = vmatmul.mubr.bf16.gmra.mrb[0].mxu0 %v3252
    %v3291 = vpop.f32.mrb[0].mxu0
    %v3292 = vadd.f32 0.0, %v3291
    %v3293 = vpop.f32.mrb[0].mxu0
    %v3294 = vpop.f32.mrb[0].mxu0
    %v3295 = vpop.f32.mrb[0].mxu0
    %3296 = vdwg.mxu0
    %3297 = vrot.lane.b32.xlu0 %v3024, 112
    %v3298 = vpop.permute.xlu0 %3297
    %3299 = vrot.lane.b32.xlu0 %v3024, 80
    %v3300 = vpop.permute.xlu0 %3299
    %v3302 = vsel %vm250, %v3298, 0
    %v3305 = vsel %vm250, %v3300, 0
    %3307 = vmatprep.subr.bf16.mxu0 0
    %3308 = vmatpush1.bf16.xpose.msra.mxu0 %v3305
    %3309 = vmatprep.subr.bf16.mxu0 0
    %3310 = vmatpush1.bf16.xpose.msra.mxu0 0
    %3311 = vmatprep.subr.bf16.mxu0 0
    %3312 = vmatpush1.bf16.xpose.msra.mxu0 0
    %3313 = vmatprep.subr.bf16.mxu0 0
    %3314 = vmatpush1.bf16.xpose.msra.mxu0 0
    %3315 = vmatprep.subr.bf16.mxu0 0
    %3316 = vmatpush1.bf16.xpose.msra.mxu0 0
    %3317 = vmatprep.subr.bf16.mxu0 0
    %3318 = vmatpush1.bf16.xpose.msra.mxu0 0
    %3319 = vmatprep.subr.bf16.mxu0 0
    %3320 = vmatpush1.bf16.xpose.msra.mxu0 0
    %3321 = vmatprep.subr.bf16.mxu0 0
    %3322 = vmatpush1.bf16.xpose.msra.mxu0 0
    %3323 = vmatprep.subr.bf16.mxu0 0
    %3324 = vmatpush1.bf16.xpose.msra.mxu0 0
    %3325 = vmatprep.subr.bf16.mxu0 0
    %3326 = vmatpush1.bf16.xpose.msra.mxu0 0
    %3327 = vmatprep.subr.bf16.mxu0 0
    %3328 = vmatpush1.bf16.xpose.msra.mxu0 0
    %3329 = vmatprep.subr.bf16.mxu0 0
    %3330 = vmatpush1.bf16.xpose.msra.mxu0 0
    %3331 = vmatprep.subr.bf16.mxu0 0
    %3332 = vmatpush1.bf16.xpose.msra.mxu0 0
    %3333 = vmatprep.subr.bf16.mxu0 0
    %3334 = vmatpush1.bf16.xpose.msra.mxu0 0
    %3335 = vmatprep.subr.bf16.mxu0 0
    %3336 = vmatpush1.bf16.xpose.msra.mxu0 0
    %3337 = vmatprep.subr.bf16.mxu0 0
    %3338 = vmatpush1.bf16.xpose.msra.mxu0 0
    %3339 = vmatprep.mubr.bf16.mxu0 0
    %3340 = vmatmul.mubr.bf16.gmra.mrb[0].mxu0 %v3302
    %v3341 = vpop.f32.mrb[0].mxu0
    %v3342 = vadd.f32 0.0, %v3341
    %v3343 = vpop.f32.mrb[0].mxu0
    %v3344 = vpop.f32.mrb[0].mxu0
    %v3345 = vpop.f32.mrb[0].mxu0
    %3346 = vdwg.mxu0
    %v3347 = vmul.f32 %v3292, 0.25
    %v3348 = vmul.f32 %v3342, 0.25
    %v3349 = vadd.f32 %v3347, %v2104
    %v3350 = vadd.f32 %v3348, %v2105
    %v3351 = vsel %vm350, %v3349, -inf
    %3352 = vmax.xlane.f32.xlu0 %v3351
    %v3353 = vpop.xlane.xlu0 %3352
    %v3354 = vsel %vm350, %v3350, -inf
    %3355 = vmax.xlane.f32.xlu0 %v3354
    %v3356 = vpop.xlane.xlu0 %3355
    %v3357 = vsub.f32 %v3349, %v3353
    %v3358 = vsub.f32 %v3350, %v3356
    %v3359 = vmul.f32 %v3357, 1.442695
    %v3360 = vpow.pop %v3359
    %v3361 = vmul.f32 %v3358, 1.442695
    %v3362 = vpow.pop %v3361
    %v3363 = vsel %vm350, %v3360, 0.0
    %3364 = vadd.xlane.f32.xlu0 %v3363
    %v3365 = vpop.xlane.xlu0 %3364
    %v3366 = vsel %vm350, %v3362, 0.0
    %3367 = vadd.xlane.f32.xlu0 %v3366
    %v3368 = vpop.xlane.xlu0 %3367
    %v3369 = vrcp.pop %v3365
    %v3370 = vmul.f32 %v3360, %v3369
    %v3371 = vrcp.pop %v3368
    %v3372 = vmul.f32 %v3362, %v3371
    %v3373 = vpack.c.bf16 %v3370, %v3370
    %v3374 = vpack.c.bf16 %v3372, %v3372
    %3375 = vrot.lane.b32.xlu0 %v3023, 48
    %v3376 = vpop.permute.xlu0 %3375
    %v3378 = vsel %vm350, %v3373, 0
    %v3381 = vsel %vm380, %v3376, 0
    %3383 = vmatprep.subr.bf16.mxu0 0
    %3384 = vmatpush1.bf16.msra.mxu0 %v3381
    %3385 = vmatprep.subr.bf16.mxu0 0
    %3386 = vmatpush1.bf16.msra.mxu0 0
    %3387 = vmatprep.subr.bf16.mxu0 0
    %3388 = vmatpush1.bf16.msra.mxu0 0
    %3389 = vmatprep.subr.bf16.mxu0 0
    %3390 = vmatpush1.bf16.msra.mxu0 0
    %3391 = vmatprep.subr.bf16.mxu0 0
    %3392 = vmatpush1.bf16.msra.mxu0 0
    %3393 = vmatprep.subr.bf16.mxu0 0
    %3394 = vmatpush1.bf16.msra.mxu0 0
    %3395 = vmatprep.subr.bf16.mxu0 0
    %3396 = vmatpush1.bf16.msra.mxu0 0
    %3397 = vmatprep.subr.bf16.mxu0 0
    %3398 = vmatpush1.bf16.msra.mxu0 0
    %3399 = vmatprep.subr.bf16.mxu0 0
    %3400 = vmatpush1.bf16.msra.mxu0 0
    %3401 = vmatprep.subr.bf16.mxu0 0
    %3402 = vmatpush1.bf16.msra.mxu0 0
    %3403 = vmatprep.subr.bf16.mxu0 0
    %3404 = vmatpush1.bf16.msra.mxu0 0
    %3405 = vmatprep.subr.bf16.mxu0 0
    %3406 = vmatpush1.bf16.msra.mxu0 0
    %3407 = vmatprep.subr.bf16.mxu0 0
    %3408 = vmatpush1.bf16.msra.mxu0 0
    %3409 = vmatprep.subr.bf16.mxu0 0
    %3410 = vmatpush1.bf16.msra.mxu0 0
    %3411 = vmatprep.subr.bf16.mxu0 0
    %3412 = vmatpush1.bf16.msra.mxu0 0
    %3413 = vmatprep.subr.bf16.mxu0 0
    %3414 = vmatpush1.bf16.msra.mxu0 0
    %3415 = vmatprep.mubr.bf16.mxu0 0
    %3416 = vmatmul.mubr.bf16.gmra.mrb[0].mxu0 %v3378
    %v3417 = vpop.f32.mrb[0].mxu0
    %v3418 = vadd.f32 0.0, %v3417
    %v3419 = vpop.f32.mrb[0].mxu0
    %v3420 = vpop.f32.mrb[0].mxu0
    %v3421 = vpop.f32.mrb[0].mxu0
    %3422 = vdwg.mxu0
    %3423 = vrot.lane.b32.xlu0 %v3024, 48
    %v3424 = vpop.permute.xlu0 %3423
    %v3426 = vsel %vm350, %v3374, 0
    %v3429 = vsel %vm380, %v3424, 0
    %3431 = vmatprep.subr.bf16.mxu0 0
    %3432 = vmatpush1.bf16.msra.mxu0 %v3429
    %3433 = vmatprep.subr.bf16.mxu0 0
    %3434 = vmatpush1.bf16.msra.mxu0 0
    %3435 = vmatprep.subr.bf16.mxu0 0
    %3436 = vmatpush1.bf16.msra.mxu0 0
    %3437 = vmatprep.subr.bf16.mxu0 0
    %3438 = vmatpush1.bf16.msra.mxu0 0
    %3439 = vmatprep.subr.bf16.mxu0 0
    %3440 = vmatpush1.bf16.msra.mxu0 0
    %3441 = vmatprep.subr.bf16.mxu0 0
    %3442 = vmatpush1.bf16.msra.mxu0 0
    %3443 = vmatprep.subr.bf16.mxu0 0
    %3444 = vmatpush1.bf16.msra.mxu0 0
    %3445 = vmatprep.subr.bf16.mxu0 0
    %3446 = vmatpush1.bf16.msra.mxu0 0
    %3447 = vmatprep.subr.bf16.mxu0 0
    %3448 = vmatpush1.bf16.msra.mxu0 0
    %3449 = vmatprep.subr.bf16.mxu0 0
    %3450 = vmatpush1.bf16.msra.mxu0 0
    %3451 = vmatprep.subr.bf16.mxu0 0
    %3452 = vmatpush1.bf16.msra.mxu0 0
    %3453 = vmatprep.subr.bf16.mxu0 0
    %3454 = vmatpush1.bf16.msra.mxu0 0
    %3455 = vmatprep.subr.bf16.mxu0 0
    %3456 = vmatpush1.bf16.msra.mxu0 0
    %3457 = vmatprep.subr.bf16.mxu0 0
    %3458 = vmatpush1.bf16.msra.mxu0 0
    %3459 = vmatprep.subr.bf16.mxu0 0
    %3460 = vmatpush1.bf16.msra.mxu0 0
    %3461 = vmatprep.subr.bf16.mxu0 0
    %3462 = vmatpush1.bf16.msra.mxu0 0
    %3463 = vmatprep.mubr.bf16.mxu0 0
    %3464 = vmatmul.mubr.bf16.gmra.mrb[0].mxu0 %v3426
    %v3465 = vpop.f32.mrb[0].mxu0
    %v3466 = vadd.f32 0.0, %v3465
    %v3467 = vpop.f32.mrb[0].mxu0
    %v3468 = vpop.f32.mrb[0].mxu0
    %v3469 = vpop.f32.mrb[0].mxu0
    %3470 = vdwg.mxu0
    %3473 = vrot.lane.b32.xlu0 %v3418, 16
    %v3474 = vpop.permute.xlu0 %3473
    %3475 = vrot.lane.b32.xlu0 %v3466, 16
    %v3476 = vpop.permute.xlu0 %3475
    %v3479 = vsel %vm250, %v3194, %v3474
    %v3480 = vsel %vm250, %v3242, %v3476
    %v3481 = vld [vmem:[%s1532] sm:$0xf]
    %v3482 = vld [vmem:[%s1532 + $0x4] sm:$0xf]
    %v3483 = vld [vmem:[%s1532 + $0x8] sm:$0xf]
    %v3484 = vld [vmem:[%s1532 + $0xc] sm:$0xf]
    %v3485 = vpack.c.bf16 %v3480, %v3479
    %v3490 = vunpack.c.l.b16 %v3481
    %v3491 = vunpack.c.l.b16 %v3482
    %v3492 = vunpack.c.l.b16 %v3483
    %v3493 = vunpack.c.l.b16 %v3484
    %v3494 = vpack.c.b16 %v3491, %v3490
    %v3495 = vpack.c.b16 %v3493, %v3492
    %v3499 = vsel %vm140, %v3485, 0
    %3501 = vmatprep.subr.bf16.mxu0 0
    %3502 = vmatpush1.bf16.msra.mxu0 %v3494
    %3503 = vmatprep.subr.bf16.mxu0 0
    %3504 = vmatpush1.bf16.msra.mxu0 %v3495
    %3505 = vmatprep.subr.bf16.mxu0 0
    %3506 = vmatpush1.bf16.msra.mxu0 0
    %3507 = vmatprep.subr.bf16.mxu0 0
    %3508 = vmatpush1.bf16.msra.mxu0 0
    %3509 = vmatprep.subr.bf16.mxu0 0
    %3510 = vmatpush1.bf16.msra.mxu0 0
    %3511 = vmatprep.subr.bf16.mxu0 0
    %3512 = vmatpush1.bf16.msra.mxu0 0
    %3513 = vmatprep.subr.bf16.mxu0 0
    %3514 = vmatpush1.bf16.msra.mxu0 0
    %3515 = vmatprep.subr.bf16.mxu0 0
    %3516 = vmatpush1.bf16.msra.mxu0 0
    %3517 = vmatprep.subr.bf16.mxu0 0
    %3518 = vmatpush1.bf16.msra.mxu0 0
    %3519 = vmatprep.subr.bf16.mxu0 0
    %3520 = vmatpush1.bf16.msra.mxu0 0
    %3521 = vmatprep.subr.bf16.mxu0 0
    %3522 = vmatpush1.bf16.msra.mxu0 0
    %3523 = vmatprep.subr.bf16.mxu0 0
    %3524 = vmatpush1.bf16.msra.mxu0 0
    %3525 = vmatprep.subr.bf16.mxu0 0
    %3526 = vmatpush1.bf16.msra.mxu0 0
    %3527 = vmatprep.subr.bf16.mxu0 0
    %3528 = vmatpush1.bf16.msra.mxu0 0
    %3529 = vmatprep.subr.bf16.mxu0 0
    %3530 = vmatpush1.bf16.msra.mxu0 0
    %3531 = vmatprep.subr.bf16.mxu0 0
    %3532 = vmatpush1.bf16.msra.mxu0 0
    %3533 = vmatprep.mubr.bf16.mxu0 0
    %3534 = vmatmul.mubr.bf16.gmra.mrb[0].mxu0 %v3499
    %v3535 = vpop.f32.mrb[0].mxu0
    %v3536 = vadd.f32 %v2960, %v3535
    %v3537 = vpop.f32.mrb[0].mxu0
    %v3538 = vpop.f32.mrb[0].mxu0
    %v3539 = vadd.f32 %v2961, %v3538
    %v3540 = vpop.f32.mrb[0].mxu0
    %3541 = vdwg.mxu0
    %v3542 = vld [vmem:[%s1594] sm:$0x1]
    %v3543 = vld [vmem:[%s1596] sm:$0x1]
    %v3544 = vsel %vm140, %v3536, 0.0
    %3545 = vadd.xlane.f32.xlu0 %v3544
    %v3546 = vpop.xlane.xlu0 %3545
    %v3547 = vsel %vm140, %v3539, 0.0
    %3548 = vadd.xlane.f32.xlu0 %v3547
    %v3549 = vpop.xlane.xlu0 %3548
    %v3550 = vmul.f32 %v3546, %v147
    %v3551 = vmul.f32 %v3549, %v147
    %v3552 = vsub.f32 %v3536, %v3550
    %v3553 = vsub.f32 %v3539, %v3551
    %v3554 = vmul.f32 %v3552, %v3552
    %v3555 = vmul.f32 %v3553, %v3553
    %v3556 = vsel %vm140, %v3554, 0.0
    %3557 = vadd.xlane.f32.xlu0 %v3556
    %v3558 = vpop.xlane.xlu0 %3557
    %v3559 = vsel %vm140, %v3555, 0.0
    %3560 = vadd.xlane.f32.xlu0 %v3559
    %v3561 = vpop.xlane.xlu0 %3560
    %v3562 = vmul.f32 %v3558, %v147
    %v3563 = vmul.f32 %v3561, %v147
    %v3564 = vadd.f32 %v3562, 1e-06
    %v3565 = vadd.f32 %v3563, 1e-06
    %v3566 = vrsqrt.pop %v3564
    %v3567 = vrsqrt.pop %v3565
    %v3568 = vmul.f32 %v3552, %v3566
    %v3569 = vmul.f32 %v3553, %v3567
    %v3571 = vlaneseq
    %v3572 = vshrl.u32 %v3571, 7
    %v3573 = vsub.s32 0, %v3572
    %v3574 = vrot.slane %v3542, %v3573
    %v3576 = vmul.f32 %v3568, %v3574
    %v3577 = vmul.f32 %v3569, %v3574
    %v3579 = vlaneseq
    %v3580 = vshrl.u32 %v3579, 7
    %v3581 = vsub.s32 0, %v3580
    %v3582 = vrot.slane %v3543, %v3581
    %v3584 = vadd.f32 %v3576, %v3582
    %v3585 = vadd.f32 %v3577, %v3582
    %v3586 = vld [vmem:[%s1640] sm:$0xf]
    %v3587 = vld [vmem:[%s1640 + $0x4] sm:$0xf]
    %v3588 = vld [vmem:[%s1640 + $0x8] sm:$0xf]
    %v3589 = vld [vmem:[%s1640 + $0xc] sm:$0xf]
    %v3590 = vpack.c.bf16 %v3585, %v3584
    %v3591 = vld [vmem:[%s1646] sm:$0x1]
    %v3593 = vlaneseq
    %v3594 = vshrl.u32 %v3593, 7
    %v3595 = vsub.s32 0, %v3594
    %v3596 = vrot.slane %v3591, %v3595
    %v3602 = vunpack.c.l.b16 %v3586
    %v3603 = vunpack.c.l.b16 %v3587
    %v3604 = vunpack.c.l.b16 %v3588
    %v3605 = vunpack.c.l.b16 %v3589
    %v3606 = vpack.c.b16 %v3603, %v3602
    %v3607 = vpack.c.b16 %v3605, %v3604
    %v3611 = vsel %vm140, %v3590, 0
    %3613 = vmatprep.subr.bf16.mxu0 0
    %3614 = vmatpush1.bf16.msra.mxu0 %v3606
    %3615 = vmatprep.subr.bf16.mxu0 0
    %3616 = vmatpush1.bf16.msra.mxu0 %v3607
    %3617 = vmatprep.subr.bf16.mxu0 0
    %3618 = vmatpush1.bf16.msra.mxu0 0
    %3619 = vmatprep.subr.bf16.mxu0 0
    %3620 = vmatpush1.bf16.msra.mxu0 0
    %3621 = vmatprep.subr.bf16.mxu0 0
    %3622 = vmatpush1.bf16.msra.mxu0 0
    %3623 = vmatprep.subr.bf16.mxu0 0
    %3624 = vmatpush1.bf16.msra.mxu0 0
    %3625 = vmatprep.subr.bf16.mxu0 0
    %3626 = vmatpush1.bf16.msra.mxu0 0
    %3627 = vmatprep.subr.bf16.mxu0 0
    %3628 = vmatpush1.bf16.msra.mxu0 0
    %3629 = vmatprep.subr.bf16.mxu0 0
    %3630 = vmatpush1.bf16.msra.mxu0 0
    %3631 = vmatprep.subr.bf16.mxu0 0
    %3632 = vmatpush1.bf16.msra.mxu0 0
    %3633 = vmatprep.subr.bf16.mxu0 0
    %3634 = vmatpush1.bf16.msra.mxu0 0
    %3635 = vmatprep.subr.bf16.mxu0 0
    %3636 = vmatpush1.bf16.msra.mxu0 0
    %3637 = vmatprep.subr.bf16.mxu0 0
    %3638 = vmatpush1.bf16.msra.mxu0 0
    %3639 = vmatprep.subr.bf16.mxu0 0
    %3640 = vmatpush1.bf16.msra.mxu0 0
    %3641 = vmatprep.subr.bf16.mxu0 0
    %3642 = vmatpush1.bf16.msra.mxu0 0
    %3643 = vmatprep.subr.bf16.mxu0 0
    %3644 = vmatpush1.bf16.msra.mxu0 0
    %3645 = vmatprep.mubr.bf16.mxu0 0
    %3646 = vmatmul.mubr.bf16.gmra.mrb[0].mxu0 %v3611
    %v3647 = vpop.f32.mrb[0].mxu0
    %v3648 = vadd.f32 %v3596, %v3647
    %v3649 = vpop.f32.mrb[0].mxu0
    %v3650 = vpop.f32.mrb[0].mxu0
    %v3651 = vadd.f32 %v3596, %v3650
    %v3652 = vpop.f32.mrb[0].mxu0
    %3653 = vdwg.mxu0
    %v3654 = vmax.f32 %v3648, 0.0
    %v3655 = vmax.f32 %v3651, 0.0
    %v3656 = vld [vmem:[%s1712] sm:$0xf]
    %v3657 = vld [vmem:[%s1712 + $0x4] sm:$0xf]
    %v3658 = vld [vmem:[%s1712 + $0x8] sm:$0xf]
    %v3659 = vld [vmem:[%s1712 + $0xc] sm:$0xf]
    %v3660 = vld [vmem:[%s1712 + $0x10] sm:$0xf]
    %v3661 = vld [vmem:[%s1712 + $0x14] sm:$0xf]
    %v3662 = vld [vmem:[%s1712 + $0x18] sm:$0xf]
    %v3663 = vld [vmem:[%s1712 + $0x1c] sm:$0xf]
    %v3664 = vpack.c.bf16 %v3655, %v3654
    %v3665 = vld [vmem:[%s1722] sm:$0x1]
    %v3667 = vlaneseq
    %v3668 = vshrl.u32 %v3667, 7
    %v3669 = vsub.s32 0, %v3668
    %v3670 = vrot.slane %v3665, %v3669
    %v3680 = vunpack.c.l.b16 %v3656
    %v3681 = vunpack.c.l.b16 %v3657
    %v3682 = vunpack.c.l.b16 %v3658
    %v3683 = vunpack.c.l.b16 %v3659
    %v3684 = vunpack.c.l.b16 %v3660
    %v3685 = vunpack.c.l.b16 %v3661
    %v3686 = vunpack.c.l.b16 %v3662
    %v3687 = vunpack.c.l.b16 %v3663
    %v3688 = vpack.c.b16 %v3681, %v3680
    %v3689 = vpack.c.b16 %v3683, %v3682
    %v3690 = vpack.c.b16 %v3685, %v3684
    %v3691 = vpack.c.b16 %v3687, %v3686
    %v3697 = vsel %vm921, %v3664, 0
    %3699 = vmatprep.subr.bf16.mxu0 0
    %3700 = vmatpush1.bf16.msra.mxu0 %v3688
    %3701 = vmatprep.subr.bf16.mxu0 0
    %3702 = vmatpush1.bf16.msra.mxu0 %v3689
    %3703 = vmatprep.subr.bf16.mxu0 0
    %3704 = vmatpush1.bf16.msra.mxu0 %v3690
    %3705 = vmatprep.subr.bf16.mxu0 0
    %3706 = vmatpush1.bf16.msra.mxu0 %v3691
    %3707 = vmatprep.subr.bf16.mxu0 0
    %3708 = vmatpush1.bf16.msra.mxu0 0
    %3709 = vmatprep.subr.bf16.mxu0 0
    %3710 = vmatpush1.bf16.msra.mxu0 0
    %3711 = vmatprep.subr.bf16.mxu0 0
    %3712 = vmatpush1.bf16.msra.mxu0 0
    %3713 = vmatprep.subr.bf16.mxu0 0
    %3714 = vmatpush1.bf16.msra.mxu0 0
    %3715 = vmatprep.subr.bf16.mxu0 0
    %3716 = vmatpush1.bf16.msra.mxu0 0
    %3717 = vmatprep.subr.bf16.mxu0 0
    %3718 = vmatpush1.bf16.msra.mxu0 0
    %3719 = vmatprep.subr.bf16.mxu0 0
    %3720 = vmatpush1.bf16.msra.mxu0 0
    %3721 = vmatprep.subr.bf16.mxu0 0
    %3722 = vmatpush1.bf16.msra.mxu0 0
    %3723 = vmatprep.subr.bf16.mxu0 0
    %3724 = vmatpush1.bf16.msra.mxu0 0
    %3725 = vmatprep.subr.bf16.mxu0 0
    %3726 = vmatpush1.bf16.msra.mxu0 0
    %3727 = vmatprep.subr.bf16.mxu0 0
    %3728 = vmatpush1.bf16.msra.mxu0 0
    %3729 = vmatprep.subr.bf16.mxu0 0
    %3730 = vmatpush1.bf16.msra.mxu0 0
    %3731 = vmatprep.mubr.bf16.mxu0 0
    %3732 = vmatmul.mubr.bf16.gmra.mrb[0].mxu0 %v3697
    %v3733 = vpop.f32.mrb[0].mxu0
    %v3734 = vadd.f32 %v3670, %v3733
    %v3735 = vpop.f32.mrb[0].mxu0
    %v3736 = vpop.f32.mrb[0].mxu0
    %v3737 = vadd.f32 %v3670, %v3736
    %v3738 = vpop.f32.mrb[0].mxu0
    %3739 = vdwg.mxu0
    %v3740 = vadd.f32 %v3734, %v3584
    %v3741 = vadd.f32 %v3737, %v3585
    %v3742 = vld [vmem:[%s1800] sm:$0x1]
    %v3743 = vld [vmem:[%s1802] sm:$0x1]
    %v3744 = vsel %vm140, %v3740, 0.0
    %3745 = vadd.xlane.f32.xlu0 %v3744
    %v3746 = vpop.xlane.xlu0 %3745
    %v3747 = vsel %vm140, %v3741, 0.0
    %3748 = vadd.xlane.f32.xlu0 %v3747
    %v3749 = vpop.xlane.xlu0 %3748
    %v3750 = vmul.f32 %v3746, %v147
    %v3751 = vmul.f32 %v3749, %v147
    %v3752 = vsub.f32 %v3740, %v3750
    %v3753 = vsub.f32 %v3741, %v3751
    %v3754 = vmul.f32 %v3752, %v3752
    %v3755 = vmul.f32 %v3753, %v3753
    %v3756 = vsel %vm140, %v3754, 0.0
    %3757 = vadd.xlane.f32.xlu0 %v3756
    %v3758 = vpop.xlane.xlu0 %3757
    %v3759 = vsel %vm140, %v3755, 0.0
    %3760 = vadd.xlane.f32.xlu0 %v3759
    %v3761 = vpop.xlane.xlu0 %3760
    %v3762 = vmul.f32 %v3758, %v147
    %v3763 = vmul.f32 %v3761, %v147
    %v3764 = vadd.f32 %v3762, 1e-06
    %v3765 = vadd.f32 %v3763, 1e-06
    %v3766 = vrsqrt.pop %v3764
    %v3767 = vrsqrt.pop %v3765
    %v3768 = vmul.f32 %v3752, %v3766
    %v3769 = vmul.f32 %v3753, %v3767
    %v3771 = vlaneseq
    %v3772 = vshrl.u32 %v3771, 7
    %v3773 = vsub.s32 0, %v3772
    %v3774 = vrot.slane %v3742, %v3773
    %v3776 = vmul.f32 %v3768, %v3774
    %v3777 = vmul.f32 %v3769, %v3774
    %v3779 = vlaneseq
    %v3780 = vshrl.u32 %v3779, 7
    %v3781 = vsub.s32 0, %v3780
    %v3782 = vrot.slane %v3743, %v3781
    %v3784 = vadd.f32 %v3776, %v3782
    %v3785 = vadd.f32 %v3777, %v3782
    %v3786 = vld [vmem:[%s13] sm:$0xf]
    %v3787 = vld [vmem:[%s13 + $0x4] sm:$0xf]
    %v3788 = vld [vmem:[%s13 + $0x8] sm:$0xf]
    %v3789 = vld [vmem:[%s13 + $0xc] sm:$0xf]
    %v3790 = vpack.c.bf16 %v3785, %v3784
    %v3795 = vunpack.c.l.b16 %v3786
    %v3796 = vunpack.c.l.b16 %v3787
    %v3797 = vunpack.c.l.b16 %v3788
    %v3798 = vunpack.c.l.b16 %v3789
    %v3799 = vpack.c.b16 %v3796, %v3795
    %v3800 = vpack.c.b16 %v3798, %v3797
    %v3804 = vsel %vm140, %v3790, 0
    %3806 = vmatprep.subr.bf16.mxu0 0
    %3807 = vmatpush1.bf16.msra.mxu0 %v3799
    %3808 = vmatprep.subr.bf16.mxu0 0
    %3809 = vmatpush1.bf16.msra.mxu0 %v3800
    %3810 = vmatprep.subr.bf16.mxu0 0
    %3811 = vmatpush1.bf16.msra.mxu0 0
    %3812 = vmatprep.subr.bf16.mxu0 0
    %3813 = vmatpush1.bf16.msra.mxu0 0
    %3814 = vmatprep.subr.bf16.mxu0 0
    %3815 = vmatpush1.bf16.msra.mxu0 0
    %3816 = vmatprep.subr.bf16.mxu0 0
    %3817 = vmatpush1.bf16.msra.mxu0 0
    %3818 = vmatprep.subr.bf16.mxu0 0
    %3819 = vmatpush1.bf16.msra.mxu0 0
    %3820 = vmatprep.subr.bf16.mxu0 0
    %3821 = vmatpush1.bf16.msra.mxu0 0
    %3822 = vmatprep.subr.bf16.mxu0 0
    %3823 = vmatpush1.bf16.msra.mxu0 0
    %3824 = vmatprep.subr.bf16.mxu0 0
    %3825 = vmatpush1.bf16.msra.mxu0 0
    %3826 = vmatprep.subr.bf16.mxu0 0
    %3827 = vmatpush1.bf16.msra.mxu0 0
    %3828 = vmatprep.subr.bf16.mxu0 0
    %3829 = vmatpush1.bf16.msra.mxu0 0
    %3830 = vmatprep.subr.bf16.mxu0 0
    %3831 = vmatpush1.bf16.msra.mxu0 0
    %3832 = vmatprep.subr.bf16.mxu0 0
    %3833 = vmatpush1.bf16.msra.mxu0 0
    %3834 = vmatprep.subr.bf16.mxu0 0
    %3835 = vmatpush1.bf16.msra.mxu0 0
    %3836 = vmatprep.subr.bf16.mxu0 0
    %3837 = vmatpush1.bf16.msra.mxu0 0
    %3838 = vmatprep.mubr.bf16.mxu0 0
    %3839 = vmatmul.mubr.bf16.gmra.mrb[0].mxu0 %v3804
    %v3840 = vpop.f32.mrb[0].mxu0
    %v3841 = vadd.f32 0.0, %v3840
    %v3842 = vpop.f32.mrb[0].mxu0
    %v3843 = vpop.f32.mrb[0].mxu0
    %v3844 = vadd.f32 0.0, %v3843
    %v3845 = vpop.f32.mrb[0].mxu0
    %3846 = vdwg.mxu0
    %vm3847 = vcmp.lt.s32.totalorder %v97, 12
    %v3848 = vsel %vm3847, %v3841, -1e+09
    %v3849 = vsel %vm3847, %v3844, -1e+09
    %v3850 = vld [vmem:[%s4] sm:$0xff]
    %v3851 = vld [vmem:[%s4 + $0x8] sm:$0xff]
    %v3852 = vld [vmem:[%s5] sm:$0xff]
    %v3853 = vld [vmem:[%s5 + $0x8] sm:$0xff]
    %3854 = vmax.xlane.f32.xlu0 %v3848
    %v3855 = vpop.xlane.xlu0 %3854
    %3856 = vmax.xlane.f32.xlu0 %v3849
    %v3857 = vpop.xlane.xlu0 %3856
    %v3858 = vsub.f32 %v3848, %v3855
    %v3859 = vsub.f32 %v3849, %v3857
    %v3860 = vmul.f32 %v3858, 1.442695
    %v3861 = vpow.pop %v3860
    %v3862 = vmul.f32 %v3859, 1.442695
    %v3863 = vpow.pop %v3862
    %3864 = vadd.xlane.f32.xlu0 %v3861
    %v3865 = vpop.xlane.xlu0 %3864
    %3866 = vadd.xlane.f32.xlu0 %v3863
    %v3867 = vpop.xlane.xlu0 %3866
    %v3868 = vlog2.pop %v3865
    %v3869 = vmul.f32 %v3868, 0.6931472
    %v3870 = vlog2.pop %v3867
    %v3871 = vmul.f32 %v3870, 0.6931472
    %v3872 = vadd.f32 %v3855, %v3869
    %v3873 = vadd.f32 %v3857, %v3871
    %3874 = vset.pattern.permute.xlu0 0
    %3875 = vperm.xlu0 %3874, %v3850
    %v3876 = vpop.permute.xlu0 %3875
    %3877 = vset.pattern.permute.xlu0 0
    %3878 = vperm.xlu0 %3877, %v3851
    %v3879 = vpop.permute.xlu0 %3878
    %vm3880 = vcmp.eq.s32.totalorder %v97, %v3876
    %vm3881 = vcmp.eq.s32.totalorder %v97, %v3879
    %v3882 = vsel %vm3880, %v3848, 0.0
    %v3883 = vsel %vm3881, %v3849, 0.0
    %3884 = vadd.xlane.f32.xlu0 %v3882
    %v3885 = vpop.xlane.xlu0 %3884
    %3886 = vadd.xlane.f32.xlu0 %v3883
    %v3887 = vpop.xlane.xlu0 %3886
    %v3888 = vsub.f32 %v3872, %v3885
    %v3889 = vsub.f32 %v3873, %v3887
    %vm3890 = vcmp.ge.f32.partialorder %v3848, %v3855
    %vm3891 = vcmp.ge.f32.partialorder %v3849, %v3857
    %v3892 = vsel %vm3890, %v97, 128
    %v3893 = vsel %vm3891, %v97, 128
    %v3894 = vand.u32 %v3892, 65535
    %v3895 = vshra.s32 %v3892, 16
    %v3896 = vcvt.s32.f32 %v3894
    %v3897 = vcvt.s32.f32 %v3895
    %3898 = vmin.xlane.f32.xlu0 %v3897
    %v3899 = vpop.xlane.xlu0 %3898
    %vm3900 = vcmp.eq.f32.partialorder %v3897, %v3899
    %v3901 = vsel %vm3900, %v3896, inf
    %3902 = vmin.xlane.f32.xlu0 %v3901
    %v3903 = vpop.xlane.xlu0 %3902
    %v3904 = vcvt.f32.s32 %v3903
    %v3905 = vcvt.f32.s32 %v3899
    %v3906 = vshll.u32 %v3905, 16
    %v3907 = vadd.s32 %v3906, %v3904
    %v3908 = vand.u32 %v3893, 65535
    %v3909 = vshra.s32 %v3893, 16
    %v3910 = vcvt.s32.f32 %v3908
    %v3911 = vcvt.s32.f32 %v3909
    %3912 = vmin.xlane.f32.xlu0 %v3911
    %v3913 = vpop.xlane.xlu0 %3912
    %vm3914 = vcmp.eq.f32.partialorder %v3911, %v3913
    %v3915 = vsel %vm3914, %v3910, inf
    %3916 = vmin.xlane.f32.xlu0 %v3915
    %v3917 = vpop.xlane.xlu0 %3916
    %v3918 = vcvt.f32.s32 %v3917
    %v3919 = vcvt.f32.s32 %v3913
    %v3920 = vshll.u32 %v3919, 16
    %v3921 = vadd.s32 %v3920, %v3918
    %vm3922 = vcmask 7168
    %v3923 = vsel %vm3922, %v3852, 0.0
    %v3924 = vsel %vm3922, %v3853, 0.0
    %v3925 = vadd.f32 %v3923, %v3924
    %v3926 = vrot.slane %v3925, 4
    %v3927 = vadd.f32 %v3925, %v3926
    %v3928 = vrot.slane %v3927, 2
    %v3929 = vadd.f32 %v3927, %v3928
    %v3930 = vrot.slane %v3929, 1
    %v3931 = vadd.f32 %v3929, %v3930
    %v3932 = vmul.f32 %v3888, %v3852
    %v3933 = vmul.f32 %v3889, %v3853
    %v3934 = vsel %vm3922, %v3932, 0.0
    %v3935 = vsel %vm3922, %v3933, 0.0
    %v3936 = vadd.f32 %v3934, %v3935
    %v3937 = vrot.slane %v3936, 4
    %v3938 = vadd.f32 %v3936, %v3937
    %v3939 = vrot.slane %v3938, 2
    %v3940 = vadd.f32 %v3938, %v3939
    %v3941 = vrot.slane %v3940, 1
    %v3942 = vadd.f32 %v3940, %v3941
    %v3943 = vrcp.pop %v3931
    %v3944 = vmul.f32 %v3942, %v3943
    %vm3945 = vcmp.eq.s32.totalorder %v3907, %v3850
    %vm3946 = vcmp.eq.s32.totalorder %v3921, %v3851
    %v3947 = vsel %vm3945, 1, 0
    %v3948 = vsel %vm3946, 1, 0
    %v3949 = vcvt.s32.f32 %v3947
    %v3950 = vcvt.s32.f32 %v3948
    %v3951 = vmul.f32 %v3949, %v3852
    %v3952 = vmul.f32 %v3950, %v3853
    %v3953 = vsel %vm3922, %v3951, 0.0
    %v3954 = vsel %vm3922, %v3952, 0.0
    %v3955 = vadd.f32 %v3953, %v3954
    %v3956 = vrot.slane %v3955, 4
    %v3957 = vadd.f32 %v3955, %v3956
    %v3958 = vrot.slane %v3957, 2
    %v3959 = vadd.f32 %v3957, %v3958
    %v3960 = vrot.slane %v3959, 1
    %v3961 = vadd.f32 %v3959, %v3960
    %v3962 = vmul.f32 %v3961, %v3943
    %v3963 = vadd.f32 %v1970, 1.0
    %v3964 = vmul.f32 %v1914, %v1914
    %v3965 = vsub.f32 %v3963, %v3964
    %v3966 = vmul.f32 %v1970, 1.442695
    %v3967 = vpow.pop %v3966
    %v3968 = vsub.f32 %v3965, %v3967
    %vm3969 = vcmask 123904
    %v3970 = vsel %vm3969, %v3968, 0.0
    %3971 = vadd.xlane.f32.xlu0 %v3970
    %v3972 = vpop.xlane.xlu0 %3971
    %v3973 = vmul.f32 %v3972, -0.5
    %vm3974 = vcmask 1041408
    %v3975 = vsel %vm3974, %v3973, 0.0
    %v3976 = vrot.slane %v3975, 4
    %v3977 = vadd.f32 %v3975, %v3976
    %v3978 = vrot.slane %v3977, 2
    %v3979 = vadd.f32 %v3977, %v3978
    %v3980 = vrot.slane %v3979, 1
    %v3981 = vadd.f32 %v3979, %v3980
    %v3982 = vrcp.pop 2.0
    %v3983 = vmul.f32 %v3981, %v3982
    %v3984 = vmul.f32 %v3983, 0.001
    %v3985 = vadd.f32 %v3944, %v3984
    %vm3986 = vcmask 0
    %3987 = vst.msk [vmem:[#allocation5] sm:$0x1] %vm3986, %v3985
    %3988 = vst.msk [vmem:[#allocation7] sm:$0x1] %vm3986, %v3944
    %3989 = vst.msk [vmem:[#allocation9] sm:$0x1] %vm3986, %v3983
    %3990 = vst.msk [vmem:[#allocation10] sm:$0x1] %vm3986, %v3962
    // Predicated region
    $region94: #{seq_share_vae_loss.1} parent=1 // pred_check
      _
    $region95: #{seq_share_vae_loss.1} parent=1 // pred_check_branch
      %3992 = sbr.rel (0) target = $region97
    $region96: #{seq_share_vae_loss.1} parent=1 // pred_region
      %s3994 = ssub.s32 16, 16
      %3995 = vsyncadd [#allocation6], %s3994
      %s3997 = sshll.u32 [#allocation5], 4
      %s3998 = int_to_ptr.vmem [resolvable:$true] %s3997
      %4000 = dma.vmem_to_hbm [thread:$0]  %s3998, 16, %s24, [#allocation6]
    $region97: #{seq_share_vae_loss.1} parent=1 // pred_fallthru
      _
    // Predicated region
    $region98: #{seq_share_vae_loss.1} parent=1 // pred_check
      _
    $region99: #{seq_share_vae_loss.1} parent=1 // pred_check_branch
      %4002 = sbr.rel (0) target = $region101
    $region100: #{seq_share_vae_loss.1} parent=1 // pred_region
      %s4004 = ssub.s32 16, 16
      %4005 = vsyncadd [#allocation8], %s4004
      %s4007 = sshll.u32 [#allocation7], 4
      %s4008 = int_to_ptr.vmem [resolvable:$true] %s4007
      %4010 = dma.vmem_to_hbm [thread:$0]  %s4008, 16, %s25, [#allocation8]
    $region101: #{seq_share_vae_loss.1} parent=1 // pred_fallthru
      _
    // Predicated region
    $region102: #{seq_share_vae_loss.1} parent=1 // pred_check
      _
    $region103: #{seq_share_vae_loss.1} parent=1 // pred_check_branch
      %4012 = sbr.rel (0) target = $region105
    $region104: #{seq_share_vae_loss.1} parent=1 // pred_region
      %s4014 = ssub.s32 16, 16
      %4015 = vsyncadd [#allocation8], %s4014
      %s4017 = sshll.u32 [#allocation9], 4
      %s4018 = int_to_ptr.vmem [resolvable:$true] %s4017
      %4020 = dma.vmem_to_hbm [thread:$0]  %s4018, 16, %s26, [#allocation8]
    $region105: #{seq_share_vae_loss.1} parent=1 // pred_fallthru
      _
    // Predicated region
    $region106: #{seq_share_vae_loss.1} parent=1 // pred_check
      _
    $region107: #{seq_share_vae_loss.1} parent=1 // pred_check_branch
      %4022 = sbr.rel (0) target = $region109
    $region108: #{seq_share_vae_loss.1} parent=1 // pred_region
      %s4024 = ssub.s32 16, 16
      %4025 = vsyncadd [#allocation11], %s4024
      %s4027 = sshll.u32 [#allocation10], 4
      %s4028 = int_to_ptr.vmem [resolvable:$true] %s4027
      %4030 = dma.vmem_to_hbm [thread:$0]  %s4028, 16, %s27, [#allocation11]
    $region109: #{seq_share_vae_loss.1} parent=1 // pred_fallthru
      _
    // Predicated region
    $region110: #{seq_share_vae_loss.1} parent=1 // pred_check
      _
    $region111: #{seq_share_vae_loss.1} parent=1 // pred_check_branch
      %4032 = sbr.rel (0) target = $region113
    $region112: #{seq_share_vae_loss.1} parent=1 // pred_region
      %4033 = dma.done [#allocation6], 16
    $region113: #{seq_share_vae_loss.1} parent=1 // pred_fallthru
      _
    // Predicated region
    $region114: #{seq_share_vae_loss.1} parent=1 // pred_check
      _
    $region115: #{seq_share_vae_loss.1} parent=1 // pred_check_branch
      %4035 = sbr.rel (0) target = $region117
    $region116: #{seq_share_vae_loss.1} parent=1 // pred_region
      %4036 = dma.done [#allocation8], 16
    $region117: #{seq_share_vae_loss.1} parent=1 // pred_fallthru
      _
    // Predicated region
    $region118: #{seq_share_vae_loss.1} parent=1 // pred_check
      _
    $region119: #{seq_share_vae_loss.1} parent=1 // pred_check_branch
      %4038 = sbr.rel (0) target = $region121
    $region120: #{seq_share_vae_loss.1} parent=1 // pred_region
      %4039 = dma.done [#allocation8], 16
    $region121: #{seq_share_vae_loss.1} parent=1 // pred_fallthru
      _
    // Predicated region
    $region122: #{seq_share_vae_loss.1} parent=1 // pred_check
      _
    $region123: #{seq_share_vae_loss.1} parent=1 // pred_check_branch
      %4041 = sbr.rel (0) target = $region125
    $region124: #{seq_share_vae_loss.1} parent=1 // pred_region
      %4042 = dma.done [#allocation11], 16
    $region125: #{seq_share_vae_loss.1} parent=1 // pred_fallthru
      _
    %4043 = vsyncpa [#allocation6], 1
    %4044 = vsyncpa [#allocation8], 1
    %4045 = vsyncpa [#allocation11], 1

</llo_original>
